<compile_context>
chip_gen: v6e
topology: v6e:2x2x1
jax: 0.10.0
libtpu: 0.0.40
codegen_flags: <defaults>
</compile_context>

<pallas_src>
import functools
import math

import jax
import jax.numpy as jnp
from jax.experimental import pallas as pl
from jax.experimental.pallas import tpu as pltpu

K = 7      # conv kernel size
PAD = 3    # conv padding


def cbam_spatial_kernel(w_ref, coords_ref, x_ref, o_ref, *, H, W, tanh_act):
    # w_ref      : SMEM (2*7*7,) f32 conv weight flattened as [in_ch, kh, kw]
    # coords_ref : VMEM (2, H*W) i32  -- row index (f // W) and col index (f % W)
    # x_ref      : VMEM (Nb, C, H*W) block of the input
    # o_ref      : VMEM (Nb, C, H*W)
    HW = H * W

    coords = coords_ref[...]
    row = coords[0:1, :]                     # (1, HW) int32: h of each flat pos
    col = coords[1:2, :]                     # (1, HW) int32: w of each flat pos

    xb = x_ref[...]                          # (Nb, C, HW)
    xf = xb.astype(jnp.float32)              # test inputs are f32; for bf16 on
                                             # v6e/v7x the multiply could stay bf16
    x_avg = jnp.mean(xf, axis=1)             # (Nb, HW) channel mean
    x_max = jnp.max(xf, axis=1)              # (Nb, HW) channel max

    # Column-validity masks for the 7 horizontal taps (shared across row taps).
    col_ok = [jnp.logical_and(col + dj >= 0, col + dj < W)
              for dj in range(-PAD, PAD + 1)]

    # 7x7 conv over the 2-channel (avg, max) map -> 1 channel, no bias.
    # A shift of (di, dj) in (H, W) space is a flat roll by di*W + dj; any
    # wrap-around lands in positions that the row/col masks zero out.
    acc = jnp.zeros(x_avg.shape, jnp.float32)
    for i in range(K):
        di = i - PAD
        shift_r = (-di * W) % HW
        a_r = x_avg if shift_r == 0 else pltpu.roll(x_avg, shift_r, axis=1)
        m_r = x_max if shift_r == 0 else pltpu.roll(x_max, shift_r, axis=1)
        row_ok = jnp.logical_and(row + di >= 0, row + di < H)
        a_r = jnp.where(row_ok, a_r, 0.0)
        m_r = jnp.where(row_ok, m_r, 0.0)
        for j in range(K):
            dj = j - PAD
            shift_c = (-dj) % HW
            a_s = a_r if shift_c == 0 else pltpu.roll(a_r, shift_c, axis=1)
            m_s = m_r if shift_c == 0 else pltpu.roll(m_r, shift_c, axis=1)
            w_a = w_ref[i * K + j]                 # scalar reads from SMEM
            w_m = w_ref[K * K + i * K + j]
            acc = acc + jnp.where(col_ok[j], w_a * a_s + w_m * m_s, 0.0)

    if tanh_act:
        ms = jnp.tanh(acc) + 1.0
    else:
        ms = jax.nn.sigmoid(acc)

    # Lane-dense elementwise multiply + store: (Nb, C, HW) * (Nb, 1, HW).
    o_ref[...] = (xf * ms[:, None, :]).astype(o_ref.dtype)


def _pick_block_batch(N, C, HW, itemsize):
    """Largest divisor of N whose block fits a small VMEM budget, while keeping
    >=2 grid steps when N>=2 so both v7x TensorCores get work."""
    per_batch = C * HW * itemsize
    budget = 4 << 20                               # 4 MiB per block (x4 buffered)
    cap = max(1, budget // max(per_batch, 1))
    if N >= 2:
        cap = min(cap, max(1, N // 2))
    nb = 1
    for d in range(1, N + 1):
        if N % d == 0 and d <= cap:
            nb = d
    return nb


def cbam_module_spatial(x, conv_weight, tanh_act=False):
    """x: (N, C, H, W); conv_weight: (1, 2, 7, 7) (PyTorch OIHW)."""
    N, C, H, W = x.shape
    HW = H * W

    x3 = x.reshape(N, C, HW)                                   # lane-dense view
    w_flat = conv_weight.reshape(-1).astype(jnp.float32)       # (98,)

    flat = jnp.arange(HW, dtype=jnp.int32)
    coords = jnp.stack([flat // W, flat % W], axis=0)          # (2, HW) int32

    Nb = _pick_block_batch(N, C, HW, x.dtype.itemsize)
    grid = (N // Nb,)

    kernel = functools.partial(cbam_spatial_kernel, H=H, W=W, tanh_act=tanh_act)
    out3 = pl.pallas_call(
        kernel,
        out_shape=jax.ShapeDtypeStruct((N, C, HW), x.dtype),
        grid=grid,
        in_specs=[
            pl.BlockSpec(memory_space=pltpu.MemorySpace.SMEM),       # weights
            pl.BlockSpec((2, HW), lambda b: (0, 0)),                 # coords
            pl.BlockSpec((Nb, C, HW), lambda b: (b, 0, 0)),          # x block
        ],
        out_specs=pl.BlockSpec((Nb, C, HW), lambda b: (b, 0, 0)),
        compiler_params=pltpu.CompilerParams(dimension_semantics=("parallel",)),
    )(w_flat, coords, x3)
    return out3.reshape(N, C, H, W)


def reference(x, conv_weight, tanh_act=False):
    """Pure-JAX reference mirroring the PyTorch forward."""
    xf = x.astype(jnp.float32)
    x_avg = jnp.mean(xf, axis=1, keepdims=True)
    x_max = jnp.max(xf, axis=1, keepdims=True)
    x_merge = jnp.concatenate([x_avg, x_max], axis=1)
    conv = jax.lax.conv_general_dilated(
        x_merge, conv_weight.astype(jnp.float32),
        window_strides=(1, 1), padding=[(PAD, PAD), (PAD, PAD)],
        dimension_numbers=("NCHW", "OIHW", "NCHW"))
    ms = (jnp.tanh(conv) + 1.0) if tanh_act else jax.nn.sigmoid(conv)
    return (xf * ms).astype(x.dtype)


if __name__ == "__main__":
    key = jax.random.PRNGKey(0)
    k_x, k_w = jax.random.split(key)

    N, C, H, W = 2, 4, 16, 16
    x = jax.random.normal(k_x, (N, C, H, W), dtype=jnp.float32)

    # Conv2d(2, 1, kernel_size=7, bias=False) with xavier_uniform init:
    # fan_in = 2*7*7 = 98, fan_out = 1*7*7 = 49, bound = sqrt(6/(fan_in+fan_out))
    bound = math.sqrt(6.0 / (2 * K * K + 1 * K * K))
    conv_weight = jax.random.uniform(
        k_w, (1, 2, K, K), minval=-bound, maxval=bound, dtype=jnp.float32)

    for tanh_act in (False, True):
        out = cbam_module_spatial(x, conv_weight, tanh_act=tanh_act)
        out = jax.block_until_ready(out)
        ref = reference(x, conv_weight, tanh_act=tanh_act)
        assert out.shape == ref.shape and out.dtype == ref.dtype
        assert jnp.allclose(out, ref, rtol=1e-4, atol=1e-5), (
            f"mismatch (tanh_act={tanh_act})")

    print("KERNEL_OK")
</pallas_src>

<mosaic_0001>
module attributes {stable_mosaic.version = 11 : i64} {
  func.func @cbam_spatial_kernel(%arg0: i32, %arg1: memref<98xf32, #tpu.memory_space<smem>>, %arg2: memref<2x256xi32, #tpu.memory_space<vmem>>, %arg3: memref<1x4x256xf32, #tpu.memory_space<vmem>>, %arg4: memref<1x4x256xf32, #tpu.memory_space<vmem>>) attributes {dimension_semantics = [#tpu.dimension_semantics<parallel>], iteration_bounds = array<i64: 2>, scalar_prefetch = 0 : i64, scratch_operands = 0 : i64, tpu.core_type = #tpu.core_type<tc>, window_params = [{transform_indices = @transform_0, window_bounds = array<i64: 98>}, {pipeline_mode = #tpu.pipeline_mode<synchronous>, transform_indices = @transform_1, window_bounds = array<i64: 2, 256>}, {transform_indices = @transform_2, window_bounds = array<i64: 1, 4, 256>}, {transform_indices = @transform_3, window_bounds = array<i64: 1, 4, 256>}]} {
    %c0 = arith.constant 0 : index
    %c0_0 = arith.constant 0 : index
    %0 = vector.load %arg2[%c0, %c0_0] : memref<2x256xi32, #tpu.memory_space<vmem>>, vector<2x256xi32>
    %1 = vector.extract_strided_slice %0 {offsets = [0, 0], sizes = [1, 256], strides = [1, 1]} : vector<2x256xi32> to vector<1x256xi32>
    %2 = vector.extract_strided_slice %0 {offsets = [1, 0], sizes = [1, 256], strides = [1, 1]} : vector<2x256xi32> to vector<1x256xi32>
    %c0_1 = arith.constant 0 : index
    %c0_2 = arith.constant 0 : index
    %c0_3 = arith.constant 0 : index
    %3 = vector.load %arg3[%c0_1, %c0_2, %c0_3] : memref<1x4x256xf32, #tpu.memory_space<vmem>>, vector<1x4x256xf32>
    %cst = arith.constant dense<0.000000e+00> : vector<1x256xf32>
    %4 = vector.multi_reduction <add>, %3, %cst [1] : vector<1x4x256xf32> to vector<1x256xf32>
    %cst_4 = arith.constant 4.000000e+00 : f32
    %5 = vector.broadcast %cst_4 : f32 to vector<1x256xf32>
    %6 = arith.divf %4, %5 : vector<1x256xf32>
    %cst_5 = arith.constant dense<0xFF800000> : vector<1x256xf32>
    %7 = vector.multi_reduction <maximumf>, %3, %cst_5 [1] : vector<1x4x256xf32> to vector<1x256xf32>
    %c-3_i32 = arith.constant -3 : i32
    %8 = vector.broadcast %c-3_i32 : i32 to vector<1x256xi32>
    %9 = arith.addi %2, %8 : vector<1x256xi32>
    %c0_i32 = arith.constant 0 : i32
    %10 = vector.broadcast %c0_i32 : i32 to vector<1x256xi32>
    %11 = arith.cmpi sge, %9, %10 : vector<1x256xi32>
    %c-3_i32_6 = arith.constant -3 : i32
    %12 = vector.broadcast %c-3_i32_6 : i32 to vector<1x256xi32>
    %13 = arith.addi %2, %12 : vector<1x256xi32>
    %c16_i32 = arith.constant 16 : i32
    %14 = vector.broadcast %c16_i32 : i32 to vector<1x256xi32>
    %15 = arith.cmpi slt, %13, %14 : vector<1x256xi32>
    %16 = arith.andi %11, %15 : vector<1x256xi1>
    %c-2_i32 = arith.constant -2 : i32
    %17 = vector.broadcast %c-2_i32 : i32 to vector<1x256xi32>
    %18 = arith.addi %2, %17 : vector<1x256xi32>
    %c0_i32_7 = arith.constant 0 : i32
    %19 = vector.broadcast %c0_i32_7 : i32 to vector<1x256xi32>
    %20 = arith.cmpi sge, %18, %19 : vector<1x256xi32>
    %c-2_i32_8 = arith.constant -2 : i32
    %21 = vector.broadcast %c-2_i32_8 : i32 to vector<1x256xi32>
    %22 = arith.addi %2, %21 : vector<1x256xi32>
    %c16_i32_9 = arith.constant 16 : i32
    %23 = vector.broadcast %c16_i32_9 : i32 to vector<1x256xi32>
    %24 = arith.cmpi slt, %22, %23 : vector<1x256xi32>
    %25 = arith.andi %20, %24 : vector<1x256xi1>
    %c-1_i32 = arith.constant -1 : i32
    %26 = vector.broadcast %c-1_i32 : i32 to vector<1x256xi32>
    %27 = arith.addi %2, %26 : vector<1x256xi32>
    %c0_i32_10 = arith.constant 0 : i32
    %28 = vector.broadcast %c0_i32_10 : i32 to vector<1x256xi32>
    %29 = arith.cmpi sge, %27, %28 : vector<1x256xi32>
    %c-1_i32_11 = arith.constant -1 : i32
    %30 = vector.broadcast %c-1_i32_11 : i32 to vector<1x256xi32>
    %31 = arith.addi %2, %30 : vector<1x256xi32>
    %c16_i32_12 = arith.constant 16 : i32
    %32 = vector.broadcast %c16_i32_12 : i32 to vector<1x256xi32>
    %33 = arith.cmpi slt, %31, %32 : vector<1x256xi32>
    %34 = arith.andi %29, %33 : vector<1x256xi1>
    %c0_i32_13 = arith.constant 0 : i32
    %35 = vector.broadcast %c0_i32_13 : i32 to vector<1x256xi32>
    %36 = arith.addi %2, %35 : vector<1x256xi32>
    %c0_i32_14 = arith.constant 0 : i32
    %37 = vector.broadcast %c0_i32_14 : i32 to vector<1x256xi32>
    %38 = arith.cmpi sge, %36, %37 : vector<1x256xi32>
    %c0_i32_15 = arith.constant 0 : i32
    %39 = vector.broadcast %c0_i32_15 : i32 to vector<1x256xi32>
    %40 = arith.addi %2, %39 : vector<1x256xi32>
    %c16_i32_16 = arith.constant 16 : i32
    %41 = vector.broadcast %c16_i32_16 : i32 to vector<1x256xi32>
    %42 = arith.cmpi slt, %40, %41 : vector<1x256xi32>
    %43 = arith.andi %38, %42 : vector<1x256xi1>
    %c1_i32 = arith.constant 1 : i32
    %44 = vector.broadcast %c1_i32 : i32 to vector<1x256xi32>
    %45 = arith.addi %2, %44 : vector<1x256xi32>
    %c0_i32_17 = arith.constant 0 : i32
    %46 = vector.broadcast %c0_i32_17 : i32 to vector<1x256xi32>
    %47 = arith.cmpi sge, %45, %46 : vector<1x256xi32>
    %c1_i32_18 = arith.constant 1 : i32
    %48 = vector.broadcast %c1_i32_18 : i32 to vector<1x256xi32>
    %49 = arith.addi %2, %48 : vector<1x256xi32>
    %c16_i32_19 = arith.constant 16 : i32
    %50 = vector.broadcast %c16_i32_19 : i32 to vector<1x256xi32>
    %51 = arith.cmpi slt, %49, %50 : vector<1x256xi32>
    %52 = arith.andi %47, %51 : vector<1x256xi1>
    %c2_i32 = arith.constant 2 : i32
    %53 = vector.broadcast %c2_i32 : i32 to vector<1x256xi32>
    %54 = arith.addi %2, %53 : vector<1x256xi32>
    %c0_i32_20 = arith.constant 0 : i32
    %55 = vector.broadcast %c0_i32_20 : i32 to vector<1x256xi32>
    %56 = arith.cmpi sge, %54, %55 : vector<1x256xi32>
    %c2_i32_21 = arith.constant 2 : i32
    %57 = vector.broadcast %c2_i32_21 : i32 to vector<1x256xi32>
    %58 = arith.addi %2, %57 : vector<1x256xi32>
    %c16_i32_22 = arith.constant 16 : i32
    %59 = vector.broadcast %c16_i32_22 : i32 to vector<1x256xi32>
    %60 = arith.cmpi slt, %58, %59 : vector<1x256xi32>
    %61 = arith.andi %56, %60 : vector<1x256xi1>
    %c3_i32 = arith.constant 3 : i32
    %62 = vector.broadcast %c3_i32 : i32 to vector<1x256xi32>
    %63 = arith.addi %2, %62 : vector<1x256xi32>
    %c0_i32_23 = arith.constant 0 : i32
    %64 = vector.broadcast %c0_i32_23 : i32 to vector<1x256xi32>
    %65 = arith.cmpi sge, %63, %64 : vector<1x256xi32>
    %c3_i32_24 = arith.constant 3 : i32
    %66 = vector.broadcast %c3_i32_24 : i32 to vector<1x256xi32>
    %67 = arith.addi %2, %66 : vector<1x256xi32>
    %c16_i32_25 = arith.constant 16 : i32
    %68 = vector.broadcast %c16_i32_25 : i32 to vector<1x256xi32>
    %69 = arith.cmpi slt, %67, %68 : vector<1x256xi32>
    %70 = arith.andi %65, %69 : vector<1x256xi1>
    %cst_26 = arith.constant 0.000000e+00 : f32
    %71 = vector.broadcast %cst_26 : f32 to vector<1x256xf32>
    %c48_i32 = arith.constant 48 : i32
    %72 = tpu.dynamic_rotate %6 by %c48_i32 dim 1 : vector<1x256xf32>, i32 -> vector<1x256xf32>
    %c48_i32_27 = arith.constant 48 : i32
    %73 = tpu.dynamic_rotate %7 by %c48_i32_27 dim 1 : vector<1x256xf32>, i32 -> vector<1x256xf32>
    %c-3_i32_28 = arith.constant -3 : i32
    %74 = vector.broadcast %c-3_i32_28 : i32 to vector<1x256xi32>
    %75 = arith.addi %1, %74 : vector<1x256xi32>
    %c0_i32_29 = arith.constant 0 : i32
    %76 = vector.broadcast %c0_i32_29 : i32 to vector<1x256xi32>
    %77 = arith.cmpi sge, %75, %76 : vector<1x256xi32>
    %c-3_i32_30 = arith.constant -3 : i32
    %78 = vector.broadcast %c-3_i32_30 : i32 to vector<1x256xi32>
    %79 = arith.addi %1, %78 : vector<1x256xi32>
    %c16_i32_31 = arith.constant 16 : i32
    %80 = vector.broadcast %c16_i32_31 : i32 to vector<1x256xi32>
    %81 = arith.cmpi slt, %79, %80 : vector<1x256xi32>
    %82 = arith.andi %77, %81 : vector<1x256xi1>
    %cst_32 = arith.constant 0.000000e+00 : f32
    %83 = vector.broadcast %cst_32 : f32 to vector<1x256xf32>
    %84 = arith.select %82, %72, %83 : vector<1x256xi1>, vector<1x256xf32>
    %cst_33 = arith.constant 0.000000e+00 : f32
    %85 = vector.broadcast %cst_33 : f32 to vector<1x256xf32>
    %86 = arith.select %82, %73, %85 : vector<1x256xi1>, vector<1x256xf32>
    %c3_i32_34 = arith.constant 3 : i32
    %87 = tpu.dynamic_rotate %84 by %c3_i32_34 dim 1 : vector<1x256xf32>, i32 -> vector<1x256xf32>
    %c3_i32_35 = arith.constant 3 : i32
    %88 = tpu.dynamic_rotate %86 by %c3_i32_35 dim 1 : vector<1x256xf32>, i32 -> vector<1x256xf32>
    %c0_36 = arith.constant 0 : index
    %89 = memref.load %arg1[%c0_36] : memref<98xf32, #tpu.memory_space<smem>>
    %c49 = arith.constant 49 : index
    %90 = memref.load %arg1[%c49] : memref<98xf32, #tpu.memory_space<smem>>
    %91 = vector.broadcast %89 : f32 to vector<1x256xf32>
    %92 = arith.mulf %91, %87 : vector<1x256xf32>
    %93 = vector.broadcast %90 : f32 to vector<1x256xf32>
    %94 = arith.mulf %93, %88 : vector<1x256xf32>
    %95 = arith.addf %92, %94 : vector<1x256xf32>
    %cst_37 = arith.constant 0.000000e+00 : f32
    %96 = vector.broadcast %cst_37 : f32 to vector<1x256xf32>
    %97 = arith.select %16, %95, %96 : vector<1x256xi1>, vector<1x256xf32>
    %98 = arith.addf %71, %97 : vector<1x256xf32>
    %c2_i32_38 = arith.constant 2 : i32
    %99 = tpu.dynamic_rotate %84 by %c2_i32_38 dim 1 : vector<1x256xf32>, i32 -> vector<1x256xf32>
    %c2_i32_39 = arith.constant 2 : i32
    %100 = tpu.dynamic_rotate %86 by %c2_i32_39 dim 1 : vector<1x256xf32>, i32 -> vector<1x256xf32>
    %c1 = arith.constant 1 : index
    %101 = memref.load %arg1[%c1] : memref<98xf32, #tpu.memory_space<smem>>
    %c50 = arith.constant 50 : index
    %102 = memref.load %arg1[%c50] : memref<98xf32, #tpu.memory_space<smem>>
    %103 = vector.broadcast %101 : f32 to vector<1x256xf32>
    %104 = arith.mulf %103, %99 : vector<1x256xf32>
    %105 = vector.broadcast %102 : f32 to vector<1x256xf32>
    %106 = arith.mulf %105, %100 : vector<1x256xf32>
    %107 = arith.addf %104, %106 : vector<1x256xf32>
    %cst_40 = arith.constant 0.000000e+00 : f32
    %108 = vector.broadcast %cst_40 : f32 to vector<1x256xf32>
    %109 = arith.select %25, %107, %108 : vector<1x256xi1>, vector<1x256xf32>
    %110 = arith.addf %98, %109 : vector<1x256xf32>
    %c1_i32_41 = arith.constant 1 : i32
    %111 = tpu.dynamic_rotate %84 by %c1_i32_41 dim 1 : vector<1x256xf32>, i32 -> vector<1x256xf32>
    %c1_i32_42 = arith.constant 1 : i32
    %112 = tpu.dynamic_rotate %86 by %c1_i32_42 dim 1 : vector<1x256xf32>, i32 -> vector<1x256xf32>
    %c2 = arith.constant 2 : index
    %113 = memref.load %arg1[%c2] : memref<98xf32, #tpu.memory_space<smem>>
    %c51 = arith.constant 51 : index
    %114 = memref.load %arg1[%c51] : memref<98xf32, #tpu.memory_space<smem>>
    %115 = vector.broadcast %113 : f32 to vector<1x256xf32>
    %116 = arith.mulf %115, %111 : vector<1x256xf32>
    %117 = vector.broadcast %114 : f32 to vector<1x256xf32>
    %118 = arith.mulf %117, %112 : vector<1x256xf32>
    %119 = arith.addf %116, %118 : vector<1x256xf32>
    %cst_43 = arith.constant 0.000000e+00 : f32
    %120 = vector.broadcast %cst_43 : f32 to vector<1x256xf32>
    %121 = arith.select %34, %119, %120 : vector<1x256xi1>, vector<1x256xf32>
    %122 = arith.addf %110, %121 : vector<1x256xf32>
    %c3 = arith.constant 3 : index
    %123 = memref.load %arg1[%c3] : memref<98xf32, #tpu.memory_space<smem>>
    %c52 = arith.constant 52 : index
    %124 = memref.load %arg1[%c52] : memref<98xf32, #tpu.memory_space<smem>>
    %125 = vector.broadcast %123 : f32 to vector<1x256xf32>
    %126 = arith.mulf %125, %84 : vector<1x256xf32>
    %127 = vector.broadcast %124 : f32 to vector<1x256xf32>
    %128 = arith.mulf %127, %86 : vector<1x256xf32>
    %129 = arith.addf %126, %128 : vector<1x256xf32>
    %cst_44 = arith.constant 0.000000e+00 : f32
    %130 = vector.broadcast %cst_44 : f32 to vector<1x256xf32>
    %131 = arith.select %43, %129, %130 : vector<1x256xi1>, vector<1x256xf32>
    %132 = arith.addf %122, %131 : vector<1x256xf32>
    %c255_i32 = arith.constant 255 : i32
    %133 = tpu.dynamic_rotate %84 by %c255_i32 dim 1 : vector<1x256xf32>, i32 -> vector<1x256xf32>
    %c255_i32_45 = arith.constant 255 : i32
    %134 = tpu.dynamic_rotate %86 by %c255_i32_45 dim 1 : vector<1x256xf32>, i32 -> vector<1x256xf32>
    %c4 = arith.constant 4 : index
    %135 = memref.load %arg1[%c4] : memref<98xf32, #tpu.memory_space<smem>>
    %c53 = arith.constant 53 : index
    %136 = memref.load %arg1[%c53] : memref<98xf32, #tpu.memory_space<smem>>
    %137 = vector.broadcast %135 : f32 to vector<1x256xf32>
    %138 = arith.mulf %137, %133 : vector<1x256xf32>
    %139 = vector.broadcast %136 : f32 to vector<1x256xf32>
    %140 = arith.mulf %139, %134 : vector<1x256xf32>
    %141 = arith.addf %138, %140 : vector<1x256xf32>
    %cst_46 = arith.constant 0.000000e+00 : f32
    %142 = vector.broadcast %cst_46 : f32 to vector<1x256xf32>
    %143 = arith.select %52, %141, %142 : vector<1x256xi1>, vector<1x256xf32>
    %144 = arith.addf %132, %143 : vector<1x256xf32>
    %c254_i32 = arith.constant 254 : i32
    %145 = tpu.dynamic_rotate %84 by %c254_i32 dim 1 : vector<1x256xf32>, i32 -> vector<1x256xf32>
    %c254_i32_47 = arith.constant 254 : i32
    %146 = tpu.dynamic_rotate %86 by %c254_i32_47 dim 1 : vector<1x256xf32>, i32 -> vector<1x256xf32>
    %c5 = arith.constant 5 : index
    %147 = memref.load %arg1[%c5] : memref<98xf32, #tpu.memory_space<smem>>
    %c54 = arith.constant 54 : index
    %148 = memref.load %arg1[%c54] : memref<98xf32, #tpu.memory_space<smem>>
    %149 = vector.broadcast %147 : f32 to vector<1x256xf32>
    %150 = arith.mulf %149, %145 : vector<1x256xf32>
    %151 = vector.broadcast %148 : f32 to vector<1x256xf32>
    %152 = arith.mulf %151, %146 : vector<1x256xf32>
    %153 = arith.addf %150, %152 : vector<1x256xf32>
    %cst_48 = arith.constant 0.000000e+00 : f32
    %154 = vector.broadcast %cst_48 : f32 to vector<1x256xf32>
    %155 = arith.select %61, %153, %154 : vector<1x256xi1>, vector<1x256xf32>
    %156 = arith.addf %144, %155 : vector<1x256xf32>
    %c253_i32 = arith.constant 253 : i32
    %157 = tpu.dynamic_rotate %84 by %c253_i32 dim 1 : vector<1x256xf32>, i32 -> vector<1x256xf32>
    %c253_i32_49 = arith.constant 253 : i32
    %158 = tpu.dynamic_rotate %86 by %c253_i32_49 dim 1 : vector<1x256xf32>, i32 -> vector<1x256xf32>
    %c6 = arith.constant 6 : index
    %159 = memref.load %arg1[%c6] : memref<98xf32, #tpu.memory_space<smem>>
    %c55 = arith.constant 55 : index
    %160 = memref.load %arg1[%c55] : memref<98xf32, #tpu.memory_space<smem>>
    %161 = vector.broadcast %159 : f32 to vector<1x256xf32>
    %162 = arith.mulf %161, %157 : vector<1x256xf32>
    %163 = vector.broadcast %160 : f32 to vector<1x256xf32>
    %164 = arith.mulf %163, %158 : vector<1x256xf32>
    %165 = arith.addf %162, %164 : vector<1x256xf32>
    %cst_50 = arith.constant 0.000000e+00 : f32
    %166 = vector.broadcast %cst_50 : f32 to vector<1x256xf32>
    %167 = arith.select %70, %165, %166 : vector<1x256xi1>, vector<1x256xf32>
    %168 = arith.addf %156, %167 : vector<1x256xf32>
    %c32_i32 = arith.constant 32 : i32
    %169 = tpu.dynamic_rotate %6 by %c32_i32 dim 1 : vector<1x256xf32>, i32 -> vector<1x256xf32>
    %c32_i32_51 = arith.constant 32 : i32
    %170 = tpu.dynamic_rotate %7 by %c32_i32_51 dim 1 : vector<1x256xf32>, i32 -> vector<1x256xf32>
    %c-2_i32_52 = arith.constant -2 : i32
    %171 = vector.broadcast %c-2_i32_52 : i32 to vector<1x256xi32>
    %172 = arith.addi %1, %171 : vector<1x256xi32>
    %c0_i32_53 = arith.constant 0 : i32
    %173 = vector.broadcast %c0_i32_53 : i32 to vector<1x256xi32>
    %174 = arith.cmpi sge, %172, %173 : vector<1x256xi32>
    %c-2_i32_54 = arith.constant -2 : i32
    %175 = vector.broadcast %c-2_i32_54 : i32 to vector<1x256xi32>
    %176 = arith.addi %1, %175 : vector<1x256xi32>
    %c16_i32_55 = arith.constant 16 : i32
    %177 = vector.broadcast %c16_i32_55 : i32 to vector<1x256xi32>
    %178 = arith.cmpi slt, %176, %177 : vector<1x256xi32>
    %179 = arith.andi %174, %178 : vector<1x256xi1>
    %cst_56 = arith.constant 0.000000e+00 : f32
    %180 = vector.broadcast %cst_56 : f32 to vector<1x256xf32>
    %181 = arith.select %179, %169, %180 : vector<1x256xi1>, vector<1x256xf32>
    %cst_57 = arith.constant 0.000000e+00 : f32
    %182 = vector.broadcast %cst_57 : f32 to vector<1x256xf32>
    %183 = arith.select %179, %170, %182 : vector<1x256xi1>, vector<1x256xf32>
    %c3_i32_58 = arith.constant 3 : i32
    %184 = tpu.dynamic_rotate %181 by %c3_i32_58 dim 1 : vector<1x256xf32>, i32 -> vector<1x256xf32>
    %c3_i32_59 = arith.constant 3 : i32
    %185 = tpu.dynamic_rotate %183 by %c3_i32_59 dim 1 : vector<1x256xf32>, i32 -> vector<1x256xf32>
    %c7 = arith.constant 7 : index
    %186 = memref.load %arg1[%c7] : memref<98xf32, #tpu.memory_space<smem>>
    %c56 = arith.constant 56 : index
    %187 = memref.load %arg1[%c56] : memref<98xf32, #tpu.memory_space<smem>>
    %188 = vector.broadcast %186 : f32 to vector<1x256xf32>
    %189 = arith.mulf %188, %184 : vector<1x256xf32>
    %190 = vector.broadcast %187 : f32 to vector<1x256xf32>
    %191 = arith.mulf %190, %185 : vector<1x256xf32>
    %192 = arith.addf %189, %191 : vector<1x256xf32>
    %cst_60 = arith.constant 0.000000e+00 : f32
    %193 = vector.broadcast %cst_60 : f32 to vector<1x256xf32>
    %194 = arith.select %16, %192, %193 : vector<1x256xi1>, vector<1x256xf32>
    %195 = arith.addf %168, %194 : vector<1x256xf32>
    %c2_i32_61 = arith.constant 2 : i32
    %196 = tpu.dynamic_rotate %181 by %c2_i32_61 dim 1 : vector<1x256xf32>, i32 -> vector<1x256xf32>
    %c2_i32_62 = arith.constant 2 : i32
    %197 = tpu.dynamic_rotate %183 by %c2_i32_62 dim 1 : vector<1x256xf32>, i32 -> vector<1x256xf32>
    %c8 = arith.constant 8 : index
    %198 = memref.load %arg1[%c8] : memref<98xf32, #tpu.memory_space<smem>>
    %c57 = arith.constant 57 : index
    %199 = memref.load %arg1[%c57] : memref<98xf32, #tpu.memory_space<smem>>
    %200 = vector.broadcast %198 : f32 to vector<1x256xf32>
    %201 = arith.mulf %200, %196 : vector<1x256xf32>
    %202 = vector.broadcast %199 : f32 to vector<1x256xf32>
    %203 = arith.mulf %202, %197 : vector<1x256xf32>
    %204 = arith.addf %201, %203 : vector<1x256xf32>
    %cst_63 = arith.constant 0.000000e+00 : f32
    %205 = vector.broadcast %cst_63 : f32 to vector<1x256xf32>
    %206 = arith.select %25, %204, %205 : vector<1x256xi1>, vector<1x256xf32>
    %207 = arith.addf %195, %206 : vector<1x256xf32>
    %c1_i32_64 = arith.constant 1 : i32
    %208 = tpu.dynamic_rotate %181 by %c1_i32_64 dim 1 : vector<1x256xf32>, i32 -> vector<1x256xf32>
    %c1_i32_65 = arith.constant 1 : i32
    %209 = tpu.dynamic_rotate %183 by %c1_i32_65 dim 1 : vector<1x256xf32>, i32 -> vector<1x256xf32>
    %c9 = arith.constant 9 : index
    %210 = memref.load %arg1[%c9] : memref<98xf32, #tpu.memory_space<smem>>
    %c58 = arith.constant 58 : index
    %211 = memref.load %arg1[%c58] : memref<98xf32, #tpu.memory_space<smem>>
    %212 = vector.broadcast %210 : f32 to vector<1x256xf32>
    %213 = arith.mulf %212, %208 : vector<1x256xf32>
    %214 = vector.broadcast %211 : f32 to vector<1x256xf32>
    %215 = arith.mulf %214, %209 : vector<1x256xf32>
    %216 = arith.addf %213, %215 : vector<1x256xf32>
    %cst_66 = arith.constant 0.000000e+00 : f32
    %217 = vector.broadcast %cst_66 : f32 to vector<1x256xf32>
    %218 = arith.select %34, %216, %217 : vector<1x256xi1>, vector<1x256xf32>
    %219 = arith.addf %207, %218 : vector<1x256xf32>
    %c10 = arith.constant 10 : index
    %220 = memref.load %arg1[%c10] : memref<98xf32, #tpu.memory_space<smem>>
    %c59 = arith.constant 59 : index
    %221 = memref.load %arg1[%c59] : memref<98xf32, #tpu.memory_space<smem>>
    %222 = vector.broadcast %220 : f32 to vector<1x256xf32>
    %223 = arith.mulf %222, %181 : vector<1x256xf32>
    %224 = vector.broadcast %221 : f32 to vector<1x256xf32>
    %225 = arith.mulf %224, %183 : vector<1x256xf32>
    %226 = arith.addf %223, %225 : vector<1x256xf32>
    %cst_67 = arith.constant 0.000000e+00 : f32
    %227 = vector.broadcast %cst_67 : f32 to vector<1x256xf32>
    %228 = arith.select %43, %226, %227 : vector<1x256xi1>, vector<1x256xf32>
    %229 = arith.addf %219, %228 : vector<1x256xf32>
    %c255_i32_68 = arith.constant 255 : i32
    %230 = tpu.dynamic_rotate %181 by %c255_i32_68 dim 1 : vector<1x256xf32>, i32 -> vector<1x256xf32>
    %c255_i32_69 = arith.constant 255 : i32
    %231 = tpu.dynamic_rotate %183 by %c255_i32_69 dim 1 : vector<1x256xf32>, i32 -> vector<1x256xf32>
    %c11 = arith.constant 11 : index
    %232 = memref.load %arg1[%c11] : memref<98xf32, #tpu.memory_space<smem>>
    %c60 = arith.constant 60 : index
    %233 = memref.load %arg1[%c60] : memref<98xf32, #tpu.memory_space<smem>>
    %234 = vector.broadcast %232 : f32 to vector<1x256xf32>
    %235 = arith.mulf %234, %230 : vector<1x256xf32>
    %236 = vector.broadcast %233 : f32 to vector<1x256xf32>
    %237 = arith.mulf %236, %231 : vector<1x256xf32>
    %238 = arith.addf %235, %237 : vector<1x256xf32>
    %cst_70 = arith.constant 0.000000e+00 : f32
    %239 = vector.broadcast %cst_70 : f32 to vector<1x256xf32>
    %240 = arith.select %52, %238, %239 : vector<1x256xi1>, vector<1x256xf32>
    %241 = arith.addf %229, %240 : vector<1x256xf32>
    %c254_i32_71 = arith.constant 254 : i32
    %242 = tpu.dynamic_rotate %181 by %c254_i32_71 dim 1 : vector<1x256xf32>, i32 -> vector<1x256xf32>
    %c254_i32_72 = arith.constant 254 : i32
    %243 = tpu.dynamic_rotate %183 by %c254_i32_72 dim 1 : vector<1x256xf32>, i32 -> vector<1x256xf32>
    %c12 = arith.constant 12 : index
    %244 = memref.load %arg1[%c12] : memref<98xf32, #tpu.memory_space<smem>>
    %c61 = arith.constant 61 : index
    %245 = memref.load %arg1[%c61] : memref<98xf32, #tpu.memory_space<smem>>
    %246 = vector.broadcast %244 : f32 to vector<1x256xf32>
    %247 = arith.mulf %246, %242 : vector<1x256xf32>
    %248 = vector.broadcast %245 : f32 to vector<1x256xf32>
    %249 = arith.mulf %248, %243 : vector<1x256xf32>
    %250 = arith.addf %247, %249 : vector<1x256xf32>
    %cst_73 = arith.constant 0.000000e+00 : f32
    %251 = vector.broadcast %cst_73 : f32 to vector<1x256xf32>
    %252 = arith.select %61, %250, %251 : vector<1x256xi1>, vector<1x256xf32>
    %253 = arith.addf %241, %252 : vector<1x256xf32>
    %c253_i32_74 = arith.constant 253 : i32
    %254 = tpu.dynamic_rotate %181 by %c253_i32_74 dim 1 : vector<1x256xf32>, i32 -> vector<1x256xf32>
    %c253_i32_75 = arith.constant 253 : i32
    %255 = tpu.dynamic_rotate %183 by %c253_i32_75 dim 1 : vector<1x256xf32>, i32 -> vector<1x256xf32>
    %c13 = arith.constant 13 : index
    %256 = memref.load %arg1[%c13] : memref<98xf32, #tpu.memory_space<smem>>
    %c62 = arith.constant 62 : index
    %257 = memref.load %arg1[%c62] : memref<98xf32, #tpu.memory_space<smem>>
    %258 = vector.broadcast %256 : f32 to vector<1x256xf32>
    %259 = arith.mulf %258, %254 : vector<1x256xf32>
    %260 = vector.broadcast %257 : f32 to vector<1x256xf32>
    %261 = arith.mulf %260, %255 : vector<1x256xf32>
    %262 = arith.addf %259, %261 : vector<1x256xf32>
    %cst_76 = arith.constant 0.000000e+00 : f32
    %263 = vector.broadcast %cst_76 : f32 to vector<1x256xf32>
    %264 = arith.select %70, %262, %263 : vector<1x256xi1>, vector<1x256xf32>
    %265 = arith.addf %253, %264 : vector<1x256xf32>
    %c16_i32_77 = arith.constant 16 : i32
    %266 = tpu.dynamic_rotate %6 by %c16_i32_77 dim 1 : vector<1x256xf32>, i32 -> vector<1x256xf32>
    %c16_i32_78 = arith.constant 16 : i32
    %267 = tpu.dynamic_rotate %7 by %c16_i32_78 dim 1 : vector<1x256xf32>, i32 -> vector<1x256xf32>
    %c-1_i32_79 = arith.constant -1 : i32
    %268 = vector.broadcast %c-1_i32_79 : i32 to vector<1x256xi32>
    %269 = arith.addi %1, %268 : vector<1x256xi32>
    %c0_i32_80 = arith.constant 0 : i32
    %270 = vector.broadcast %c0_i32_80 : i32 to vector<1x256xi32>
    %271 = arith.cmpi sge, %269, %270 : vector<1x256xi32>
    %c-1_i32_81 = arith.constant -1 : i32
    %272 = vector.broadcast %c-1_i32_81 : i32 to vector<1x256xi32>
    %273 = arith.addi %1, %272 : vector<1x256xi32>
    %c16_i32_82 = arith.constant 16 : i32
    %274 = vector.broadcast %c16_i32_82 : i32 to vector<1x256xi32>
    %275 = arith.cmpi slt, %273, %274 : vector<1x256xi32>
    %276 = arith.andi %271, %275 : vector<1x256xi1>
    %cst_83 = arith.constant 0.000000e+00 : f32
    %277 = vector.broadcast %cst_83 : f32 to vector<1x256xf32>
    %278 = arith.select %276, %266, %277 : vector<1x256xi1>, vector<1x256xf32>
    %cst_84 = arith.constant 0.000000e+00 : f32
    %279 = vector.broadcast %cst_84 : f32 to vector<1x256xf32>
    %280 = arith.select %276, %267, %279 : vector<1x256xi1>, vector<1x256xf32>
    %c3_i32_85 = arith.constant 3 : i32
    %281 = tpu.dynamic_rotate %278 by %c3_i32_85 dim 1 : vector<1x256xf32>, i32 -> vector<1x256xf32>
    %c3_i32_86 = arith.constant 3 : i32
    %282 = tpu.dynamic_rotate %280 by %c3_i32_86 dim 1 : vector<1x256xf32>, i32 -> vector<1x256xf32>
    %c14 = arith.constant 14 : index
    %283 = memref.load %arg1[%c14] : memref<98xf32, #tpu.memory_space<smem>>
    %c63 = arith.constant 63 : index
    %284 = memref.load %arg1[%c63] : memref<98xf32, #tpu.memory_space<smem>>
    %285 = vector.broadcast %283 : f32 to vector<1x256xf32>
    %286 = arith.mulf %285, %281 : vector<1x256xf32>
    %287 = vector.broadcast %284 : f32 to vector<1x256xf32>
    %288 = arith.mulf %287, %282 : vector<1x256xf32>
    %289 = arith.addf %286, %288 : vector<1x256xf32>
    %cst_87 = arith.constant 0.000000e+00 : f32
    %290 = vector.broadcast %cst_87 : f32 to vector<1x256xf32>
    %291 = arith.select %16, %289, %290 : vector<1x256xi1>, vector<1x256xf32>
    %292 = arith.addf %265, %291 : vector<1x256xf32>
    %c2_i32_88 = arith.constant 2 : i32
    %293 = tpu.dynamic_rotate %278 by %c2_i32_88 dim 1 : vector<1x256xf32>, i32 -> vector<1x256xf32>
    %c2_i32_89 = arith.constant 2 : i32
    %294 = tpu.dynamic_rotate %280 by %c2_i32_89 dim 1 : vector<1x256xf32>, i32 -> vector<1x256xf32>
    %c15 = arith.constant 15 : index
    %295 = memref.load %arg1[%c15] : memref<98xf32, #tpu.memory_space<smem>>
    %c64 = arith.constant 64 : index
    %296 = memref.load %arg1[%c64] : memref<98xf32, #tpu.memory_space<smem>>
    %297 = vector.broadcast %295 : f32 to vector<1x256xf32>
    %298 = arith.mulf %297, %293 : vector<1x256xf32>
    %299 = vector.broadcast %296 : f32 to vector<1x256xf32>
    %300 = arith.mulf %299, %294 : vector<1x256xf32>
    %301 = arith.addf %298, %300 : vector<1x256xf32>
    %cst_90 = arith.constant 0.000000e+00 : f32
    %302 = vector.broadcast %cst_90 : f32 to vector<1x256xf32>
    %303 = arith.select %25, %301, %302 : vector<1x256xi1>, vector<1x256xf32>
    %304 = arith.addf %292, %303 : vector<1x256xf32>
    %c1_i32_91 = arith.constant 1 : i32
    %305 = tpu.dynamic_rotate %278 by %c1_i32_91 dim 1 : vector<1x256xf32>, i32 -> vector<1x256xf32>
    %c1_i32_92 = arith.constant 1 : i32
    %306 = tpu.dynamic_rotate %280 by %c1_i32_92 dim 1 : vector<1x256xf32>, i32 -> vector<1x256xf32>
    %c16 = arith.constant 16 : index
    %307 = memref.load %arg1[%c16] : memref<98xf32, #tpu.memory_space<smem>>
    %c65 = arith.constant 65 : index
    %308 = memref.load %arg1[%c65] : memref<98xf32, #tpu.memory_space<smem>>
    %309 = vector.broadcast %307 : f32 to vector<1x256xf32>
    %310 = arith.mulf %309, %305 : vector<1x256xf32>
    %311 = vector.broadcast %308 : f32 to vector<1x256xf32>
    %312 = arith.mulf %311, %306 : vector<1x256xf32>
    %313 = arith.addf %310, %312 : vector<1x256xf32>
    %cst_93 = arith.constant 0.000000e+00 : f32
    %314 = vector.broadcast %cst_93 : f32 to vector<1x256xf32>
    %315 = arith.select %34, %313, %314 : vector<1x256xi1>, vector<1x256xf32>
    %316 = arith.addf %304, %315 : vector<1x256xf32>
    %c17 = arith.constant 17 : index
    %317 = memref.load %arg1[%c17] : memref<98xf32, #tpu.memory_space<smem>>
    %c66 = arith.constant 66 : index
    %318 = memref.load %arg1[%c66] : memref<98xf32, #tpu.memory_space<smem>>
    %319 = vector.broadcast %317 : f32 to vector<1x256xf32>
    %320 = arith.mulf %319, %278 : vector<1x256xf32>
    %321 = vector.broadcast %318 : f32 to vector<1x256xf32>
    %322 = arith.mulf %321, %280 : vector<1x256xf32>
    %323 = arith.addf %320, %322 : vector<1x256xf32>
    %cst_94 = arith.constant 0.000000e+00 : f32
    %324 = vector.broadcast %cst_94 : f32 to vector<1x256xf32>
    %325 = arith.select %43, %323, %324 : vector<1x256xi1>, vector<1x256xf32>
    %326 = arith.addf %316, %325 : vector<1x256xf32>
    %c255_i32_95 = arith.constant 255 : i32
    %327 = tpu.dynamic_rotate %278 by %c255_i32_95 dim 1 : vector<1x256xf32>, i32 -> vector<1x256xf32>
    %c255_i32_96 = arith.constant 255 : i32
    %328 = tpu.dynamic_rotate %280 by %c255_i32_96 dim 1 : vector<1x256xf32>, i32 -> vector<1x256xf32>
    %c18 = arith.constant 18 : index
    %329 = memref.load %arg1[%c18] : memref<98xf32, #tpu.memory_space<smem>>
    %c67 = arith.constant 67 : index
    %330 = memref.load %arg1[%c67] : memref<98xf32, #tpu.memory_space<smem>>
    %331 = vector.broadcast %329 : f32 to vector<1x256xf32>
    %332 = arith.mulf %331, %327 : vector<1x256xf32>
    %333 = vector.broadcast %330 : f32 to vector<1x256xf32>
    %334 = arith.mulf %333, %328 : vector<1x256xf32>
    %335 = arith.addf %332, %334 : vector<1x256xf32>
    %cst_97 = arith.constant 0.000000e+00 : f32
    %336 = vector.broadcast %cst_97 : f32 to vector<1x256xf32>
    %337 = arith.select %52, %335, %336 : vector<1x256xi1>, vector<1x256xf32>
    %338 = arith.addf %326, %337 : vector<1x256xf32>
    %c254_i32_98 = arith.constant 254 : i32
    %339 = tpu.dynamic_rotate %278 by %c254_i32_98 dim 1 : vector<1x256xf32>, i32 -> vector<1x256xf32>
    %c254_i32_99 = arith.constant 254 : i32
    %340 = tpu.dynamic_rotate %280 by %c254_i32_99 dim 1 : vector<1x256xf32>, i32 -> vector<1x256xf32>
    %c19 = arith.constant 19 : index
    %341 = memref.load %arg1[%c19] : memref<98xf32, #tpu.memory_space<smem>>
    %c68 = arith.constant 68 : index
    %342 = memref.load %arg1[%c68] : memref<98xf32, #tpu.memory_space<smem>>
    %343 = vector.broadcast %341 : f32 to vector<1x256xf32>
    %344 = arith.mulf %343, %339 : vector<1x256xf32>
    %345 = vector.broadcast %342 : f32 to vector<1x256xf32>
    %346 = arith.mulf %345, %340 : vector<1x256xf32>
    %347 = arith.addf %344, %346 : vector<1x256xf32>
    %cst_100 = arith.constant 0.000000e+00 : f32
    %348 = vector.broadcast %cst_100 : f32 to vector<1x256xf32>
    %349 = arith.select %61, %347, %348 : vector<1x256xi1>, vector<1x256xf32>
    %350 = arith.addf %338, %349 : vector<1x256xf32>
    %c253_i32_101 = arith.constant 253 : i32
    %351 = tpu.dynamic_rotate %278 by %c253_i32_101 dim 1 : vector<1x256xf32>, i32 -> vector<1x256xf32>
    %c253_i32_102 = arith.constant 253 : i32
    %352 = tpu.dynamic_rotate %280 by %c253_i32_102 dim 1 : vector<1x256xf32>, i32 -> vector<1x256xf32>
    %c20 = arith.constant 20 : index
    %353 = memref.load %arg1[%c20] : memref<98xf32, #tpu.memory_space<smem>>
    %c69 = arith.constant 69 : index
    %354 = memref.load %arg1[%c69] : memref<98xf32, #tpu.memory_space<smem>>
    %355 = vector.broadcast %353 : f32 to vector<1x256xf32>
    %356 = arith.mulf %355, %351 : vector<1x256xf32>
    %357 = vector.broadcast %354 : f32 to vector<1x256xf32>
    %358 = arith.mulf %357, %352 : vector<1x256xf32>
    %359 = arith.addf %356, %358 : vector<1x256xf32>
    %cst_103 = arith.constant 0.000000e+00 : f32
    %360 = vector.broadcast %cst_103 : f32 to vector<1x256xf32>
    %361 = arith.select %70, %359, %360 : vector<1x256xi1>, vector<1x256xf32>
    %362 = arith.addf %350, %361 : vector<1x256xf32>
    %c0_i32_104 = arith.constant 0 : i32
    %363 = vector.broadcast %c0_i32_104 : i32 to vector<1x256xi32>
    %364 = arith.addi %1, %363 : vector<1x256xi32>
    %c0_i32_105 = arith.constant 0 : i32
    %365 = vector.broadcast %c0_i32_105 : i32 to vector<1x256xi32>
    %366 = arith.cmpi sge, %364, %365 : vector<1x256xi32>
    %c0_i32_106 = arith.constant 0 : i32
    %367 = vector.broadcast %c0_i32_106 : i32 to vector<1x256xi32>
    %368 = arith.addi %1, %367 : vector<1x256xi32>
    %c16_i32_107 = arith.constant 16 : i32
    %369 = vector.broadcast %c16_i32_107 : i32 to vector<1x256xi32>
    %370 = arith.cmpi slt, %368, %369 : vector<1x256xi32>
    %371 = arith.andi %366, %370 : vector<1x256xi1>
    %cst_108 = arith.constant 0.000000e+00 : f32
    %372 = vector.broadcast %cst_108 : f32 to vector<1x256xf32>
    %373 = arith.select %371, %6, %372 : vector<1x256xi1>, vector<1x256xf32>
    %cst_109 = arith.constant 0.000000e+00 : f32
    %374 = vector.broadcast %cst_109 : f32 to vector<1x256xf32>
    %375 = arith.select %371, %7, %374 : vector<1x256xi1>, vector<1x256xf32>
    %c3_i32_110 = arith.constant 3 : i32
    %376 = tpu.dynamic_rotate %373 by %c3_i32_110 dim 1 : vector<1x256xf32>, i32 -> vector<1x256xf32>
    %c3_i32_111 = arith.constant 3 : i32
    %377 = tpu.dynamic_rotate %375 by %c3_i32_111 dim 1 : vector<1x256xf32>, i32 -> vector<1x256xf32>
    %c21 = arith.constant 21 : index
    %378 = memref.load %arg1[%c21] : memref<98xf32, #tpu.memory_space<smem>>
    %c70 = arith.constant 70 : index
    %379 = memref.load %arg1[%c70] : memref<98xf32, #tpu.memory_space<smem>>
    %380 = vector.broadcast %378 : f32 to vector<1x256xf32>
    %381 = arith.mulf %380, %376 : vector<1x256xf32>
    %382 = vector.broadcast %379 : f32 to vector<1x256xf32>
    %383 = arith.mulf %382, %377 : vector<1x256xf32>
    %384 = arith.addf %381, %383 : vector<1x256xf32>
    %cst_112 = arith.constant 0.000000e+00 : f32
    %385 = vector.broadcast %cst_112 : f32 to vector<1x256xf32>
    %386 = arith.select %16, %384, %385 : vector<1x256xi1>, vector<1x256xf32>
    %387 = arith.addf %362, %386 : vector<1x256xf32>
    %c2_i32_113 = arith.constant 2 : i32
    %388 = tpu.dynamic_rotate %373 by %c2_i32_113 dim 1 : vector<1x256xf32>, i32 -> vector<1x256xf32>
    %c2_i32_114 = arith.constant 2 : i32
    %389 = tpu.dynamic_rotate %375 by %c2_i32_114 dim 1 : vector<1x256xf32>, i32 -> vector<1x256xf32>
    %c22 = arith.constant 22 : index
    %390 = memref.load %arg1[%c22] : memref<98xf32, #tpu.memory_space<smem>>
    %c71 = arith.constant 71 : index
    %391 = memref.load %arg1[%c71] : memref<98xf32, #tpu.memory_space<smem>>
    %392 = vector.broadcast %390 : f32 to vector<1x256xf32>
    %393 = arith.mulf %392, %388 : vector<1x256xf32>
    %394 = vector.broadcast %391 : f32 to vector<1x256xf32>
    %395 = arith.mulf %394, %389 : vector<1x256xf32>
    %396 = arith.addf %393, %395 : vector<1x256xf32>
    %cst_115 = arith.constant 0.000000e+00 : f32
    %397 = vector.broadcast %cst_115 : f32 to vector<1x256xf32>
    %398 = arith.select %25, %396, %397 : vector<1x256xi1>, vector<1x256xf32>
    %399 = arith.addf %387, %398 : vector<1x256xf32>
    %c1_i32_116 = arith.constant 1 : i32
    %400 = tpu.dynamic_rotate %373 by %c1_i32_116 dim 1 : vector<1x256xf32>, i32 -> vector<1x256xf32>
    %c1_i32_117 = arith.constant 1 : i32
    %401 = tpu.dynamic_rotate %375 by %c1_i32_117 dim 1 : vector<1x256xf32>, i32 -> vector<1x256xf32>
    %c23 = arith.constant 23 : index
    %402 = memref.load %arg1[%c23] : memref<98xf32, #tpu.memory_space<smem>>
    %c72 = arith.constant 72 : index
    %403 = memref.load %arg1[%c72] : memref<98xf32, #tpu.memory_space<smem>>
    %404 = vector.broadcast %402 : f32 to vector<1x256xf32>
    %405 = arith.mulf %404, %400 : vector<1x256xf32>
    %406 = vector.broadcast %403 : f32 to vector<1x256xf32>
    %407 = arith.mulf %406, %401 : vector<1x256xf32>
    %408 = arith.addf %405, %407 : vector<1x256xf32>
    %cst_118 = arith.constant 0.000000e+00 : f32
    %409 = vector.broadcast %cst_118 : f32 to vector<1x256xf32>
    %410 = arith.select %34, %408, %409 : vector<1x256xi1>, vector<1x256xf32>
    %411 = arith.addf %399, %410 : vector<1x256xf32>
    %c24 = arith.constant 24 : index
    %412 = memref.load %arg1[%c24] : memref<98xf32, #tpu.memory_space<smem>>
    %c73 = arith.constant 73 : index
    %413 = memref.load %arg1[%c73] : memref<98xf32, #tpu.memory_space<smem>>
    %414 = vector.broadcast %412 : f32 to vector<1x256xf32>
    %415 = arith.mulf %414, %373 : vector<1x256xf32>
    %416 = vector.broadcast %413 : f32 to vector<1x256xf32>
    %417 = arith.mulf %416, %375 : vector<1x256xf32>
    %418 = arith.addf %415, %417 : vector<1x256xf32>
    %cst_119 = arith.constant 0.000000e+00 : f32
    %419 = vector.broadcast %cst_119 : f32 to vector<1x256xf32>
    %420 = arith.select %43, %418, %419 : vector<1x256xi1>, vector<1x256xf32>
    %421 = arith.addf %411, %420 : vector<1x256xf32>
    %c255_i32_120 = arith.constant 255 : i32
    %422 = tpu.dynamic_rotate %373 by %c255_i32_120 dim 1 : vector<1x256xf32>, i32 -> vector<1x256xf32>
    %c255_i32_121 = arith.constant 255 : i32
    %423 = tpu.dynamic_rotate %375 by %c255_i32_121 dim 1 : vector<1x256xf32>, i32 -> vector<1x256xf32>
    %c25 = arith.constant 25 : index
    %424 = memref.load %arg1[%c25] : memref<98xf32, #tpu.memory_space<smem>>
    %c74 = arith.constant 74 : index
    %425 = memref.load %arg1[%c74] : memref<98xf32, #tpu.memory_space<smem>>
    %426 = vector.broadcast %424 : f32 to vector<1x256xf32>
    %427 = arith.mulf %426, %422 : vector<1x256xf32>
    %428 = vector.broadcast %425 : f32 to vector<1x256xf32>
    %429 = arith.mulf %428, %423 : vector<1x256xf32>
    %430 = arith.addf %427, %429 : vector<1x256xf32>
    %cst_122 = arith.constant 0.000000e+00 : f32
    %431 = vector.broadcast %cst_122 : f32 to vector<1x256xf32>
    %432 = arith.select %52, %430, %431 : vector<1x256xi1>, vector<1x256xf32>
    %433 = arith.addf %421, %432 : vector<1x256xf32>
    %c254_i32_123 = arith.constant 254 : i32
    %434 = tpu.dynamic_rotate %373 by %c254_i32_123 dim 1 : vector<1x256xf32>, i32 -> vector<1x256xf32>
    %c254_i32_124 = arith.constant 254 : i32
    %435 = tpu.dynamic_rotate %375 by %c254_i32_124 dim 1 : vector<1x256xf32>, i32 -> vector<1x256xf32>
    %c26 = arith.constant 26 : index
    %436 = memref.load %arg1[%c26] : memref<98xf32, #tpu.memory_space<smem>>
    %c75 = arith.constant 75 : index
    %437 = memref.load %arg1[%c75] : memref<98xf32, #tpu.memory_space<smem>>
    %438 = vector.broadcast %436 : f32 to vector<1x256xf32>
    %439 = arith.mulf %438, %434 : vector<1x256xf32>
    %440 = vector.broadcast %437 : f32 to vector<1x256xf32>
    %441 = arith.mulf %440, %435 : vector<1x256xf32>
    %442 = arith.addf %439, %441 : vector<1x256xf32>
    %cst_125 = arith.constant 0.000000e+00 : f32
    %443 = vector.broadcast %cst_125 : f32 to vector<1x256xf32>
    %444 = arith.select %61, %442, %443 : vector<1x256xi1>, vector<1x256xf32>
    %445 = arith.addf %433, %444 : vector<1x256xf32>
    %c253_i32_126 = arith.constant 253 : i32
    %446 = tpu.dynamic_rotate %373 by %c253_i32_126 dim 1 : vector<1x256xf32>, i32 -> vector<1x256xf32>
    %c253_i32_127 = arith.constant 253 : i32
    %447 = tpu.dynamic_rotate %375 by %c253_i32_127 dim 1 : vector<1x256xf32>, i32 -> vector<1x256xf32>
    %c27 = arith.constant 27 : index
    %448 = memref.load %arg1[%c27] : memref<98xf32, #tpu.memory_space<smem>>
    %c76 = arith.constant 76 : index
    %449 = memref.load %arg1[%c76] : memref<98xf32, #tpu.memory_space<smem>>
    %450 = vector.broadcast %448 : f32 to vector<1x256xf32>
    %451 = arith.mulf %450, %446 : vector<1x256xf32>
    %452 = vector.broadcast %449 : f32 to vector<1x256xf32>
    %453 = arith.mulf %452, %447 : vector<1x256xf32>
    %454 = arith.addf %451, %453 : vector<1x256xf32>
    %cst_128 = arith.constant 0.000000e+00 : f32
    %455 = vector.broadcast %cst_128 : f32 to vector<1x256xf32>
    %456 = arith.select %70, %454, %455 : vector<1x256xi1>, vector<1x256xf32>
    %457 = arith.addf %445, %456 : vector<1x256xf32>
    %c240_i32 = arith.constant 240 : i32
    %458 = tpu.dynamic_rotate %6 by %c240_i32 dim 1 : vector<1x256xf32>, i32 -> vector<1x256xf32>
    %c240_i32_129 = arith.constant 240 : i32
    %459 = tpu.dynamic_rotate %7 by %c240_i32_129 dim 1 : vector<1x256xf32>, i32 -> vector<1x256xf32>
    %c1_i32_130 = arith.constant 1 : i32
    %460 = vector.broadcast %c1_i32_130 : i32 to vector<1x256xi32>
    %461 = arith.addi %1, %460 : vector<1x256xi32>
    %c0_i32_131 = arith.constant 0 : i32
    %462 = vector.broadcast %c0_i32_131 : i32 to vector<1x256xi32>
    %463 = arith.cmpi sge, %461, %462 : vector<1x256xi32>
    %c1_i32_132 = arith.constant 1 : i32
    %464 = vector.broadcast %c1_i32_132 : i32 to vector<1x256xi32>
    %465 = arith.addi %1, %464 : vector<1x256xi32>
    %c16_i32_133 = arith.constant 16 : i32
    %466 = vector.broadcast %c16_i32_133 : i32 to vector<1x256xi32>
    %467 = arith.cmpi slt, %465, %466 : vector<1x256xi32>
    %468 = arith.andi %463, %467 : vector<1x256xi1>
    %cst_134 = arith.constant 0.000000e+00 : f32
    %469 = vector.broadcast %cst_134 : f32 to vector<1x256xf32>
    %470 = arith.select %468, %458, %469 : vector<1x256xi1>, vector<1x256xf32>
    %cst_135 = arith.constant 0.000000e+00 : f32
    %471 = vector.broadcast %cst_135 : f32 to vector<1x256xf32>
    %472 = arith.select %468, %459, %471 : vector<1x256xi1>, vector<1x256xf32>
    %c3_i32_136 = arith.constant 3 : i32
    %473 = tpu.dynamic_rotate %470 by %c3_i32_136 dim 1 : vector<1x256xf32>, i32 -> vector<1x256xf32>
    %c3_i32_137 = arith.constant 3 : i32
    %474 = tpu.dynamic_rotate %472 by %c3_i32_137 dim 1 : vector<1x256xf32>, i32 -> vector<1x256xf32>
    %c28 = arith.constant 28 : index
    %475 = memref.load %arg1[%c28] : memref<98xf32, #tpu.memory_space<smem>>
    %c77 = arith.constant 77 : index
    %476 = memref.load %arg1[%c77] : memref<98xf32, #tpu.memory_space<smem>>
    %477 = vector.broadcast %475 : f32 to vector<1x256xf32>
    %478 = arith.mulf %477, %473 : vector<1x256xf32>
    %479 = vector.broadcast %476 : f32 to vector<1x256xf32>
    %480 = arith.mulf %479, %474 : vector<1x256xf32>
    %481 = arith.addf %478, %480 : vector<1x256xf32>
    %cst_138 = arith.constant 0.000000e+00 : f32
    %482 = vector.broadcast %cst_138 : f32 to vector<1x256xf32>
    %483 = arith.select %16, %481, %482 : vector<1x256xi1>, vector<1x256xf32>
    %484 = arith.addf %457, %483 : vector<1x256xf32>
    %c2_i32_139 = arith.constant 2 : i32
    %485 = tpu.dynamic_rotate %470 by %c2_i32_139 dim 1 : vector<1x256xf32>, i32 -> vector<1x256xf32>
    %c2_i32_140 = arith.constant 2 : i32
    %486 = tpu.dynamic_rotate %472 by %c2_i32_140 dim 1 : vector<1x256xf32>, i32 -> vector<1x256xf32>
    %c29 = arith.constant 29 : index
    %487 = memref.load %arg1[%c29] : memref<98xf32, #tpu.memory_space<smem>>
    %c78 = arith.constant 78 : index
    %488 = memref.load %arg1[%c78] : memref<98xf32, #tpu.memory_space<smem>>
    %489 = vector.broadcast %487 : f32 to vector<1x256xf32>
    %490 = arith.mulf %489, %485 : vector<1x256xf32>
    %491 = vector.broadcast %488 : f32 to vector<1x256xf32>
    %492 = arith.mulf %491, %486 : vector<1x256xf32>
    %493 = arith.addf %490, %492 : vector<1x256xf32>
    %cst_141 = arith.constant 0.000000e+00 : f32
    %494 = vector.broadcast %cst_141 : f32 to vector<1x256xf32>
    %495 = arith.select %25, %493, %494 : vector<1x256xi1>, vector<1x256xf32>
    %496 = arith.addf %484, %495 : vector<1x256xf32>
    %c1_i32_142 = arith.constant 1 : i32
    %497 = tpu.dynamic_rotate %470 by %c1_i32_142 dim 1 : vector<1x256xf32>, i32 -> vector<1x256xf32>
    %c1_i32_143 = arith.constant 1 : i32
    %498 = tpu.dynamic_rotate %472 by %c1_i32_143 dim 1 : vector<1x256xf32>, i32 -> vector<1x256xf32>
    %c30 = arith.constant 30 : index
    %499 = memref.load %arg1[%c30] : memref<98xf32, #tpu.memory_space<smem>>
    %c79 = arith.constant 79 : index
    %500 = memref.load %arg1[%c79] : memref<98xf32, #tpu.memory_space<smem>>
    %501 = vector.broadcast %499 : f32 to vector<1x256xf32>
    %502 = arith.mulf %501, %497 : vector<1x256xf32>
    %503 = vector.broadcast %500 : f32 to vector<1x256xf32>
    %504 = arith.mulf %503, %498 : vector<1x256xf32>
    %505 = arith.addf %502, %504 : vector<1x256xf32>
    %cst_144 = arith.constant 0.000000e+00 : f32
    %506 = vector.broadcast %cst_144 : f32 to vector<1x256xf32>
    %507 = arith.select %34, %505, %506 : vector<1x256xi1>, vector<1x256xf32>
    %508 = arith.addf %496, %507 : vector<1x256xf32>
    %c31 = arith.constant 31 : index
    %509 = memref.load %arg1[%c31] : memref<98xf32, #tpu.memory_space<smem>>
    %c80 = arith.constant 80 : index
    %510 = memref.load %arg1[%c80] : memref<98xf32, #tpu.memory_space<smem>>
    %511 = vector.broadcast %509 : f32 to vector<1x256xf32>
    %512 = arith.mulf %511, %470 : vector<1x256xf32>
    %513 = vector.broadcast %510 : f32 to vector<1x256xf32>
    %514 = arith.mulf %513, %472 : vector<1x256xf32>
    %515 = arith.addf %512, %514 : vector<1x256xf32>
    %cst_145 = arith.constant 0.000000e+00 : f32
    %516 = vector.broadcast %cst_145 : f32 to vector<1x256xf32>
    %517 = arith.select %43, %515, %516 : vector<1x256xi1>, vector<1x256xf32>
    %518 = arith.addf %508, %517 : vector<1x256xf32>
    %c255_i32_146 = arith.constant 255 : i32
    %519 = tpu.dynamic_rotate %470 by %c255_i32_146 dim 1 : vector<1x256xf32>, i32 -> vector<1x256xf32>
    %c255_i32_147 = arith.constant 255 : i32
    %520 = tpu.dynamic_rotate %472 by %c255_i32_147 dim 1 : vector<1x256xf32>, i32 -> vector<1x256xf32>
    %c32 = arith.constant 32 : index
    %521 = memref.load %arg1[%c32] : memref<98xf32, #tpu.memory_space<smem>>
    %c81 = arith.constant 81 : index
    %522 = memref.load %arg1[%c81] : memref<98xf32, #tpu.memory_space<smem>>
    %523 = vector.broadcast %521 : f32 to vector<1x256xf32>
    %524 = arith.mulf %523, %519 : vector<1x256xf32>
    %525 = vector.broadcast %522 : f32 to vector<1x256xf32>
    %526 = arith.mulf %525, %520 : vector<1x256xf32>
    %527 = arith.addf %524, %526 : vector<1x256xf32>
    %cst_148 = arith.constant 0.000000e+00 : f32
    %528 = vector.broadcast %cst_148 : f32 to vector<1x256xf32>
    %529 = arith.select %52, %527, %528 : vector<1x256xi1>, vector<1x256xf32>
    %530 = arith.addf %518, %529 : vector<1x256xf32>
    %c254_i32_149 = arith.constant 254 : i32
    %531 = tpu.dynamic_rotate %470 by %c254_i32_149 dim 1 : vector<1x256xf32>, i32 -> vector<1x256xf32>
    %c254_i32_150 = arith.constant 254 : i32
    %532 = tpu.dynamic_rotate %472 by %c254_i32_150 dim 1 : vector<1x256xf32>, i32 -> vector<1x256xf32>
    %c33 = arith.constant 33 : index
    %533 = memref.load %arg1[%c33] : memref<98xf32, #tpu.memory_space<smem>>
    %c82 = arith.constant 82 : index
    %534 = memref.load %arg1[%c82] : memref<98xf32, #tpu.memory_space<smem>>
    %535 = vector.broadcast %533 : f32 to vector<1x256xf32>
    %536 = arith.mulf %535, %531 : vector<1x256xf32>
    %537 = vector.broadcast %534 : f32 to vector<1x256xf32>
    %538 = arith.mulf %537, %532 : vector<1x256xf32>
    %539 = arith.addf %536, %538 : vector<1x256xf32>
    %cst_151 = arith.constant 0.000000e+00 : f32
    %540 = vector.broadcast %cst_151 : f32 to vector<1x256xf32>
    %541 = arith.select %61, %539, %540 : vector<1x256xi1>, vector<1x256xf32>
    %542 = arith.addf %530, %541 : vector<1x256xf32>
    %c253_i32_152 = arith.constant 253 : i32
    %543 = tpu.dynamic_rotate %470 by %c253_i32_152 dim 1 : vector<1x256xf32>, i32 -> vector<1x256xf32>
    %c253_i32_153 = arith.constant 253 : i32
    %544 = tpu.dynamic_rotate %472 by %c253_i32_153 dim 1 : vector<1x256xf32>, i32 -> vector<1x256xf32>
    %c34 = arith.constant 34 : index
    %545 = memref.load %arg1[%c34] : memref<98xf32, #tpu.memory_space<smem>>
    %c83 = arith.constant 83 : index
    %546 = memref.load %arg1[%c83] : memref<98xf32, #tpu.memory_space<smem>>
    %547 = vector.broadcast %545 : f32 to vector<1x256xf32>
    %548 = arith.mulf %547, %543 : vector<1x256xf32>
    %549 = vector.broadcast %546 : f32 to vector<1x256xf32>
    %550 = arith.mulf %549, %544 : vector<1x256xf32>
    %551 = arith.addf %548, %550 : vector<1x256xf32>
    %cst_154 = arith.constant 0.000000e+00 : f32
    %552 = vector.broadcast %cst_154 : f32 to vector<1x256xf32>
    %553 = arith.select %70, %551, %552 : vector<1x256xi1>, vector<1x256xf32>
    %554 = arith.addf %542, %553 : vector<1x256xf32>
    %c224_i32 = arith.constant 224 : i32
    %555 = tpu.dynamic_rotate %6 by %c224_i32 dim 1 : vector<1x256xf32>, i32 -> vector<1x256xf32>
    %c224_i32_155 = arith.constant 224 : i32
    %556 = tpu.dynamic_rotate %7 by %c224_i32_155 dim 1 : vector<1x256xf32>, i32 -> vector<1x256xf32>
    %c2_i32_156 = arith.constant 2 : i32
    %557 = vector.broadcast %c2_i32_156 : i32 to vector<1x256xi32>
    %558 = arith.addi %1, %557 : vector<1x256xi32>
    %c0_i32_157 = arith.constant 0 : i32
    %559 = vector.broadcast %c0_i32_157 : i32 to vector<1x256xi32>
    %560 = arith.cmpi sge, %558, %559 : vector<1x256xi32>
    %c2_i32_158 = arith.constant 2 : i32
    %561 = vector.broadcast %c2_i32_158 : i32 to vector<1x256xi32>
    %562 = arith.addi %1, %561 : vector<1x256xi32>
    %c16_i32_159 = arith.constant 16 : i32
    %563 = vector.broadcast %c16_i32_159 : i32 to vector<1x256xi32>
    %564 = arith.cmpi slt, %562, %563 : vector<1x256xi32>
    %565 = arith.andi %560, %564 : vector<1x256xi1>
    %cst_160 = arith.constant 0.000000e+00 : f32
    %566 = vector.broadcast %cst_160 : f32 to vector<1x256xf32>
    %567 = arith.select %565, %555, %566 : vector<1x256xi1>, vector<1x256xf32>
    %cst_161 = arith.constant 0.000000e+00 : f32
    %568 = vector.broadcast %cst_161 : f32 to vector<1x256xf32>
    %569 = arith.select %565, %556, %568 : vector<1x256xi1>, vector<1x256xf32>
    %c3_i32_162 = arith.constant 3 : i32
    %570 = tpu.dynamic_rotate %567 by %c3_i32_162 dim 1 : vector<1x256xf32>, i32 -> vector<1x256xf32>
    %c3_i32_163 = arith.constant 3 : i32
    %571 = tpu.dynamic_rotate %569 by %c3_i32_163 dim 1 : vector<1x256xf32>, i32 -> vector<1x256xf32>
    %c35 = arith.constant 35 : index
    %572 = memref.load %arg1[%c35] : memref<98xf32, #tpu.memory_space<smem>>
    %c84 = arith.constant 84 : index
    %573 = memref.load %arg1[%c84] : memref<98xf32, #tpu.memory_space<smem>>
    %574 = vector.broadcast %572 : f32 to vector<1x256xf32>
    %575 = arith.mulf %574, %570 : vector<1x256xf32>
    %576 = vector.broadcast %573 : f32 to vector<1x256xf32>
    %577 = arith.mulf %576, %571 : vector<1x256xf32>
    %578 = arith.addf %575, %577 : vector<1x256xf32>
    %cst_164 = arith.constant 0.000000e+00 : f32
    %579 = vector.broadcast %cst_164 : f32 to vector<1x256xf32>
    %580 = arith.select %16, %578, %579 : vector<1x256xi1>, vector<1x256xf32>
    %581 = arith.addf %554, %580 : vector<1x256xf32>
    %c2_i32_165 = arith.constant 2 : i32
    %582 = tpu.dynamic_rotate %567 by %c2_i32_165 dim 1 : vector<1x256xf32>, i32 -> vector<1x256xf32>
    %c2_i32_166 = arith.constant 2 : i32
    %583 = tpu.dynamic_rotate %569 by %c2_i32_166 dim 1 : vector<1x256xf32>, i32 -> vector<1x256xf32>
    %c36 = arith.constant 36 : index
    %584 = memref.load %arg1[%c36] : memref<98xf32, #tpu.memory_space<smem>>
    %c85 = arith.constant 85 : index
    %585 = memref.load %arg1[%c85] : memref<98xf32, #tpu.memory_space<smem>>
    %586 = vector.broadcast %584 : f32 to vector<1x256xf32>
    %587 = arith.mulf %586, %582 : vector<1x256xf32>
    %588 = vector.broadcast %585 : f32 to vector<1x256xf32>
    %589 = arith.mulf %588, %583 : vector<1x256xf32>
    %590 = arith.addf %587, %589 : vector<1x256xf32>
    %cst_167 = arith.constant 0.000000e+00 : f32
    %591 = vector.broadcast %cst_167 : f32 to vector<1x256xf32>
    %592 = arith.select %25, %590, %591 : vector<1x256xi1>, vector<1x256xf32>
    %593 = arith.addf %581, %592 : vector<1x256xf32>
    %c1_i32_168 = arith.constant 1 : i32
    %594 = tpu.dynamic_rotate %567 by %c1_i32_168 dim 1 : vector<1x256xf32>, i32 -> vector<1x256xf32>
    %c1_i32_169 = arith.constant 1 : i32
    %595 = tpu.dynamic_rotate %569 by %c1_i32_169 dim 1 : vector<1x256xf32>, i32 -> vector<1x256xf32>
    %c37 = arith.constant 37 : index
    %596 = memref.load %arg1[%c37] : memref<98xf32, #tpu.memory_space<smem>>
    %c86 = arith.constant 86 : index
    %597 = memref.load %arg1[%c86] : memref<98xf32, #tpu.memory_space<smem>>
    %598 = vector.broadcast %596 : f32 to vector<1x256xf32>
    %599 = arith.mulf %598, %594 : vector<1x256xf32>
    %600 = vector.broadcast %597 : f32 to vector<1x256xf32>
    %601 = arith.mulf %600, %595 : vector<1x256xf32>
    %602 = arith.addf %599, %601 : vector<1x256xf32>
    %cst_170 = arith.constant 0.000000e+00 : f32
    %603 = vector.broadcast %cst_170 : f32 to vector<1x256xf32>
    %604 = arith.select %34, %602, %603 : vector<1x256xi1>, vector<1x256xf32>
    %605 = arith.addf %593, %604 : vector<1x256xf32>
    %c38 = arith.constant 38 : index
    %606 = memref.load %arg1[%c38] : memref<98xf32, #tpu.memory_space<smem>>
    %c87 = arith.constant 87 : index
    %607 = memref.load %arg1[%c87] : memref<98xf32, #tpu.memory_space<smem>>
    %608 = vector.broadcast %606 : f32 to vector<1x256xf32>
    %609 = arith.mulf %608, %567 : vector<1x256xf32>
    %610 = vector.broadcast %607 : f32 to vector<1x256xf32>
    %611 = arith.mulf %610, %569 : vector<1x256xf32>
    %612 = arith.addf %609, %611 : vector<1x256xf32>
    %cst_171 = arith.constant 0.000000e+00 : f32
    %613 = vector.broadcast %cst_171 : f32 to vector<1x256xf32>
    %614 = arith.select %43, %612, %613 : vector<1x256xi1>, vector<1x256xf32>
    %615 = arith.addf %605, %614 : vector<1x256xf32>
    %c255_i32_172 = arith.constant 255 : i32
    %616 = tpu.dynamic_rotate %567 by %c255_i32_172 dim 1 : vector<1x256xf32>, i32 -> vector<1x256xf32>
    %c255_i32_173 = arith.constant 255 : i32
    %617 = tpu.dynamic_rotate %569 by %c255_i32_173 dim 1 : vector<1x256xf32>, i32 -> vector<1x256xf32>
    %c39 = arith.constant 39 : index
    %618 = memref.load %arg1[%c39] : memref<98xf32, #tpu.memory_space<smem>>
    %c88 = arith.constant 88 : index
    %619 = memref.load %arg1[%c88] : memref<98xf32, #tpu.memory_space<smem>>
    %620 = vector.broadcast %618 : f32 to vector<1x256xf32>
    %621 = arith.mulf %620, %616 : vector<1x256xf32>
    %622 = vector.broadcast %619 : f32 to vector<1x256xf32>
    %623 = arith.mulf %622, %617 : vector<1x256xf32>
    %624 = arith.addf %621, %623 : vector<1x256xf32>
    %cst_174 = arith.constant 0.000000e+00 : f32
    %625 = vector.broadcast %cst_174 : f32 to vector<1x256xf32>
    %626 = arith.select %52, %624, %625 : vector<1x256xi1>, vector<1x256xf32>
    %627 = arith.addf %615, %626 : vector<1x256xf32>
    %c254_i32_175 = arith.constant 254 : i32
    %628 = tpu.dynamic_rotate %567 by %c254_i32_175 dim 1 : vector<1x256xf32>, i32 -> vector<1x256xf32>
    %c254_i32_176 = arith.constant 254 : i32
    %629 = tpu.dynamic_rotate %569 by %c254_i32_176 dim 1 : vector<1x256xf32>, i32 -> vector<1x256xf32>
    %c40 = arith.constant 40 : index
    %630 = memref.load %arg1[%c40] : memref<98xf32, #tpu.memory_space<smem>>
    %c89 = arith.constant 89 : index
    %631 = memref.load %arg1[%c89] : memref<98xf32, #tpu.memory_space<smem>>
    %632 = vector.broadcast %630 : f32 to vector<1x256xf32>
    %633 = arith.mulf %632, %628 : vector<1x256xf32>
    %634 = vector.broadcast %631 : f32 to vector<1x256xf32>
    %635 = arith.mulf %634, %629 : vector<1x256xf32>
    %636 = arith.addf %633, %635 : vector<1x256xf32>
    %cst_177 = arith.constant 0.000000e+00 : f32
    %637 = vector.broadcast %cst_177 : f32 to vector<1x256xf32>
    %638 = arith.select %61, %636, %637 : vector<1x256xi1>, vector<1x256xf32>
    %639 = arith.addf %627, %638 : vector<1x256xf32>
    %c253_i32_178 = arith.constant 253 : i32
    %640 = tpu.dynamic_rotate %567 by %c253_i32_178 dim 1 : vector<1x256xf32>, i32 -> vector<1x256xf32>
    %c253_i32_179 = arith.constant 253 : i32
    %641 = tpu.dynamic_rotate %569 by %c253_i32_179 dim 1 : vector<1x256xf32>, i32 -> vector<1x256xf32>
    %c41 = arith.constant 41 : index
    %642 = memref.load %arg1[%c41] : memref<98xf32, #tpu.memory_space<smem>>
    %c90 = arith.constant 90 : index
    %643 = memref.load %arg1[%c90] : memref<98xf32, #tpu.memory_space<smem>>
    %644 = vector.broadcast %642 : f32 to vector<1x256xf32>
    %645 = arith.mulf %644, %640 : vector<1x256xf32>
    %646 = vector.broadcast %643 : f32 to vector<1x256xf32>
    %647 = arith.mulf %646, %641 : vector<1x256xf32>
    %648 = arith.addf %645, %647 : vector<1x256xf32>
    %cst_180 = arith.constant 0.000000e+00 : f32
    %649 = vector.broadcast %cst_180 : f32 to vector<1x256xf32>
    %650 = arith.select %70, %648, %649 : vector<1x256xi1>, vector<1x256xf32>
    %651 = arith.addf %639, %650 : vector<1x256xf32>
    %c208_i32 = arith.constant 208 : i32
    %652 = tpu.dynamic_rotate %6 by %c208_i32 dim 1 : vector<1x256xf32>, i32 -> vector<1x256xf32>
    %c208_i32_181 = arith.constant 208 : i32
    %653 = tpu.dynamic_rotate %7 by %c208_i32_181 dim 1 : vector<1x256xf32>, i32 -> vector<1x256xf32>
    %c3_i32_182 = arith.constant 3 : i32
    %654 = vector.broadcast %c3_i32_182 : i32 to vector<1x256xi32>
    %655 = arith.addi %1, %654 : vector<1x256xi32>
    %c0_i32_183 = arith.constant 0 : i32
    %656 = vector.broadcast %c0_i32_183 : i32 to vector<1x256xi32>
    %657 = arith.cmpi sge, %655, %656 : vector<1x256xi32>
    %c3_i32_184 = arith.constant 3 : i32
    %658 = vector.broadcast %c3_i32_184 : i32 to vector<1x256xi32>
    %659 = arith.addi %1, %658 : vector<1x256xi32>
    %c16_i32_185 = arith.constant 16 : i32
    %660 = vector.broadcast %c16_i32_185 : i32 to vector<1x256xi32>
    %661 = arith.cmpi slt, %659, %660 : vector<1x256xi32>
    %662 = arith.andi %657, %661 : vector<1x256xi1>
    %cst_186 = arith.constant 0.000000e+00 : f32
    %663 = vector.broadcast %cst_186 : f32 to vector<1x256xf32>
    %664 = arith.select %662, %652, %663 : vector<1x256xi1>, vector<1x256xf32>
    %cst_187 = arith.constant 0.000000e+00 : f32
    %665 = vector.broadcast %cst_187 : f32 to vector<1x256xf32>
    %666 = arith.select %662, %653, %665 : vector<1x256xi1>, vector<1x256xf32>
    %c3_i32_188 = arith.constant 3 : i32
    %667 = tpu.dynamic_rotate %664 by %c3_i32_188 dim 1 : vector<1x256xf32>, i32 -> vector<1x256xf32>
    %c3_i32_189 = arith.constant 3 : i32
    %668 = tpu.dynamic_rotate %666 by %c3_i32_189 dim 1 : vector<1x256xf32>, i32 -> vector<1x256xf32>
    %c42 = arith.constant 42 : index
    %669 = memref.load %arg1[%c42] : memref<98xf32, #tpu.memory_space<smem>>
    %c91 = arith.constant 91 : index
    %670 = memref.load %arg1[%c91] : memref<98xf32, #tpu.memory_space<smem>>
    %671 = vector.broadcast %669 : f32 to vector<1x256xf32>
    %672 = arith.mulf %671, %667 : vector<1x256xf32>
    %673 = vector.broadcast %670 : f32 to vector<1x256xf32>
    %674 = arith.mulf %673, %668 : vector<1x256xf32>
    %675 = arith.addf %672, %674 : vector<1x256xf32>
    %cst_190 = arith.constant 0.000000e+00 : f32
    %676 = vector.broadcast %cst_190 : f32 to vector<1x256xf32>
    %677 = arith.select %16, %675, %676 : vector<1x256xi1>, vector<1x256xf32>
    %678 = arith.addf %651, %677 : vector<1x256xf32>
    %c2_i32_191 = arith.constant 2 : i32
    %679 = tpu.dynamic_rotate %664 by %c2_i32_191 dim 1 : vector<1x256xf32>, i32 -> vector<1x256xf32>
    %c2_i32_192 = arith.constant 2 : i32
    %680 = tpu.dynamic_rotate %666 by %c2_i32_192 dim 1 : vector<1x256xf32>, i32 -> vector<1x256xf32>
    %c43 = arith.constant 43 : index
    %681 = memref.load %arg1[%c43] : memref<98xf32, #tpu.memory_space<smem>>
    %c92 = arith.constant 92 : index
    %682 = memref.load %arg1[%c92] : memref<98xf32, #tpu.memory_space<smem>>
    %683 = vector.broadcast %681 : f32 to vector<1x256xf32>
    %684 = arith.mulf %683, %679 : vector<1x256xf32>
    %685 = vector.broadcast %682 : f32 to vector<1x256xf32>
    %686 = arith.mulf %685, %680 : vector<1x256xf32>
    %687 = arith.addf %684, %686 : vector<1x256xf32>
    %cst_193 = arith.constant 0.000000e+00 : f32
    %688 = vector.broadcast %cst_193 : f32 to vector<1x256xf32>
    %689 = arith.select %25, %687, %688 : vector<1x256xi1>, vector<1x256xf32>
    %690 = arith.addf %678, %689 : vector<1x256xf32>
    %c1_i32_194 = arith.constant 1 : i32
    %691 = tpu.dynamic_rotate %664 by %c1_i32_194 dim 1 : vector<1x256xf32>, i32 -> vector<1x256xf32>
    %c1_i32_195 = arith.constant 1 : i32
    %692 = tpu.dynamic_rotate %666 by %c1_i32_195 dim 1 : vector<1x256xf32>, i32 -> vector<1x256xf32>
    %c44 = arith.constant 44 : index
    %693 = memref.load %arg1[%c44] : memref<98xf32, #tpu.memory_space<smem>>
    %c93 = arith.constant 93 : index
    %694 = memref.load %arg1[%c93] : memref<98xf32, #tpu.memory_space<smem>>
    %695 = vector.broadcast %693 : f32 to vector<1x256xf32>
    %696 = arith.mulf %695, %691 : vector<1x256xf32>
    %697 = vector.broadcast %694 : f32 to vector<1x256xf32>
    %698 = arith.mulf %697, %692 : vector<1x256xf32>
    %699 = arith.addf %696, %698 : vector<1x256xf32>
    %cst_196 = arith.constant 0.000000e+00 : f32
    %700 = vector.broadcast %cst_196 : f32 to vector<1x256xf32>
    %701 = arith.select %34, %699, %700 : vector<1x256xi1>, vector<1x256xf32>
    %702 = arith.addf %690, %701 : vector<1x256xf32>
    %c45 = arith.constant 45 : index
    %703 = memref.load %arg1[%c45] : memref<98xf32, #tpu.memory_space<smem>>
    %c94 = arith.constant 94 : index
    %704 = memref.load %arg1[%c94] : memref<98xf32, #tpu.memory_space<smem>>
    %705 = vector.broadcast %703 : f32 to vector<1x256xf32>
    %706 = arith.mulf %705, %664 : vector<1x256xf32>
    %707 = vector.broadcast %704 : f32 to vector<1x256xf32>
    %708 = arith.mulf %707, %666 : vector<1x256xf32>
    %709 = arith.addf %706, %708 : vector<1x256xf32>
    %cst_197 = arith.constant 0.000000e+00 : f32
    %710 = vector.broadcast %cst_197 : f32 to vector<1x256xf32>
    %711 = arith.select %43, %709, %710 : vector<1x256xi1>, vector<1x256xf32>
    %712 = arith.addf %702, %711 : vector<1x256xf32>
    %c255_i32_198 = arith.constant 255 : i32
    %713 = tpu.dynamic_rotate %664 by %c255_i32_198 dim 1 : vector<1x256xf32>, i32 -> vector<1x256xf32>
    %c255_i32_199 = arith.constant 255 : i32
    %714 = tpu.dynamic_rotate %666 by %c255_i32_199 dim 1 : vector<1x256xf32>, i32 -> vector<1x256xf32>
    %c46 = arith.constant 46 : index
    %715 = memref.load %arg1[%c46] : memref<98xf32, #tpu.memory_space<smem>>
    %c95 = arith.constant 95 : index
    %716 = memref.load %arg1[%c95] : memref<98xf32, #tpu.memory_space<smem>>
    %717 = vector.broadcast %715 : f32 to vector<1x256xf32>
    %718 = arith.mulf %717, %713 : vector<1x256xf32>
    %719 = vector.broadcast %716 : f32 to vector<1x256xf32>
    %720 = arith.mulf %719, %714 : vector<1x256xf32>
    %721 = arith.addf %718, %720 : vector<1x256xf32>
    %cst_200 = arith.constant 0.000000e+00 : f32
    %722 = vector.broadcast %cst_200 : f32 to vector<1x256xf32>
    %723 = arith.select %52, %721, %722 : vector<1x256xi1>, vector<1x256xf32>
    %724 = arith.addf %712, %723 : vector<1x256xf32>
    %c254_i32_201 = arith.constant 254 : i32
    %725 = tpu.dynamic_rotate %664 by %c254_i32_201 dim 1 : vector<1x256xf32>, i32 -> vector<1x256xf32>
    %c254_i32_202 = arith.constant 254 : i32
    %726 = tpu.dynamic_rotate %666 by %c254_i32_202 dim 1 : vector<1x256xf32>, i32 -> vector<1x256xf32>
    %c47 = arith.constant 47 : index
    %727 = memref.load %arg1[%c47] : memref<98xf32, #tpu.memory_space<smem>>
    %c96 = arith.constant 96 : index
    %728 = memref.load %arg1[%c96] : memref<98xf32, #tpu.memory_space<smem>>
    %729 = vector.broadcast %727 : f32 to vector<1x256xf32>
    %730 = arith.mulf %729, %725 : vector<1x256xf32>
    %731 = vector.broadcast %728 : f32 to vector<1x256xf32>
    %732 = arith.mulf %731, %726 : vector<1x256xf32>
    %733 = arith.addf %730, %732 : vector<1x256xf32>
    %cst_203 = arith.constant 0.000000e+00 : f32
    %734 = vector.broadcast %cst_203 : f32 to vector<1x256xf32>
    %735 = arith.select %61, %733, %734 : vector<1x256xi1>, vector<1x256xf32>
    %736 = arith.addf %724, %735 : vector<1x256xf32>
    %c253_i32_204 = arith.constant 253 : i32
    %737 = tpu.dynamic_rotate %664 by %c253_i32_204 dim 1 : vector<1x256xf32>, i32 -> vector<1x256xf32>
    %c253_i32_205 = arith.constant 253 : i32
    %738 = tpu.dynamic_rotate %666 by %c253_i32_205 dim 1 : vector<1x256xf32>, i32 -> vector<1x256xf32>
    %c48 = arith.constant 48 : index
    %739 = memref.load %arg1[%c48] : memref<98xf32, #tpu.memory_space<smem>>
    %c97 = arith.constant 97 : index
    %740 = memref.load %arg1[%c97] : memref<98xf32, #tpu.memory_space<smem>>
    %741 = vector.broadcast %739 : f32 to vector<1x256xf32>
    %742 = arith.mulf %741, %737 : vector<1x256xf32>
    %743 = vector.broadcast %740 : f32 to vector<1x256xf32>
    %744 = arith.mulf %743, %738 : vector<1x256xf32>
    %745 = arith.addf %742, %744 : vector<1x256xf32>
    %cst_206 = arith.constant 0.000000e+00 : f32
    %746 = vector.broadcast %cst_206 : f32 to vector<1x256xf32>
    %747 = arith.select %70, %745, %746 : vector<1x256xi1>, vector<1x256xf32>
    %748 = arith.addf %736, %747 : vector<1x256xf32>
    %749 = arith.negf %748 : vector<1x256xf32>
    %750 = math.exp %749 : vector<1x256xf32>
    %cst_207 = arith.constant 1.000000e+00 : f32
    %751 = vector.broadcast %cst_207 : f32 to vector<1x256xf32>
    %752 = arith.addf %751, %750 : vector<1x256xf32>
    %753 = arith.divf %751, %752 : vector<1x256xf32>
    %754 = vector.shape_cast %753 : vector<1x256xf32> to vector<1x1x256xf32>
    %755 = vector.broadcast %754 : vector<1x1x256xf32> to vector<1x4x256xf32>
    %756 = arith.mulf %3, %755 : vector<1x4x256xf32>
    %c0_208 = arith.constant 0 : index
    %c0_209 = arith.constant 0 : index
    %c0_210 = arith.constant 0 : index
    %757 = vector.load %arg4[%c0_208, %c0_209, %c0_210] : memref<1x4x256xf32, #tpu.memory_space<vmem>>, vector<1x4x256xf32>
    tpu.vector_store %arg4[%c0_208, %c0_209, %c0_210], %756 {strides = array<i32>} : memref<1x4x256xf32, #tpu.memory_space<vmem>>, vector<1x4x256xf32>,
    return
  }
  func.func @transform_0(%arg0: i32) -> i32 {
    %c0_i32 = arith.constant 0 : i32
    %c0_i32_0 = arith.constant 0 : i32
    return %c0_i32 : i32
  }
  func.func @transform_1(%arg0: i32) -> (i32, i32) {
    %c0_i32 = arith.constant 0 : i32
    %c0_i32_0 = arith.constant 0 : i32
    %c0_i32_1 = arith.constant 0 : i32
    return %c0_i32, %c0_i32_0 : i32, i32
  }
  func.func @transform_2(%arg0: i32) -> (i32, i32, i32) {
    %c0_i32 = arith.constant 0 : i32
    %c0_i32_0 = arith.constant 0 : i32
    %c0_i32_1 = arith.constant 0 : i32
    return %arg0, %c0_i32, %c0_i32_0 : i32, i32, i32
  }
  func.func @transform_3(%arg0: i32) -> (i32, i32, i32) {
    %c0_i32 = arith.constant 0 : i32
    %c0_i32_0 = arith.constant 0 : i32
    %c0_i32_1 = arith.constant 0 : i32
    return %arg0, %c0_i32, %c0_i32_0 : i32, i32, i32
  }
}

</mosaic_0001>

<llo_original>
// kernel: tpu_custom_call.1
$region0: #{tpu_custom_call.1}
  #allocation0 [shape = 'u32[]', space=smem, size = 0x4, offset = 0x4, fixed_abs, tag = 'smem constant byte address 0x4 - core index']
  #allocation1 [shape = 'u32[144,128]{1,0:T(1,128)}', space=vmem, size = 0x12000, scoped, tag = 'internal scratch']
  %s0 = inlined_call_operand.hbm [shape: f32[98], index: 0, kind: input, shape index: {}]
  %s1 = inlined_call_operand.hbm [shape: s32[2,256], index: 1, kind: input, shape index: {}]
  %s2 = inlined_call_operand.hbm [shape: f32[2,4,256], index: 2, kind: input, shape index: {}]
  %s3 = inlined_call_operand.hbm [shape: f32[2,4,256], index: 3, kind: output, shape index: {}]
  %s4 = sld [smem:[#allocation0]]
  $region57: #{tpu_custom_call.1} parent=0
    _
  %s6 = ssub.s32 1, %s4
  %s7 = scalar_select 0, %s6, %s4
  $region1: #{tpu_custom_call.1} parent=0
    #allocation2 [shape = 'u8[512]{0}', space=smem, size = 0x200, scoped, tag = 'input window, operand 0, single buffered']
    #allocation3 [shape = 's32[2]{0}', space=sflag, size = 0x8, scoped, tag = 'scoped memory for tpu_custom_call.1']
    #allocation4 [shape = 's32[2]{0}', space=sflag, size = 0x8, scoped, tag = 'scoped memory for tpu_custom_call.1']
    #allocation5 [shape = 's32[2]{0}', space=sflag, size = 0x8, scoped, tag = 'scoped memory for tpu_custom_call.1']
    #allocation6 [shape = 'u8[2048]{0}', space=vmem, size = 0x800, scoped, tag = 'input window, operand 1, single buffered']
    #allocation7 [shape = 'u8[8192]{0}', space=vmem, size = 0x2000, scoped, tag = 'input window, operand 2']
    #allocation8 [shape = 's32[2]{0}', space=sflag, size = 0x8, scoped, tag = 'scoped memory for tpu_custom_call.1']
    #allocation9 [shape = 'u8[8192]{0}', space=vmem, size = 0x2000, scoped, tag = 'output window, operand 0']
    %8 = vsyncpa [#allocation5], 0
    %9 = vsyncpa [#allocation3], 0
    %10 = vsyncpa [#allocation8], 0
    %s11 = scalar_lea.sflag [#allocation8], 1
    %12 = vsyncpa %s11, 0
    %13 = vsyncpa [#allocation4], 0
    %s14 = scalar_lea.sflag [#allocation4], 1
    %15 = vsyncpa %s14, 0
    loop: start=0, step=1, limit=4
    $region2: #{tpu_custom_call.1} parent=1 // loop_pre_header
      _
    $region3: #{tpu_custom_call.1} parent=1 // loop_header
      %s17 = sphi 0, %s21
      %p18 = scmp.ge.s32.totalorder %s17, 4
      %s25 = sphi 0, %s25
      %s27 = sphi 0, %s25
      %s28 = sphi 0, %s27
      %s42 = sphi 0, %s28
      %s46 = sphi 0, %s46
      %s48 = sphi 0, %s46
      %s49 = sphi 0, %s48
      %s63 = sphi 0, %s49
      %s69 = sphi 0, %s71
      %s72 = sphi 0, %s69
      %s73 = sphi 0, %s72
      %s89 = sphi 0, %s73
      %s95 = sphi 0, %s97
      %s98 = sphi 0, %s95
      %s99 = sphi 0, %s98
      %s115 = sphi 0, %s99
    $region4: #{tpu_custom_call.1} parent=1 // loop_header_branch
      %20 = sbr.rel (%p18) target = $region8
    $region5: #{tpu_custom_call.1} parent=1 // loop_body
      %s22 = ssub.s32 %s17, 1
      %s23 = ssub.s32 %s17, 2
      %s24 = sadd.s32 %s17, 1
      %s26 = sadd.s32 %s25, 1
      %p29 = scmp.eq.s32.totalorder %s17, 1
      %p30 = scmp.ne.s32.totalorder %s25, %s27
      %p31 = scmp.eq.s32.totalorder %s17, 0
      %p32 = por %p30, %p31
      %p33 = scmp.ne.s32.totalorder %s25, %s27
      %p34 = scmp.eq.s32.totalorder %s22, 1
      %p35 = por %p33, %p34
      %p36 = scmp.ne.s32.totalorder %s27, %s28
      %p37 = scmp.eq.s32.totalorder %s22, 0
      %p38 = por %p36, %p37
      %p39 = scmp.ne.s32.totalorder %s27, %s28
      %p40 = scmp.eq.s32.totalorder %s23, 1
      %p41 = por %p39, %p40
      %p43 = scmp.ne.s32.totalorder %s28, %s42
      %p44 = scmp.eq.s32.totalorder %s23, 0
      %p45 = por %p43, %p44
      %s47 = sadd.s32 %s46, 1
      %p50 = scmp.eq.s32.totalorder %s17, 1
      %p51 = scmp.ne.s32.totalorder %s46, %s48
      %p52 = scmp.eq.s32.totalorder %s17, 0
      %p53 = por %p51, %p52
      %p54 = scmp.ne.s32.totalorder %s46, %s48
      %p55 = scmp.eq.s32.totalorder %s22, 1
      %p56 = por %p54, %p55
      %p57 = scmp.ne.s32.totalorder %s48, %s49
      %p58 = scmp.eq.s32.totalorder %s22, 0
      %p59 = por %p57, %p58
      %p60 = scmp.ne.s32.totalorder %s48, %s49
      %p61 = scmp.eq.s32.totalorder %s23, 1
      %p62 = por %p60, %p61
      %p64 = scmp.ne.s32.totalorder %s49, %s63
      %p65 = scmp.eq.s32.totalorder %s23, 0
      %p66 = por %p64, %p65
      %s67 = ssub.s32 %s17, %s24
      %p68 = scmp.eq.s32.totalorder %s67, 0
      %s70 = sadd.s32 %s69, 1
      %s71 = scalar_select %p68, %s69, %s70
      %p74 = pneg %p68
      %p75 = scmp.eq.s32.totalorder %s17, 1
      %p76 = por %p74, %p75
      %p77 = scmp.ne.s32.totalorder %s69, %s72
      %p78 = scmp.eq.s32.totalorder %s17, 0
      %p79 = por %p77, %p78
      %p80 = scmp.ne.s32.totalorder %s69, %s72
      %p81 = scmp.eq.s32.totalorder %s22, 1
      %p82 = por %p80, %p81
      %p83 = scmp.ne.s32.totalorder %s72, %s73
      %p84 = scmp.eq.s32.totalorder %s22, 0
      %p85 = por %p83, %p84
      %p86 = scmp.ne.s32.totalorder %s72, %s73
      %p87 = scmp.eq.s32.totalorder %s23, 1
      %p88 = por %p86, %p87
      %p90 = scmp.ne.s32.totalorder %s73, %s89
      %p91 = scmp.eq.s32.totalorder %s23, 0
      %p92 = por %p90, %p91
      %s93 = ssub.s32 %s17, %s24
      %p94 = scmp.eq.s32.totalorder %s93, 0
      %s96 = sadd.s32 %s95, 1
      %s97 = scalar_select %p94, %s95, %s96
      %p100 = pneg %p94
      %p101 = scmp.eq.s32.totalorder %s17, 1
      %p102 = por %p100, %p101
      %p103 = scmp.ne.s32.totalorder %s95, %s98
      %p104 = scmp.eq.s32.totalorder %s17, 0
      %p105 = por %p103, %p104
      %p106 = scmp.ne.s32.totalorder %s95, %s98
      %p107 = scmp.eq.s32.totalorder %s22, 1
      %p108 = por %p106, %p107
      %p109 = scmp.ne.s32.totalorder %s98, %s99
      %p110 = scmp.eq.s32.totalorder %s22, 0
      %p111 = por %p109, %p110
      %p112 = scmp.ne.s32.totalorder %s98, %s99
      %p113 = scmp.eq.s32.totalorder %s23, 1
      %p114 = por %p112, %p113
      %p116 = scmp.ne.s32.totalorder %s99, %s115
      %p117 = scmp.eq.s32.totalorder %s23, 0
      %p118 = por %p116, %p117
      %p119 = scmp.le.s32.totalorder 1, %s17
      %p120 = scmp.lt.s32.totalorder %s17, 3
      %p121 = pnand %p119, %p120
      %p122 = pneg %p121
      // Predicated region
      $region9: #{tpu_custom_call.1} parent=5 // pred_check
        _
      $region10: #{tpu_custom_call.1} parent=5 // pred_check_branch
        %124 = sbr.rel (%p121) target = $region12
      $region11: #{tpu_custom_call.1} parent=5 // pred_region
        %s125 = ssub.s32 %s17, 1
        // Predicated region
        $region13: #{tpu_custom_call.1} parent=11 // pred_check
          %p126 = pneg %p38
        $region14: #{tpu_custom_call.1} parent=11 // pred_check_branch
          %128 = sbr.rel (%p126) target = $region16
        $region15: #{tpu_custom_call.1} parent=11 // pred_region
          %s130 = ssub.s32 16, 16
          %131 = vsyncadd [#allocation5], %s130
          %134 = dma.hbm_to_smem %s0, 16, [#allocation2], [#allocation5]
        $region16: #{tpu_custom_call.1} parent=11 // pred_fallthru
          _
        // Predicated region
        $region17: #{tpu_custom_call.1} parent=11 // pred_check
          %p135 = pneg %p59
        $region18: #{tpu_custom_call.1} parent=11 // pred_check_branch
          %137 = sbr.rel (%p135) target = $region20
        $region19: #{tpu_custom_call.1} parent=11 // pred_region
          %s139 = ssub.s32 64, 64
          %140 = vsyncadd [#allocation3], %s139
          %s142 = sshll.u32 [#allocation6], 4
          %s143 = int_to_ptr.vmem [resolvable:$true] %s142
          %145 = dma.hbm_to_vmem [thread:$0]  %s1, 64, %s143, [#allocation3]
        $region20: #{tpu_custom_call.1} parent=11 // pred_fallthru
          _
      $region12: #{tpu_custom_call.1} parent=5 // pred_fallthru
        _
      %p146 = scmp.lt.s32.totalorder %s17, 2
      // Predicated region
      $region21: #{tpu_custom_call.1} parent=5 // pred_check
        %p147 = pneg %p146
      $region22: #{tpu_custom_call.1} parent=5 // pred_check_branch
        %149 = sbr.rel (%p147) target = $region24
      $region23: #{tpu_custom_call.1} parent=5 // pred_region
        // Predicated region
        $region25: #{tpu_custom_call.1} parent=23 // pred_check
          %p150 = pneg %p79
        $region26: #{tpu_custom_call.1} parent=23 // pred_check_branch
          %152 = sbr.rel (%p150) target = $region28
        $region27: #{tpu_custom_call.1} parent=23 // pred_region
          %s153 = sand.u32 %s69, 1
          %s154 = scalar_lea.sflag [#allocation8], %s153
          %s155 = sand.u32 %s69, 1
          %s156 = smul.addr %s155, 8
          %s157 = scalar_lea.vmem [#allocation7], %s156
          %s159 = ssub.s32 128, 128
          %160 = vsyncadd %s154, %s159
          %s161 = smul.addr %s17, 2
          %s162 = smul.addr %s161, 64
          %s163 = scalar_lea.hbm %s2, %s162
          %s165 = sshll.u32 %s157, 4
          %s166 = int_to_ptr.vmem [resolvable:$true] %s165
          %168 = dma.hbm_to_vmem [thread:$0]  %s163, 128, %s166, %s154
        $region28: #{tpu_custom_call.1} parent=23 // pred_fallthru
          _
      $region24: #{tpu_custom_call.1} parent=5 // pred_fallthru
        _
      %p169 = scmp.le.s32.totalorder 1, %s17
      %p170 = scmp.lt.s32.totalorder %s17, 3
      %p171 = pnand %p169, %p170
      %p172 = pneg %p171
      // Predicated region
      $region29: #{tpu_custom_call.1} parent=5 // pred_check
        _
      $region30: #{tpu_custom_call.1} parent=5 // pred_check_branch
        %174 = sbr.rel (%p171) target = $region32
      $region31: #{tpu_custom_call.1} parent=5 // pred_region
        %s175 = ssub.s32 %s17, 1
        // Predicated region
        $region33: #{tpu_custom_call.1} parent=31 // pred_check
          %p176 = pneg %p38
        $region34: #{tpu_custom_call.1} parent=31 // pred_check_branch
          %178 = sbr.rel (%p176) target = $region36
        $region35: #{tpu_custom_call.1} parent=31 // pred_region
          %179 = dma.done [#allocation5], 16
        $region36: #{tpu_custom_call.1} parent=31 // pred_fallthru
          _
        // Predicated region
        $region37: #{tpu_custom_call.1} parent=31 // pred_check
          %p180 = pneg %p59
        $region38: #{tpu_custom_call.1} parent=31 // pred_check_branch
          %182 = sbr.rel (%p180) target = $region40
        $region39: #{tpu_custom_call.1} parent=31 // pred_region
          %183 = dma.done [#allocation3], 64
        $region40: #{tpu_custom_call.1} parent=31 // pred_fallthru
          _
        %s184 = sand.u32 %s72, 1
        %s185 = scalar_lea.sflag [#allocation8], %s184
        %s186 = sand.u32 %s72, 1
        %s187 = smul.addr %s186, 8
        %s188 = scalar_lea.vmem [#allocation7], %s187
        // Predicated region
        $region41: #{tpu_custom_call.1} parent=31 // pred_check
          %p189 = pneg %p85
        $region42: #{tpu_custom_call.1} parent=31 // pred_check_branch
          %191 = sbr.rel (%p189) target = $region44
        $region43: #{tpu_custom_call.1} parent=31 // pred_region
          %192 = dma.done %s185, 128
        $region44: #{tpu_custom_call.1} parent=31 // pred_fallthru
          _
        %193 = sfence
        %p194 = pneg %p38
        %p195 = pneg %p35
        %p196 = pneg %p59
        %p197 = pneg %p56
        %s198 = sand.u32 %s72, 1
        %s199 = scalar_lea.sflag [#allocation8], %s198
        %s200 = sand.u32 %s72, 1
        %s201 = smul.addr %s200, 8
        %s202 = scalar_lea.vmem [#allocation7], %s201
        %p203 = pneg %p85
        %p204 = pneg %p82
        %p205 = pneg %p111
        %p206 = pneg %p108
        %s207 = sand.u32 %s98, 1
        %s208 = scalar_lea.sflag [#allocation4], %s207
        %s209 = sand.u32 %s98, 1
        %s210 = smul.addr %s209, 8
        %s211 = scalar_lea.vmem [#allocation9], %s210
        %v212 = vld [vmem:[#allocation6] sm:$0xf]
        %v213 = vld [vmem:[%s188] sm:$0xff]
        %v215 = vcombine.high %v213, %v213
        %vm217 = vcmask 1043456
        %v218 = vsel %vm217, %v213, 0.0
        %v219 = vrot.slane %v218, 4
        %v220 = vadd.f32 %v218, %v219
        %v221 = vrot.slane %v220, 2
        %v222 = vadd.f32 %v220, %v221
        %v223 = vrot.slane %v222, 1
        %v224 = vadd.f32 %v222, %v223
        %v225 = vsel %vm217, %v215, 0.0
        %v226 = vrot.slane %v225, 4
        %v227 = vadd.f32 %v225, %v226
        %v228 = vrot.slane %v227, 2
        %v229 = vadd.f32 %v227, %v228
        %v230 = vrot.slane %v229, 1
        %v231 = vadd.f32 %v229, %v230
        %v232 = vrcp.pop 4.0
        %v233 = vmul.f32 %v224, %v232
        %v234 = vmul.f32 %v231, %v232
        %v235 = vsel %vm217, %v213, -inf
        %v236 = vrot.slane %v235, 4
        %v237 = vmax.f32 %v235, %v236
        %v238 = vrot.slane %v237, 2
        %v239 = vmax.f32 %v237, %v238
        %v240 = vrot.slane %v239, 1
        %v241 = vmax.f32 %v239, %v240
        %v242 = vsel %vm217, %v215, -inf
        %v243 = vrot.slane %v242, 4
        %v244 = vmax.f32 %v242, %v243
        %v245 = vrot.slane %v244, 2
        %v246 = vmax.f32 %v244, %v245
        %v247 = vrot.slane %v246, 1
        %v248 = vmax.f32 %v246, %v247
        %v249 = vadd.s32 %v212, 4294967293
        %vm250 = vcmp.ge.s32.totalorder %v249, 0
        %vm251 = vcmp.lt.s32.totalorder %v249, 16
        %vm252 = vmand %vm250, %vm251
        %v253 = vadd.s32 %v212, 4294967294
        %vm254 = vcmp.ge.s32.totalorder %v253, 0
        %vm255 = vcmp.lt.s32.totalorder %v253, 16
        %vm256 = vmand %vm254, %vm255
        %v257 = vadd.s32 %v212, 4294967295
        %vm258 = vcmp.ge.s32.totalorder %v257, 0
        %vm259 = vcmp.lt.s32.totalorder %v257, 16
        %vm260 = vmand %vm258, %vm259
        %vm261 = vcmp.ge.s32.totalorder %v212, 0
        %vm262 = vcmp.lt.s32.totalorder %v212, 16
        %vm263 = vmand %vm261, %vm262
        %v264 = vadd.s32 %v212, 1
        %vm265 = vcmp.ge.s32.totalorder %v264, 0
        %vm266 = vcmp.lt.s32.totalorder %v264, 16
        %vm267 = vmand %vm265, %vm266
        %v268 = vadd.s32 %v212, 2
        %vm269 = vcmp.ge.s32.totalorder %v268, 0
        %vm270 = vcmp.lt.s32.totalorder %v268, 16
        %vm271 = vmand %vm269, %vm270
        %v272 = vadd.s32 %v212, 3
        %vm273 = vcmp.ge.s32.totalorder %v272, 0
        %vm274 = vcmp.lt.s32.totalorder %v272, 16
        %vm275 = vmand %vm273, %vm274
        %276 = vrot.lane.b32.xlu0 %v233, 48
        %v277 = vpop.permute.xlu0 %276
        %278 = vrot.lane.b32.xlu0 %v234, 48
        %v279 = vpop.permute.xlu0 %278
        %v280 = vlaneseq
        %v281 = vand.u32 %v280, 127
        %vm282 = vcmp.lt.s32.totalorder %v281, 48
        %v283 = vsel %vm282, %v277, %v279
        %v284 = vsel %vm282, %v279, %v277
        %285 = vrot.lane.b32.xlu0 %v241, 48
        %v286 = vpop.permute.xlu0 %285
        %287 = vrot.lane.b32.xlu0 %v248, 48
        %v288 = vpop.permute.xlu0 %287
        %v289 = vsel %vm282, %v286, %v288
        %v290 = vsel %vm282, %v288, %v286
        %v293 = vcombine.low %v284, %v283
        %v295 = vunpack.c.l.s4 1983009808
        %v296 = vunpack.c.0.s8 %v295
        %v297 = vlaneseq
        %v298 = vshrl.u32 %v297, 7
        %v299 = vsub.s32 %v296, %v298
        %v300 = vrot.slane %v293, %v299
        %v302 = vsel %vm252, %v300, 0.0
        %v305 = vcombine.low %v290, %v289
        %v307 = vunpack.c.l.s4 1983009808
        %v308 = vunpack.c.0.s8 %v307
        %v309 = vlaneseq
        %v310 = vshrl.u32 %v309, 7
        %v311 = vsub.s32 %v308, %v310
        %v312 = vrot.slane %v305, %v311
        %v314 = vsel %vm252, %v312, 0.0
        %v316 = vlaneseq
        %v317 = vshrl.u32 %v316, 7
        %v318 = vsub.s32 0, %v317
        %v319 = vrot.slane %v302, %v318
        %v320 = vlaneseq
        %v321 = vshrl.u32 %v320, 7
        %v322 = vsub.s32 2, %v321
        %v323 = vrot.slane %v302, %v322
        %326 = vrot.lane.b32.xlu0 %v319, 3
        %v327 = vpop.permute.xlu0 %326
        %328 = vrot.lane.b32.xlu0 %v323, 3
        %v329 = vpop.permute.xlu0 %328
        %vm330 = vcmp.lt.s32.totalorder %v281, 3
        %v331 = vsel %vm330, %v327, %v329
        %v332 = vsel %vm330, %v329, %v327
        %v334 = vlaneseq
        %v335 = vshrl.u32 %v334, 7
        %v336 = vsub.s32 0, %v335
        %v337 = vrot.slane %v314, %v336
        %v338 = vlaneseq
        %v339 = vshrl.u32 %v338, 7
        %v340 = vsub.s32 2, %v339
        %v341 = vrot.slane %v314, %v340
        %344 = vrot.lane.b32.xlu0 %v337, 3
        %v345 = vpop.permute.xlu0 %344
        %346 = vrot.lane.b32.xlu0 %v341, 3
        %v347 = vpop.permute.xlu0 %346
        %v348 = vsel %vm330, %v345, %v347
        %v349 = vsel %vm330, %v347, %v345
        %s350 = sld [smem:[#allocation2]]
        %s351 = sld [smem:[#allocation2 + $0x31]]
        %v352 = vstv %s350
        %v353 = vmul.f32 %v352, %v332
        %v354 = vmul.f32 %v352, %v331
        %v355 = vstv %s351
        %v356 = vmul.f32 %v355, %v349
        %v357 = vmul.f32 %v355, %v348
        %v358 = vadd.f32 %v353, %v356
        %v359 = vadd.f32 %v354, %v357
        %v362 = vcombine.low %v358, %v359
        %v364 = vunpack.c.l.s4 1983009808
        %v365 = vunpack.c.0.s8 %v364
        %v366 = vlaneseq
        %v367 = vshrl.u32 %v366, 7
        %v368 = vsub.s32 %v365, %v367
        %v369 = vrot.slane %v362, %v368
        %v370 = vrot.slane %v369, 7
        %v372 = vsel %vm252, %v370, 0.0
        %v373 = vadd.f32 %v372, 0.0
        %374 = vrot.lane.b32.xlu0 %v319, 2
        %v375 = vpop.permute.xlu0 %374
        %376 = vrot.lane.b32.xlu0 %v323, 2
        %v377 = vpop.permute.xlu0 %376
        %vm378 = vcmp.lt.s32.totalorder %v281, 2
        %v379 = vsel %vm378, %v375, %v377
        %v380 = vsel %vm378, %v377, %v375
        %381 = vrot.lane.b32.xlu0 %v337, 2
        %v382 = vpop.permute.xlu0 %381
        %383 = vrot.lane.b32.xlu0 %v341, 2
        %v384 = vpop.permute.xlu0 %383
        %v385 = vsel %vm378, %v382, %v384
        %v386 = vsel %vm378, %v384, %v382
        %s387 = sld [smem:[#allocation2 + $0x1]]
        %s388 = sld [smem:[#allocation2 + $0x32]]
        %v389 = vstv %s387
        %v390 = vmul.f32 %v389, %v380
        %v391 = vmul.f32 %v389, %v379
        %v392 = vstv %s388
        %v393 = vmul.f32 %v392, %v386
        %v394 = vmul.f32 %v392, %v385
        %v395 = vadd.f32 %v390, %v393
        %v396 = vadd.f32 %v391, %v394
        %v399 = vcombine.low %v395, %v396
        %v401 = vunpack.c.l.s4 1983009808
        %v402 = vunpack.c.0.s8 %v401
        %v403 = vlaneseq
        %v404 = vshrl.u32 %v403, 7
        %v405 = vsub.s32 %v402, %v404
        %v406 = vrot.slane %v399, %v405
        %v407 = vrot.slane %v406, 7
        %v409 = vsel %vm256, %v407, 0.0
        %v410 = vadd.f32 %v373, %v409
        %411 = vrot.lane.b32.xlu0 %v319, 1
        %v412 = vpop.permute.xlu0 %411
        %413 = vrot.lane.b32.xlu0 %v323, 1
        %v414 = vpop.permute.xlu0 %413
        %vm415 = vcmp.lt.s32.totalorder %v281, 1
        %v416 = vsel %vm415, %v412, %v414
        %v417 = vsel %vm415, %v414, %v412
        %418 = vrot.lane.b32.xlu0 %v337, 1
        %v419 = vpop.permute.xlu0 %418
        %420 = vrot.lane.b32.xlu0 %v341, 1
        %v421 = vpop.permute.xlu0 %420
        %v422 = vsel %vm415, %v419, %v421
        %v423 = vsel %vm415, %v421, %v419
        %s424 = sld [smem:[#allocation2 + $0x2]]
        %s425 = sld [smem:[#allocation2 + $0x33]]
        %v426 = vstv %s424
        %v427 = vmul.f32 %v426, %v417
        %v428 = vmul.f32 %v426, %v416
        %v429 = vstv %s425
        %v430 = vmul.f32 %v429, %v423
        %v431 = vmul.f32 %v429, %v422
        %v432 = vadd.f32 %v427, %v430
        %v433 = vadd.f32 %v428, %v431
        %v436 = vcombine.low %v432, %v433
        %v438 = vunpack.c.l.s4 1983009808
        %v439 = vunpack.c.0.s8 %v438
        %v440 = vlaneseq
        %v441 = vshrl.u32 %v440, 7
        %v442 = vsub.s32 %v439, %v441
        %v443 = vrot.slane %v436, %v442
        %v444 = vrot.slane %v443, 7
        %v446 = vsel %vm260, %v444, 0.0
        %v447 = vadd.f32 %v410, %v446
        %s448 = sld [smem:[#allocation2 + $0x3]]
        %s449 = sld [smem:[#allocation2 + $0x34]]
        %v450 = vstv %s448
        %v451 = vmul.f32 %v450, %v302
        %v452 = vstv %s449
        %v453 = vmul.f32 %v452, %v314
        %v454 = vadd.f32 %v451, %v453
        %v456 = vrot.slane %v454, 7
        %v458 = vsel %vm263, %v456, 0.0
        %v459 = vadd.f32 %v447, %v458
        %460 = vrot.lane.b32.xlu0 %v319, 127
        %v461 = vpop.permute.xlu0 %460
        %462 = vrot.lane.b32.xlu0 %v323, 127
        %v463 = vpop.permute.xlu0 %462
        %vm464 = vcmp.lt.s32.totalorder %v281, 127
        %v465 = vsel %vm464, %v461, %v463
        %v466 = vsel %vm464, %v463, %v461
        %467 = vrot.lane.b32.xlu0 %v337, 127
        %v468 = vpop.permute.xlu0 %467
        %469 = vrot.lane.b32.xlu0 %v341, 127
        %v470 = vpop.permute.xlu0 %469
        %v471 = vsel %vm464, %v468, %v470
        %v472 = vsel %vm464, %v470, %v468
        %s473 = sld [smem:[#allocation2 + $0x4]]
        %s474 = sld [smem:[#allocation2 + $0x35]]
        %v475 = vstv %s473
        %v476 = vmul.f32 %v475, %v465
        %v477 = vmul.f32 %v475, %v466
        %v478 = vstv %s474
        %v479 = vmul.f32 %v478, %v471
        %v480 = vmul.f32 %v478, %v472
        %v481 = vadd.f32 %v476, %v479
        %v482 = vadd.f32 %v477, %v480
        %v485 = vcombine.low %v481, %v482
        %v487 = vunpack.c.l.s4 1983009808
        %v488 = vunpack.c.0.s8 %v487
        %v489 = vlaneseq
        %v490 = vshrl.u32 %v489, 7
        %v491 = vsub.s32 %v488, %v490
        %v492 = vrot.slane %v485, %v491
        %v493 = vrot.slane %v492, 7
        %v495 = vsel %vm267, %v493, 0.0
        %v496 = vadd.f32 %v459, %v495
        %497 = vrot.lane.b32.xlu0 %v319, 126
        %v498 = vpop.permute.xlu0 %497
        %499 = vrot.lane.b32.xlu0 %v323, 126
        %v500 = vpop.permute.xlu0 %499
        %vm501 = vcmp.lt.s32.totalorder %v281, 126
        %v502 = vsel %vm501, %v498, %v500
        %v503 = vsel %vm501, %v500, %v498
        %504 = vrot.lane.b32.xlu0 %v337, 126
        %v505 = vpop.permute.xlu0 %504
        %506 = vrot.lane.b32.xlu0 %v341, 126
        %v507 = vpop.permute.xlu0 %506
        %v508 = vsel %vm501, %v505, %v507
        %v509 = vsel %vm501, %v507, %v505
        %s510 = sld [smem:[#allocation2 + $0x5]]
        %s511 = sld [smem:[#allocation2 + $0x36]]
        %v512 = vstv %s510
        %v513 = vmul.f32 %v512, %v502
        %v514 = vmul.f32 %v512, %v503
        %v515 = vstv %s511
        %v516 = vmul.f32 %v515, %v508
        %v517 = vmul.f32 %v515, %v509
        %v518 = vadd.f32 %v513, %v516
        %v519 = vadd.f32 %v514, %v517
        %v522 = vcombine.low %v518, %v519
        %v524 = vunpack.c.l.s4 1983009808
        %v525 = vunpack.c.0.s8 %v524
        %v526 = vlaneseq
        %v527 = vshrl.u32 %v526, 7
        %v528 = vsub.s32 %v525, %v527
        %v529 = vrot.slane %v522, %v528
        %v530 = vrot.slane %v529, 7
        %v532 = vsel %vm271, %v530, 0.0
        %v533 = vadd.f32 %v496, %v532
        %534 = vrot.lane.b32.xlu0 %v319, 125
        %v535 = vpop.permute.xlu0 %534
        %536 = vrot.lane.b32.xlu0 %v323, 125
        %v537 = vpop.permute.xlu0 %536
        %vm538 = vcmp.lt.s32.totalorder %v281, 125
        %v539 = vsel %vm538, %v535, %v537
        %v540 = vsel %vm538, %v537, %v535
        %541 = vrot.lane.b32.xlu0 %v337, 125
        %v542 = vpop.permute.xlu0 %541
        %543 = vrot.lane.b32.xlu0 %v341, 125
        %v544 = vpop.permute.xlu0 %543
        %v545 = vsel %vm538, %v542, %v544
        %v546 = vsel %vm538, %v544, %v542
        %s547 = sld [smem:[#allocation2 + $0x6]]
        %s548 = sld [smem:[#allocation2 + $0x37]]
        %v549 = vstv %s547
        %v550 = vmul.f32 %v549, %v539
        %v551 = vmul.f32 %v549, %v540
        %v552 = vstv %s548
        %v553 = vmul.f32 %v552, %v545
        %v554 = vmul.f32 %v552, %v546
        %v555 = vadd.f32 %v550, %v553
        %v556 = vadd.f32 %v551, %v554
        %v559 = vcombine.low %v555, %v556
        %v561 = vunpack.c.l.s4 1983009808
        %v562 = vunpack.c.0.s8 %v561
        %v563 = vlaneseq
        %v564 = vshrl.u32 %v563, 7
        %v565 = vsub.s32 %v562, %v564
        %v566 = vrot.slane %v559, %v565
        %v567 = vrot.slane %v566, 7
        %v569 = vsel %vm275, %v567, 0.0
        %v570 = vadd.f32 %v533, %v569
        %571 = vrot.lane.b32.xlu0 %v233, 32
        %v572 = vpop.permute.xlu0 %571
        %573 = vrot.lane.b32.xlu0 %v234, 32
        %v574 = vpop.permute.xlu0 %573
        %vm575 = vcmp.lt.s32.totalorder %v281, 32
        %v576 = vsel %vm575, %v572, %v574
        %v577 = vsel %vm575, %v574, %v572
        %578 = vrot.lane.b32.xlu0 %v241, 32
        %v579 = vpop.permute.xlu0 %578
        %580 = vrot.lane.b32.xlu0 %v248, 32
        %v581 = vpop.permute.xlu0 %580
        %v582 = vsel %vm575, %v579, %v581
        %v583 = vsel %vm575, %v581, %v579
        %v586 = vcombine.low %v577, %v576
        %v588 = vunpack.c.l.s4 1983009808
        %v589 = vunpack.c.0.s8 %v588
        %v590 = vlaneseq
        %v591 = vshrl.u32 %v590, 7
        %v592 = vsub.s32 %v589, %v591
        %v593 = vrot.slane %v586, %v592
        %v595 = vsel %vm256, %v593, 0.0
        %v598 = vcombine.low %v583, %v582
        %v600 = vunpack.c.l.s4 1983009808
        %v601 = vunpack.c.0.s8 %v600
        %v602 = vlaneseq
        %v603 = vshrl.u32 %v602, 7
        %v604 = vsub.s32 %v601, %v603
        %v605 = vrot.slane %v598, %v604
        %v607 = vsel %vm256, %v605, 0.0
        %v609 = vlaneseq
        %v610 = vshrl.u32 %v609, 7
        %v611 = vsub.s32 0, %v610
        %v612 = vrot.slane %v595, %v611
        %v613 = vlaneseq
        %v614 = vshrl.u32 %v613, 7
        %v615 = vsub.s32 2, %v614
        %v616 = vrot.slane %v595, %v615
        %619 = vrot.lane.b32.xlu0 %v612, 3
        %v620 = vpop.permute.xlu0 %619
        %621 = vrot.lane.b32.xlu0 %v616, 3
        %v622 = vpop.permute.xlu0 %621
        %v623 = vsel %vm330, %v620, %v622
        %v624 = vsel %vm330, %v622, %v620
        %v626 = vlaneseq
        %v627 = vshrl.u32 %v626, 7
        %v628 = vsub.s32 0, %v627
        %v629 = vrot.slane %v607, %v628
        %v630 = vlaneseq
        %v631 = vshrl.u32 %v630, 7
        %v632 = vsub.s32 2, %v631
        %v633 = vrot.slane %v607, %v632
        %636 = vrot.lane.b32.xlu0 %v629, 3
        %v637 = vpop.permute.xlu0 %636
        %638 = vrot.lane.b32.xlu0 %v633, 3
        %v639 = vpop.permute.xlu0 %638
        %v640 = vsel %vm330, %v637, %v639
        %v641 = vsel %vm330, %v639, %v637
        %s642 = sld [smem:[#allocation2 + $0x7]]
        %s643 = sld [smem:[#allocation2 + $0x38]]
        %v644 = vstv %s642
        %v645 = vmul.f32 %v644, %v624
        %v646 = vmul.f32 %v644, %v623
        %v647 = vstv %s643
        %v648 = vmul.f32 %v647, %v641
        %v649 = vmul.f32 %v647, %v640
        %v650 = vadd.f32 %v645, %v648
        %v651 = vadd.f32 %v646, %v649
        %v654 = vcombine.low %v650, %v651
        %v656 = vunpack.c.l.s4 1983009808
        %v657 = vunpack.c.0.s8 %v656
        %v658 = vlaneseq
        %v659 = vshrl.u32 %v658, 7
        %v660 = vsub.s32 %v657, %v659
        %v661 = vrot.slane %v654, %v660
        %v662 = vrot.slane %v661, 7
        %v664 = vsel %vm252, %v662, 0.0
        %v665 = vadd.f32 %v570, %v664
        %666 = vrot.lane.b32.xlu0 %v612, 2
        %v667 = vpop.permute.xlu0 %666
        %668 = vrot.lane.b32.xlu0 %v616, 2
        %v669 = vpop.permute.xlu0 %668
        %v670 = vsel %vm378, %v667, %v669
        %v671 = vsel %vm378, %v669, %v667
        %672 = vrot.lane.b32.xlu0 %v629, 2
        %v673 = vpop.permute.xlu0 %672
        %674 = vrot.lane.b32.xlu0 %v633, 2
        %v675 = vpop.permute.xlu0 %674
        %v676 = vsel %vm378, %v673, %v675
        %v677 = vsel %vm378, %v675, %v673
        %s678 = sld [smem:[#allocation2 + $0x8]]
        %s679 = sld [smem:[#allocation2 + $0x39]]
        %v680 = vstv %s678
        %v681 = vmul.f32 %v680, %v671
        %v682 = vmul.f32 %v680, %v670
        %v683 = vstv %s679
        %v684 = vmul.f32 %v683, %v677
        %v685 = vmul.f32 %v683, %v676
        %v686 = vadd.f32 %v681, %v684
        %v687 = vadd.f32 %v682, %v685
        %v690 = vcombine.low %v686, %v687
        %v692 = vunpack.c.l.s4 1983009808
        %v693 = vunpack.c.0.s8 %v692
        %v694 = vlaneseq
        %v695 = vshrl.u32 %v694, 7
        %v696 = vsub.s32 %v693, %v695
        %v697 = vrot.slane %v690, %v696
        %v698 = vrot.slane %v697, 7
        %v700 = vsel %vm256, %v698, 0.0
        %v701 = vadd.f32 %v665, %v700
        %702 = vrot.lane.b32.xlu0 %v612, 1
        %v703 = vpop.permute.xlu0 %702
        %704 = vrot.lane.b32.xlu0 %v616, 1
        %v705 = vpop.permute.xlu0 %704
        %v706 = vsel %vm415, %v703, %v705
        %v707 = vsel %vm415, %v705, %v703
        %708 = vrot.lane.b32.xlu0 %v629, 1
        %v709 = vpop.permute.xlu0 %708
        %710 = vrot.lane.b32.xlu0 %v633, 1
        %v711 = vpop.permute.xlu0 %710
        %v712 = vsel %vm415, %v709, %v711
        %v713 = vsel %vm415, %v711, %v709
        %s714 = sld [smem:[#allocation2 + $0x9]]
        %s715 = sld [smem:[#allocation2 + $0x3a]]
        %v716 = vstv %s714
        %v717 = vmul.f32 %v716, %v707
        %v718 = vmul.f32 %v716, %v706
        %v719 = vstv %s715
        %v720 = vmul.f32 %v719, %v713
        %v721 = vmul.f32 %v719, %v712
        %v722 = vadd.f32 %v717, %v720
        %v723 = vadd.f32 %v718, %v721
        %v726 = vcombine.low %v722, %v723
        %v728 = vunpack.c.l.s4 1983009808
        %v729 = vunpack.c.0.s8 %v728
        %v730 = vlaneseq
        %v731 = vshrl.u32 %v730, 7
        %v732 = vsub.s32 %v729, %v731
        %v733 = vrot.slane %v726, %v732
        %v734 = vrot.slane %v733, 7
        %v736 = vsel %vm260, %v734, 0.0
        %v737 = vadd.f32 %v701, %v736
        %s738 = sld [smem:[#allocation2 + $0xa]]
        %s739 = sld [smem:[#allocation2 + $0x3b]]
        %v740 = vstv %s738
        %v741 = vmul.f32 %v740, %v595
        %v742 = vstv %s739
        %v743 = vmul.f32 %v742, %v607
        %v744 = vadd.f32 %v741, %v743
        %v746 = vrot.slane %v744, 7
        %v748 = vsel %vm263, %v746, 0.0
        %v749 = vadd.f32 %v737, %v748
        %750 = vrot.lane.b32.xlu0 %v612, 127
        %v751 = vpop.permute.xlu0 %750
        %752 = vrot.lane.b32.xlu0 %v616, 127
        %v753 = vpop.permute.xlu0 %752
        %v754 = vsel %vm464, %v751, %v753
        %v755 = vsel %vm464, %v753, %v751
        %756 = vrot.lane.b32.xlu0 %v629, 127
        %v757 = vpop.permute.xlu0 %756
        %758 = vrot.lane.b32.xlu0 %v633, 127
        %v759 = vpop.permute.xlu0 %758
        %v760 = vsel %vm464, %v757, %v759
        %v761 = vsel %vm464, %v759, %v757
        %s762 = sld [smem:[#allocation2 + $0xb]]
        %s763 = sld [smem:[#allocation2 + $0x3c]]
        %v764 = vstv %s762
        %v765 = vmul.f32 %v764, %v754
        %v766 = vmul.f32 %v764, %v755
        %v767 = vstv %s763
        %v768 = vmul.f32 %v767, %v760
        %v769 = vmul.f32 %v767, %v761
        %v770 = vadd.f32 %v765, %v768
        %v771 = vadd.f32 %v766, %v769
        %v774 = vcombine.low %v770, %v771
        %v776 = vunpack.c.l.s4 1983009808
        %v777 = vunpack.c.0.s8 %v776
        %v778 = vlaneseq
        %v779 = vshrl.u32 %v778, 7
        %v780 = vsub.s32 %v777, %v779
        %v781 = vrot.slane %v774, %v780
        %v782 = vrot.slane %v781, 7
        %v784 = vsel %vm267, %v782, 0.0
        %v785 = vadd.f32 %v749, %v784
        %786 = vrot.lane.b32.xlu0 %v612, 126
        %v787 = vpop.permute.xlu0 %786
        %788 = vrot.lane.b32.xlu0 %v616, 126
        %v789 = vpop.permute.xlu0 %788
        %v790 = vsel %vm501, %v787, %v789
        %v791 = vsel %vm501, %v789, %v787
        %792 = vrot.lane.b32.xlu0 %v629, 126
        %v793 = vpop.permute.xlu0 %792
        %794 = vrot.lane.b32.xlu0 %v633, 126
        %v795 = vpop.permute.xlu0 %794
        %v796 = vsel %vm501, %v793, %v795
        %v797 = vsel %vm501, %v795, %v793
        %s798 = sld [smem:[#allocation2 + $0xc]]
        %s799 = sld [smem:[#allocation2 + $0x3d]]
        %v800 = vstv %s798
        %v801 = vmul.f32 %v800, %v790
        %v802 = vmul.f32 %v800, %v791
        %v803 = vstv %s799
        %v804 = vmul.f32 %v803, %v796
        %v805 = vmul.f32 %v803, %v797
        %v806 = vadd.f32 %v801, %v804
        %v807 = vadd.f32 %v802, %v805
        %v810 = vcombine.low %v806, %v807
        %v812 = vunpack.c.l.s4 1983009808
        %v813 = vunpack.c.0.s8 %v812
        %v814 = vlaneseq
        %v815 = vshrl.u32 %v814, 7
        %v816 = vsub.s32 %v813, %v815
        %v817 = vrot.slane %v810, %v816
        %v818 = vrot.slane %v817, 7
        %v820 = vsel %vm271, %v818, 0.0
        %v821 = vadd.f32 %v785, %v820
        %822 = vrot.lane.b32.xlu0 %v612, 125
        %v823 = vpop.permute.xlu0 %822
        %824 = vrot.lane.b32.xlu0 %v616, 125
        %v825 = vpop.permute.xlu0 %824
        %v826 = vsel %vm538, %v823, %v825
        %v827 = vsel %vm538, %v825, %v823
        %828 = vrot.lane.b32.xlu0 %v629, 125
        %v829 = vpop.permute.xlu0 %828
        %830 = vrot.lane.b32.xlu0 %v633, 125
        %v831 = vpop.permute.xlu0 %830
        %v832 = vsel %vm538, %v829, %v831
        %v833 = vsel %vm538, %v831, %v829
        %s834 = sld [smem:[#allocation2 + $0xd]]
        %s835 = sld [smem:[#allocation2 + $0x3e]]
        %v836 = vstv %s834
        %v837 = vmul.f32 %v836, %v826
        %v838 = vmul.f32 %v836, %v827
        %v839 = vstv %s835
        %v840 = vmul.f32 %v839, %v832
        %v841 = vmul.f32 %v839, %v833
        %v842 = vadd.f32 %v837, %v840
        %v843 = vadd.f32 %v838, %v841
        %v846 = vcombine.low %v842, %v843
        %v848 = vunpack.c.l.s4 1983009808
        %v849 = vunpack.c.0.s8 %v848
        %v850 = vlaneseq
        %v851 = vshrl.u32 %v850, 7
        %v852 = vsub.s32 %v849, %v851
        %v853 = vrot.slane %v846, %v852
        %v854 = vrot.slane %v853, 7
        %v856 = vsel %vm275, %v854, 0.0
        %v857 = vadd.f32 %v821, %v856
        %858 = vrot.lane.b32.xlu0 %v233, 16
        %v859 = vpop.permute.xlu0 %858
        %860 = vrot.lane.b32.xlu0 %v234, 16
        %v861 = vpop.permute.xlu0 %860
        %vm862 = vcmp.lt.s32.totalorder %v281, 16
        %v863 = vsel %vm862, %v859, %v861
        %v864 = vsel %vm862, %v861, %v859
        %865 = vrot.lane.b32.xlu0 %v241, 16
        %v866 = vpop.permute.xlu0 %865
        %867 = vrot.lane.b32.xlu0 %v248, 16
        %v868 = vpop.permute.xlu0 %867
        %v869 = vsel %vm862, %v866, %v868
        %v870 = vsel %vm862, %v868, %v866
        %v873 = vcombine.low %v864, %v863
        %v875 = vunpack.c.l.s4 1983009808
        %v876 = vunpack.c.0.s8 %v875
        %v877 = vlaneseq
        %v878 = vshrl.u32 %v877, 7
        %v879 = vsub.s32 %v876, %v878
        %v880 = vrot.slane %v873, %v879
        %v882 = vsel %vm260, %v880, 0.0
        %v885 = vcombine.low %v870, %v869
        %v887 = vunpack.c.l.s4 1983009808
        %v888 = vunpack.c.0.s8 %v887
        %v889 = vlaneseq
        %v890 = vshrl.u32 %v889, 7
        %v891 = vsub.s32 %v888, %v890
        %v892 = vrot.slane %v885, %v891
        %v894 = vsel %vm260, %v892, 0.0
        %v896 = vlaneseq
        %v897 = vshrl.u32 %v896, 7
        %v898 = vsub.s32 0, %v897
        %v899 = vrot.slane %v882, %v898
        %v900 = vlaneseq
        %v901 = vshrl.u32 %v900, 7
        %v902 = vsub.s32 2, %v901
        %v903 = vrot.slane %v882, %v902
        %906 = vrot.lane.b32.xlu0 %v899, 3
        %v907 = vpop.permute.xlu0 %906
        %908 = vrot.lane.b32.xlu0 %v903, 3
        %v909 = vpop.permute.xlu0 %908
        %v910 = vsel %vm330, %v907, %v909
        %v911 = vsel %vm330, %v909, %v907
        %v913 = vlaneseq
        %v914 = vshrl.u32 %v913, 7
        %v915 = vsub.s32 0, %v914
        %v916 = vrot.slane %v894, %v915
        %v917 = vlaneseq
        %v918 = vshrl.u32 %v917, 7
        %v919 = vsub.s32 2, %v918
        %v920 = vrot.slane %v894, %v919
        %923 = vrot.lane.b32.xlu0 %v916, 3
        %v924 = vpop.permute.xlu0 %923
        %925 = vrot.lane.b32.xlu0 %v920, 3
        %v926 = vpop.permute.xlu0 %925
        %v927 = vsel %vm330, %v924, %v926
        %v928 = vsel %vm330, %v926, %v924
        %s929 = sld [smem:[#allocation2 + $0xe]]
        %s930 = sld [smem:[#allocation2 + $0x3f]]
        %v931 = vstv %s929
        %v932 = vmul.f32 %v931, %v911
        %v933 = vmul.f32 %v931, %v910
        %v934 = vstv %s930
        %v935 = vmul.f32 %v934, %v928
        %v936 = vmul.f32 %v934, %v927
        %v937 = vadd.f32 %v932, %v935
        %v938 = vadd.f32 %v933, %v936
        %v941 = vcombine.low %v937, %v938
        %v943 = vunpack.c.l.s4 1983009808
        %v944 = vunpack.c.0.s8 %v943
        %v945 = vlaneseq
        %v946 = vshrl.u32 %v945, 7
        %v947 = vsub.s32 %v944, %v946
        %v948 = vrot.slane %v941, %v947
        %v949 = vrot.slane %v948, 7
        %v951 = vsel %vm252, %v949, 0.0
        %v952 = vadd.f32 %v857, %v951
        %953 = vrot.lane.b32.xlu0 %v899, 2
        %v954 = vpop.permute.xlu0 %953
        %955 = vrot.lane.b32.xlu0 %v903, 2
        %v956 = vpop.permute.xlu0 %955
        %v957 = vsel %vm378, %v954, %v956
        %v958 = vsel %vm378, %v956, %v954
        %959 = vrot.lane.b32.xlu0 %v916, 2
        %v960 = vpop.permute.xlu0 %959
        %961 = vrot.lane.b32.xlu0 %v920, 2
        %v962 = vpop.permute.xlu0 %961
        %v963 = vsel %vm378, %v960, %v962
        %v964 = vsel %vm378, %v962, %v960
        %s965 = sld [smem:[#allocation2 + $0xf]]
        %s966 = sld [smem:[#allocation2 + $0x40]]
        %v967 = vstv %s965
        %v968 = vmul.f32 %v967, %v958
        %v969 = vmul.f32 %v967, %v957
        %v970 = vstv %s966
        %v971 = vmul.f32 %v970, %v964
        %v972 = vmul.f32 %v970, %v963
        %v973 = vadd.f32 %v968, %v971
        %v974 = vadd.f32 %v969, %v972
        %v977 = vcombine.low %v973, %v974
        %v979 = vunpack.c.l.s4 1983009808
        %v980 = vunpack.c.0.s8 %v979
        %v981 = vlaneseq
        %v982 = vshrl.u32 %v981, 7
        %v983 = vsub.s32 %v980, %v982
        %v984 = vrot.slane %v977, %v983
        %v985 = vrot.slane %v984, 7
        %v987 = vsel %vm256, %v985, 0.0
        %v988 = vadd.f32 %v952, %v987
        %989 = vrot.lane.b32.xlu0 %v899, 1
        %v990 = vpop.permute.xlu0 %989
        %991 = vrot.lane.b32.xlu0 %v903, 1
        %v992 = vpop.permute.xlu0 %991
        %v993 = vsel %vm415, %v990, %v992
        %v994 = vsel %vm415, %v992, %v990
        %995 = vrot.lane.b32.xlu0 %v916, 1
        %v996 = vpop.permute.xlu0 %995
        %997 = vrot.lane.b32.xlu0 %v920, 1
        %v998 = vpop.permute.xlu0 %997
        %v999 = vsel %vm415, %v996, %v998
        %v1000 = vsel %vm415, %v998, %v996
        %s1001 = sld [smem:[#allocation2 + $0x10]]
        %s1002 = sld [smem:[#allocation2 + $0x41]]
        %v1003 = vstv %s1001
        %v1004 = vmul.f32 %v1003, %v994
        %v1005 = vmul.f32 %v1003, %v993
        %v1006 = vstv %s1002
        %v1007 = vmul.f32 %v1006, %v1000
        %v1008 = vmul.f32 %v1006, %v999
        %v1009 = vadd.f32 %v1004, %v1007
        %v1010 = vadd.f32 %v1005, %v1008
        %v1013 = vcombine.low %v1009, %v1010
        %v1015 = vunpack.c.l.s4 1983009808
        %v1016 = vunpack.c.0.s8 %v1015
        %v1017 = vlaneseq
        %v1018 = vshrl.u32 %v1017, 7
        %v1019 = vsub.s32 %v1016, %v1018
        %v1020 = vrot.slane %v1013, %v1019
        %v1021 = vrot.slane %v1020, 7
        %v1023 = vsel %vm260, %v1021, 0.0
        %v1024 = vadd.f32 %v988, %v1023
        %s1025 = sld [smem:[#allocation2 + $0x11]]
        %s1026 = sld [smem:[#allocation2 + $0x42]]
        %v1027 = vstv %s1025
        %v1028 = vmul.f32 %v1027, %v882
        %v1029 = vstv %s1026
        %v1030 = vmul.f32 %v1029, %v894
        %v1031 = vadd.f32 %v1028, %v1030
        %v1033 = vrot.slane %v1031, 7
        %v1035 = vsel %vm263, %v1033, 0.0
        %v1036 = vadd.f32 %v1024, %v1035
        %1037 = vrot.lane.b32.xlu0 %v899, 127
        %v1038 = vpop.permute.xlu0 %1037
        %1039 = vrot.lane.b32.xlu0 %v903, 127
        %v1040 = vpop.permute.xlu0 %1039
        %v1041 = vsel %vm464, %v1038, %v1040
        %v1042 = vsel %vm464, %v1040, %v1038
        %1043 = vrot.lane.b32.xlu0 %v916, 127
        %v1044 = vpop.permute.xlu0 %1043
        %1045 = vrot.lane.b32.xlu0 %v920, 127
        %v1046 = vpop.permute.xlu0 %1045
        %v1047 = vsel %vm464, %v1044, %v1046
        %v1048 = vsel %vm464, %v1046, %v1044
        %s1049 = sld [smem:[#allocation2 + $0x12]]
        %s1050 = sld [smem:[#allocation2 + $0x43]]
        %v1051 = vstv %s1049
        %v1052 = vmul.f32 %v1051, %v1041
        %v1053 = vmul.f32 %v1051, %v1042
        %v1054 = vstv %s1050
        %v1055 = vmul.f32 %v1054, %v1047
        %v1056 = vmul.f32 %v1054, %v1048
        %v1057 = vadd.f32 %v1052, %v1055
        %v1058 = vadd.f32 %v1053, %v1056
        %v1061 = vcombine.low %v1057, %v1058
        %v1063 = vunpack.c.l.s4 1983009808
        %v1064 = vunpack.c.0.s8 %v1063
        %v1065 = vlaneseq
        %v1066 = vshrl.u32 %v1065, 7
        %v1067 = vsub.s32 %v1064, %v1066
        %v1068 = vrot.slane %v1061, %v1067
        %v1069 = vrot.slane %v1068, 7
        %v1071 = vsel %vm267, %v1069, 0.0
        %v1072 = vadd.f32 %v1036, %v1071
        %1073 = vrot.lane.b32.xlu0 %v899, 126
        %v1074 = vpop.permute.xlu0 %1073
        %1075 = vrot.lane.b32.xlu0 %v903, 126
        %v1076 = vpop.permute.xlu0 %1075
        %v1077 = vsel %vm501, %v1074, %v1076
        %v1078 = vsel %vm501, %v1076, %v1074
        %1079 = vrot.lane.b32.xlu0 %v916, 126
        %v1080 = vpop.permute.xlu0 %1079
        %1081 = vrot.lane.b32.xlu0 %v920, 126
        %v1082 = vpop.permute.xlu0 %1081
        %v1083 = vsel %vm501, %v1080, %v1082
        %v1084 = vsel %vm501, %v1082, %v1080
        %s1085 = sld [smem:[#allocation2 + $0x13]]
        %s1086 = sld [smem:[#allocation2 + $0x44]]
        %v1087 = vstv %s1085
        %v1088 = vmul.f32 %v1087, %v1077
        %v1089 = vmul.f32 %v1087, %v1078
        %v1090 = vstv %s1086
        %v1091 = vmul.f32 %v1090, %v1083
        %v1092 = vmul.f32 %v1090, %v1084
        %v1093 = vadd.f32 %v1088, %v1091
        %v1094 = vadd.f32 %v1089, %v1092
        %v1097 = vcombine.low %v1093, %v1094
        %v1099 = vunpack.c.l.s4 1983009808
        %v1100 = vunpack.c.0.s8 %v1099
        %v1101 = vlaneseq
        %v1102 = vshrl.u32 %v1101, 7
        %v1103 = vsub.s32 %v1100, %v1102
        %v1104 = vrot.slane %v1097, %v1103
        %v1105 = vrot.slane %v1104, 7
        %v1107 = vsel %vm271, %v1105, 0.0
        %v1108 = vadd.f32 %v1072, %v1107
        %1109 = vrot.lane.b32.xlu0 %v899, 125
        %v1110 = vpop.permute.xlu0 %1109
        %1111 = vrot.lane.b32.xlu0 %v903, 125
        %v1112 = vpop.permute.xlu0 %1111
        %v1113 = vsel %vm538, %v1110, %v1112
        %v1114 = vsel %vm538, %v1112, %v1110
        %1115 = vrot.lane.b32.xlu0 %v916, 125
        %v1116 = vpop.permute.xlu0 %1115
        %1117 = vrot.lane.b32.xlu0 %v920, 125
        %v1118 = vpop.permute.xlu0 %1117
        %v1119 = vsel %vm538, %v1116, %v1118
        %v1120 = vsel %vm538, %v1118, %v1116
        %s1121 = sld [smem:[#allocation2 + $0x14]]
        %s1122 = sld [smem:[#allocation2 + $0x45]]
        %v1123 = vstv %s1121
        %v1124 = vmul.f32 %v1123, %v1113
        %v1125 = vmul.f32 %v1123, %v1114
        %v1126 = vstv %s1122
        %v1127 = vmul.f32 %v1126, %v1119
        %v1128 = vmul.f32 %v1126, %v1120
        %v1129 = vadd.f32 %v1124, %v1127
        %v1130 = vadd.f32 %v1125, %v1128
        %v1133 = vcombine.low %v1129, %v1130
        %v1135 = vunpack.c.l.s4 1983009808
        %v1136 = vunpack.c.0.s8 %v1135
        %v1137 = vlaneseq
        %v1138 = vshrl.u32 %v1137, 7
        %v1139 = vsub.s32 %v1136, %v1138
        %v1140 = vrot.slane %v1133, %v1139
        %v1141 = vrot.slane %v1140, 7
        %v1143 = vsel %vm275, %v1141, 0.0
        %v1144 = vadd.f32 %v1108, %v1143
        %v1147 = vcombine.low %v233, %v234
        %v1149 = vunpack.c.l.s4 1983009808
        %v1150 = vunpack.c.0.s8 %v1149
        %v1151 = vlaneseq
        %v1152 = vshrl.u32 %v1151, 7
        %v1153 = vsub.s32 %v1150, %v1152
        %v1154 = vrot.slane %v1147, %v1153
        %v1156 = vsel %vm263, %v1154, 0.0
        %v1159 = vcombine.low %v241, %v248
        %v1161 = vunpack.c.l.s4 1983009808
        %v1162 = vunpack.c.0.s8 %v1161
        %v1163 = vlaneseq
        %v1164 = vshrl.u32 %v1163, 7
        %v1165 = vsub.s32 %v1162, %v1164
        %v1166 = vrot.slane %v1159, %v1165
        %v1168 = vsel %vm263, %v1166, 0.0
        %v1170 = vlaneseq
        %v1171 = vshrl.u32 %v1170, 7
        %v1172 = vsub.s32 0, %v1171
        %v1173 = vrot.slane %v1156, %v1172
        %v1174 = vlaneseq
        %v1175 = vshrl.u32 %v1174, 7
        %v1176 = vsub.s32 2, %v1175
        %v1177 = vrot.slane %v1156, %v1176
        %1180 = vrot.lane.b32.xlu0 %v1173, 3
        %v1181 = vpop.permute.xlu0 %1180
        %1182 = vrot.lane.b32.xlu0 %v1177, 3
        %v1183 = vpop.permute.xlu0 %1182
        %v1184 = vsel %vm330, %v1181, %v1183
        %v1185 = vsel %vm330, %v1183, %v1181
        %v1187 = vlaneseq
        %v1188 = vshrl.u32 %v1187, 7
        %v1189 = vsub.s32 0, %v1188
        %v1190 = vrot.slane %v1168, %v1189
        %v1191 = vlaneseq
        %v1192 = vshrl.u32 %v1191, 7
        %v1193 = vsub.s32 2, %v1192
        %v1194 = vrot.slane %v1168, %v1193
        %1197 = vrot.lane.b32.xlu0 %v1190, 3
        %v1198 = vpop.permute.xlu0 %1197
        %1199 = vrot.lane.b32.xlu0 %v1194, 3
        %v1200 = vpop.permute.xlu0 %1199
        %v1201 = vsel %vm330, %v1198, %v1200
        %v1202 = vsel %vm330, %v1200, %v1198
        %s1203 = sld [smem:[#allocation2 + $0x15]]
        %s1204 = sld [smem:[#allocation2 + $0x46]]
        %v1205 = vstv %s1203
        %v1206 = vmul.f32 %v1205, %v1185
        %v1207 = vmul.f32 %v1205, %v1184
        %v1208 = vstv %s1204
        %v1209 = vmul.f32 %v1208, %v1202
        %v1210 = vmul.f32 %v1208, %v1201
        %v1211 = vadd.f32 %v1206, %v1209
        %v1212 = vadd.f32 %v1207, %v1210
        %v1215 = vcombine.low %v1211, %v1212
        %v1217 = vunpack.c.l.s4 1983009808
        %v1218 = vunpack.c.0.s8 %v1217
        %v1219 = vlaneseq
        %v1220 = vshrl.u32 %v1219, 7
        %v1221 = vsub.s32 %v1218, %v1220
        %v1222 = vrot.slane %v1215, %v1221
        %v1223 = vrot.slane %v1222, 7
        %v1225 = vsel %vm252, %v1223, 0.0
        %v1226 = vadd.f32 %v1144, %v1225
        %1227 = vrot.lane.b32.xlu0 %v1173, 2
        %v1228 = vpop.permute.xlu0 %1227
        %1229 = vrot.lane.b32.xlu0 %v1177, 2
        %v1230 = vpop.permute.xlu0 %1229
        %v1231 = vsel %vm378, %v1228, %v1230
        %v1232 = vsel %vm378, %v1230, %v1228
        %1233 = vrot.lane.b32.xlu0 %v1190, 2
        %v1234 = vpop.permute.xlu0 %1233
        %1235 = vrot.lane.b32.xlu0 %v1194, 2
        %v1236 = vpop.permute.xlu0 %1235
        %v1237 = vsel %vm378, %v1234, %v1236
        %v1238 = vsel %vm378, %v1236, %v1234
        %s1239 = sld [smem:[#allocation2 + $0x16]]
        %s1240 = sld [smem:[#allocation2 + $0x47]]
        %v1241 = vstv %s1239
        %v1242 = vmul.f32 %v1241, %v1232
        %v1243 = vmul.f32 %v1241, %v1231
        %v1244 = vstv %s1240
        %v1245 = vmul.f32 %v1244, %v1238
        %v1246 = vmul.f32 %v1244, %v1237
        %v1247 = vadd.f32 %v1242, %v1245
        %v1248 = vadd.f32 %v1243, %v1246
        %v1251 = vcombine.low %v1247, %v1248
        %v1253 = vunpack.c.l.s4 1983009808
        %v1254 = vunpack.c.0.s8 %v1253
        %v1255 = vlaneseq
        %v1256 = vshrl.u32 %v1255, 7
        %v1257 = vsub.s32 %v1254, %v1256
        %v1258 = vrot.slane %v1251, %v1257
        %v1259 = vrot.slane %v1258, 7
        %v1261 = vsel %vm256, %v1259, 0.0
        %v1262 = vadd.f32 %v1226, %v1261
        %1263 = vrot.lane.b32.xlu0 %v1173, 1
        %v1264 = vpop.permute.xlu0 %1263
        %1265 = vrot.lane.b32.xlu0 %v1177, 1
        %v1266 = vpop.permute.xlu0 %1265
        %v1267 = vsel %vm415, %v1264, %v1266
        %v1268 = vsel %vm415, %v1266, %v1264
        %1269 = vrot.lane.b32.xlu0 %v1190, 1
        %v1270 = vpop.permute.xlu0 %1269
        %1271 = vrot.lane.b32.xlu0 %v1194, 1
        %v1272 = vpop.permute.xlu0 %1271
        %v1273 = vsel %vm415, %v1270, %v1272
        %v1274 = vsel %vm415, %v1272, %v1270
        %s1275 = sld [smem:[#allocation2 + $0x17]]
        %s1276 = sld [smem:[#allocation2 + $0x48]]
        %v1277 = vstv %s1275
        %v1278 = vmul.f32 %v1277, %v1268
        %v1279 = vmul.f32 %v1277, %v1267
        %v1280 = vstv %s1276
        %v1281 = vmul.f32 %v1280, %v1274
        %v1282 = vmul.f32 %v1280, %v1273
        %v1283 = vadd.f32 %v1278, %v1281
        %v1284 = vadd.f32 %v1279, %v1282
        %v1287 = vcombine.low %v1283, %v1284
        %v1289 = vunpack.c.l.s4 1983009808
        %v1290 = vunpack.c.0.s8 %v1289
        %v1291 = vlaneseq
        %v1292 = vshrl.u32 %v1291, 7
        %v1293 = vsub.s32 %v1290, %v1292
        %v1294 = vrot.slane %v1287, %v1293
        %v1295 = vrot.slane %v1294, 7
        %v1297 = vsel %vm260, %v1295, 0.0
        %v1298 = vadd.f32 %v1262, %v1297
        %s1299 = sld [smem:[#allocation2 + $0x18]]
        %s1300 = sld [smem:[#allocation2 + $0x49]]
        %v1301 = vstv %s1299
        %v1302 = vmul.f32 %v1301, %v1156
        %v1303 = vstv %s1300
        %v1304 = vmul.f32 %v1303, %v1168
        %v1305 = vadd.f32 %v1302, %v1304
        %v1307 = vrot.slane %v1305, 7
        %v1309 = vsel %vm263, %v1307, 0.0
        %v1310 = vadd.f32 %v1298, %v1309
        %1311 = vrot.lane.b32.xlu0 %v1173, 127
        %v1312 = vpop.permute.xlu0 %1311
        %1313 = vrot.lane.b32.xlu0 %v1177, 127
        %v1314 = vpop.permute.xlu0 %1313
        %v1315 = vsel %vm464, %v1312, %v1314
        %v1316 = vsel %vm464, %v1314, %v1312
        %1317 = vrot.lane.b32.xlu0 %v1190, 127
        %v1318 = vpop.permute.xlu0 %1317
        %1319 = vrot.lane.b32.xlu0 %v1194, 127
        %v1320 = vpop.permute.xlu0 %1319
        %v1321 = vsel %vm464, %v1318, %v1320
        %v1322 = vsel %vm464, %v1320, %v1318
        %s1323 = sld [smem:[#allocation2 + $0x19]]
        %s1324 = sld [smem:[#allocation2 + $0x4a]]
        %v1325 = vstv %s1323
        %v1326 = vmul.f32 %v1325, %v1315
        %v1327 = vmul.f32 %v1325, %v1316
        %v1328 = vstv %s1324
        %v1329 = vmul.f32 %v1328, %v1321
        %v1330 = vmul.f32 %v1328, %v1322
        %v1331 = vadd.f32 %v1326, %v1329
        %v1332 = vadd.f32 %v1327, %v1330
        %v1335 = vcombine.low %v1331, %v1332
        %v1337 = vunpack.c.l.s4 1983009808
        %v1338 = vunpack.c.0.s8 %v1337
        %v1339 = vlaneseq
        %v1340 = vshrl.u32 %v1339, 7
        %v1341 = vsub.s32 %v1338, %v1340
        %v1342 = vrot.slane %v1335, %v1341
        %v1343 = vrot.slane %v1342, 7
        %v1345 = vsel %vm267, %v1343, 0.0
        %v1346 = vadd.f32 %v1310, %v1345
        %1347 = vrot.lane.b32.xlu0 %v1173, 126
        %v1348 = vpop.permute.xlu0 %1347
        %1349 = vrot.lane.b32.xlu0 %v1177, 126
        %v1350 = vpop.permute.xlu0 %1349
        %v1351 = vsel %vm501, %v1348, %v1350
        %v1352 = vsel %vm501, %v1350, %v1348
        %1353 = vrot.lane.b32.xlu0 %v1190, 126
        %v1354 = vpop.permute.xlu0 %1353
        %1355 = vrot.lane.b32.xlu0 %v1194, 126
        %v1356 = vpop.permute.xlu0 %1355
        %v1357 = vsel %vm501, %v1354, %v1356
        %v1358 = vsel %vm501, %v1356, %v1354
        %s1359 = sld [smem:[#allocation2 + $0x1a]]
        %s1360 = sld [smem:[#allocation2 + $0x4b]]
        %v1361 = vstv %s1359
        %v1362 = vmul.f32 %v1361, %v1351
        %v1363 = vmul.f32 %v1361, %v1352
        %v1364 = vstv %s1360
        %v1365 = vmul.f32 %v1364, %v1357
        %v1366 = vmul.f32 %v1364, %v1358
        %v1367 = vadd.f32 %v1362, %v1365
        %v1368 = vadd.f32 %v1363, %v1366
        %v1371 = vcombine.low %v1367, %v1368
        %v1373 = vunpack.c.l.s4 1983009808
        %v1374 = vunpack.c.0.s8 %v1373
        %v1375 = vlaneseq
        %v1376 = vshrl.u32 %v1375, 7
        %v1377 = vsub.s32 %v1374, %v1376
        %v1378 = vrot.slane %v1371, %v1377
        %v1379 = vrot.slane %v1378, 7
        %v1381 = vsel %vm271, %v1379, 0.0
        %v1382 = vadd.f32 %v1346, %v1381
        %1383 = vrot.lane.b32.xlu0 %v1173, 125
        %v1384 = vpop.permute.xlu0 %1383
        %1385 = vrot.lane.b32.xlu0 %v1177, 125
        %v1386 = vpop.permute.xlu0 %1385
        %v1387 = vsel %vm538, %v1384, %v1386
        %v1388 = vsel %vm538, %v1386, %v1384
        %1389 = vrot.lane.b32.xlu0 %v1190, 125
        %v1390 = vpop.permute.xlu0 %1389
        %1391 = vrot.lane.b32.xlu0 %v1194, 125
        %v1392 = vpop.permute.xlu0 %1391
        %v1393 = vsel %vm538, %v1390, %v1392
        %v1394 = vsel %vm538, %v1392, %v1390
        %s1395 = sld [smem:[#allocation2 + $0x1b]]
        %s1396 = sld [smem:[#allocation2 + $0x4c]]
        %v1397 = vstv %s1395
        %v1398 = vmul.f32 %v1397, %v1387
        %v1399 = vmul.f32 %v1397, %v1388
        %v1400 = vstv %s1396
        %v1401 = vmul.f32 %v1400, %v1393
        %v1402 = vmul.f32 %v1400, %v1394
        %v1403 = vadd.f32 %v1398, %v1401
        %v1404 = vadd.f32 %v1399, %v1402
        %v1407 = vcombine.low %v1403, %v1404
        %v1409 = vunpack.c.l.s4 1983009808
        %v1410 = vunpack.c.0.s8 %v1409
        %v1411 = vlaneseq
        %v1412 = vshrl.u32 %v1411, 7
        %v1413 = vsub.s32 %v1410, %v1412
        %v1414 = vrot.slane %v1407, %v1413
        %v1415 = vrot.slane %v1414, 7
        %v1417 = vsel %vm275, %v1415, 0.0
        %v1418 = vadd.f32 %v1382, %v1417
        %1419 = vrot.lane.b32.xlu0 %v233, 112
        %v1420 = vpop.permute.xlu0 %1419
        %1421 = vrot.lane.b32.xlu0 %v234, 112
        %v1422 = vpop.permute.xlu0 %1421
        %vm1423 = vcmp.lt.s32.totalorder %v281, 112
        %v1424 = vsel %vm1423, %v1420, %v1422
        %v1425 = vsel %vm1423, %v1422, %v1420
        %1426 = vrot.lane.b32.xlu0 %v241, 112
        %v1427 = vpop.permute.xlu0 %1426
        %1428 = vrot.lane.b32.xlu0 %v248, 112
        %v1429 = vpop.permute.xlu0 %1428
        %v1430 = vsel %vm1423, %v1427, %v1429
        %v1431 = vsel %vm1423, %v1429, %v1427
        %v1434 = vcombine.low %v1424, %v1425
        %v1436 = vunpack.c.l.s4 1983009808
        %v1437 = vunpack.c.0.s8 %v1436
        %v1438 = vlaneseq
        %v1439 = vshrl.u32 %v1438, 7
        %v1440 = vsub.s32 %v1437, %v1439
        %v1441 = vrot.slane %v1434, %v1440
        %v1443 = vsel %vm267, %v1441, 0.0
        %v1446 = vcombine.low %v1430, %v1431
        %v1448 = vunpack.c.l.s4 1983009808
        %v1449 = vunpack.c.0.s8 %v1448
        %v1450 = vlaneseq
        %v1451 = vshrl.u32 %v1450, 7
        %v1452 = vsub.s32 %v1449, %v1451
        %v1453 = vrot.slane %v1446, %v1452
        %v1455 = vsel %vm267, %v1453, 0.0
        %v1457 = vlaneseq
        %v1458 = vshrl.u32 %v1457, 7
        %v1459 = vsub.s32 0, %v1458
        %v1460 = vrot.slane %v1443, %v1459
        %v1461 = vlaneseq
        %v1462 = vshrl.u32 %v1461, 7
        %v1463 = vsub.s32 2, %v1462
        %v1464 = vrot.slane %v1443, %v1463
        %1467 = vrot.lane.b32.xlu0 %v1460, 3
        %v1468 = vpop.permute.xlu0 %1467
        %1469 = vrot.lane.b32.xlu0 %v1464, 3
        %v1470 = vpop.permute.xlu0 %1469
        %v1471 = vsel %vm330, %v1468, %v1470
        %v1472 = vsel %vm330, %v1470, %v1468
        %v1474 = vlaneseq
        %v1475 = vshrl.u32 %v1474, 7
        %v1476 = vsub.s32 0, %v1475
        %v1477 = vrot.slane %v1455, %v1476
        %v1478 = vlaneseq
        %v1479 = vshrl.u32 %v1478, 7
        %v1480 = vsub.s32 2, %v1479
        %v1481 = vrot.slane %v1455, %v1480
        %1484 = vrot.lane.b32.xlu0 %v1477, 3
        %v1485 = vpop.permute.xlu0 %1484
        %1486 = vrot.lane.b32.xlu0 %v1481, 3
        %v1487 = vpop.permute.xlu0 %1486
        %v1488 = vsel %vm330, %v1485, %v1487
        %v1489 = vsel %vm330, %v1487, %v1485
        %s1490 = sld [smem:[#allocation2 + $0x1c]]
        %s1491 = sld [smem:[#allocation2 + $0x4d]]
        %v1492 = vstv %s1490
        %v1493 = vmul.f32 %v1492, %v1472
        %v1494 = vmul.f32 %v1492, %v1471
        %v1495 = vstv %s1491
        %v1496 = vmul.f32 %v1495, %v1489
        %v1497 = vmul.f32 %v1495, %v1488
        %v1498 = vadd.f32 %v1493, %v1496
        %v1499 = vadd.f32 %v1494, %v1497
        %v1502 = vcombine.low %v1498, %v1499
        %v1504 = vunpack.c.l.s4 1983009808
        %v1505 = vunpack.c.0.s8 %v1504
        %v1506 = vlaneseq
        %v1507 = vshrl.u32 %v1506, 7
        %v1508 = vsub.s32 %v1505, %v1507
        %v1509 = vrot.slane %v1502, %v1508
        %v1510 = vrot.slane %v1509, 7
        %v1512 = vsel %vm252, %v1510, 0.0
        %v1513 = vadd.f32 %v1418, %v1512
        %1514 = vrot.lane.b32.xlu0 %v1460, 2
        %v1515 = vpop.permute.xlu0 %1514
        %1516 = vrot.lane.b32.xlu0 %v1464, 2
        %v1517 = vpop.permute.xlu0 %1516
        %v1518 = vsel %vm378, %v1515, %v1517
        %v1519 = vsel %vm378, %v1517, %v1515
        %1520 = vrot.lane.b32.xlu0 %v1477, 2
        %v1521 = vpop.permute.xlu0 %1520
        %1522 = vrot.lane.b32.xlu0 %v1481, 2
        %v1523 = vpop.permute.xlu0 %1522
        %v1524 = vsel %vm378, %v1521, %v1523
        %v1525 = vsel %vm378, %v1523, %v1521
        %s1526 = sld [smem:[#allocation2 + $0x1d]]
        %s1527 = sld [smem:[#allocation2 + $0x4e]]
        %v1528 = vstv %s1526
        %v1529 = vmul.f32 %v1528, %v1519
        %v1530 = vmul.f32 %v1528, %v1518
        %v1531 = vstv %s1527
        %v1532 = vmul.f32 %v1531, %v1525
        %v1533 = vmul.f32 %v1531, %v1524
        %v1534 = vadd.f32 %v1529, %v1532
        %v1535 = vadd.f32 %v1530, %v1533
        %v1538 = vcombine.low %v1534, %v1535
        %v1540 = vunpack.c.l.s4 1983009808
        %v1541 = vunpack.c.0.s8 %v1540
        %v1542 = vlaneseq
        %v1543 = vshrl.u32 %v1542, 7
        %v1544 = vsub.s32 %v1541, %v1543
        %v1545 = vrot.slane %v1538, %v1544
        %v1546 = vrot.slane %v1545, 7
        %v1548 = vsel %vm256, %v1546, 0.0
        %v1549 = vadd.f32 %v1513, %v1548
        %1550 = vrot.lane.b32.xlu0 %v1460, 1
        %v1551 = vpop.permute.xlu0 %1550
        %1552 = vrot.lane.b32.xlu0 %v1464, 1
        %v1553 = vpop.permute.xlu0 %1552
        %v1554 = vsel %vm415, %v1551, %v1553
        %v1555 = vsel %vm415, %v1553, %v1551
        %1556 = vrot.lane.b32.xlu0 %v1477, 1
        %v1557 = vpop.permute.xlu0 %1556
        %1558 = vrot.lane.b32.xlu0 %v1481, 1
        %v1559 = vpop.permute.xlu0 %1558
        %v1560 = vsel %vm415, %v1557, %v1559
        %v1561 = vsel %vm415, %v1559, %v1557
        %s1562 = sld [smem:[#allocation2 + $0x1e]]
        %s1563 = sld [smem:[#allocation2 + $0x4f]]
        %v1564 = vstv %s1562
        %v1565 = vmul.f32 %v1564, %v1555
        %v1566 = vmul.f32 %v1564, %v1554
        %v1567 = vstv %s1563
        %v1568 = vmul.f32 %v1567, %v1561
        %v1569 = vmul.f32 %v1567, %v1560
        %v1570 = vadd.f32 %v1565, %v1568
        %v1571 = vadd.f32 %v1566, %v1569
        %v1574 = vcombine.low %v1570, %v1571
        %v1576 = vunpack.c.l.s4 1983009808
        %v1577 = vunpack.c.0.s8 %v1576
        %v1578 = vlaneseq
        %v1579 = vshrl.u32 %v1578, 7
        %v1580 = vsub.s32 %v1577, %v1579
        %v1581 = vrot.slane %v1574, %v1580
        %v1582 = vrot.slane %v1581, 7
        %v1584 = vsel %vm260, %v1582, 0.0
        %v1585 = vadd.f32 %v1549, %v1584
        %s1586 = sld [smem:[#allocation2 + $0x1f]]
        %s1587 = sld [smem:[#allocation2 + $0x50]]
        %v1588 = vstv %s1586
        %v1589 = vmul.f32 %v1588, %v1443
        %v1590 = vstv %s1587
        %v1591 = vmul.f32 %v1590, %v1455
        %v1592 = vadd.f32 %v1589, %v1591
        %v1594 = vrot.slane %v1592, 7
        %v1596 = vsel %vm263, %v1594, 0.0
        %v1597 = vadd.f32 %v1585, %v1596
        %1598 = vrot.lane.b32.xlu0 %v1460, 127
        %v1599 = vpop.permute.xlu0 %1598
        %1600 = vrot.lane.b32.xlu0 %v1464, 127
        %v1601 = vpop.permute.xlu0 %1600
        %v1602 = vsel %vm464, %v1599, %v1601
        %v1603 = vsel %vm464, %v1601, %v1599
        %1604 = vrot.lane.b32.xlu0 %v1477, 127
        %v1605 = vpop.permute.xlu0 %1604
        %1606 = vrot.lane.b32.xlu0 %v1481, 127
        %v1607 = vpop.permute.xlu0 %1606
        %v1608 = vsel %vm464, %v1605, %v1607
        %v1609 = vsel %vm464, %v1607, %v1605
        %s1610 = sld [smem:[#allocation2 + $0x20]]
        %s1611 = sld [smem:[#allocation2 + $0x51]]
        %v1612 = vstv %s1610
        %v1613 = vmul.f32 %v1612, %v1602
        %v1614 = vmul.f32 %v1612, %v1603
        %v1615 = vstv %s1611
        %v1616 = vmul.f32 %v1615, %v1608
        %v1617 = vmul.f32 %v1615, %v1609
        %v1618 = vadd.f32 %v1613, %v1616
        %v1619 = vadd.f32 %v1614, %v1617
        %v1622 = vcombine.low %v1618, %v1619
        %v1624 = vunpack.c.l.s4 1983009808
        %v1625 = vunpack.c.0.s8 %v1624
        %v1626 = vlaneseq
        %v1627 = vshrl.u32 %v1626, 7
        %v1628 = vsub.s32 %v1625, %v1627
        %v1629 = vrot.slane %v1622, %v1628
        %v1630 = vrot.slane %v1629, 7
        %v1632 = vsel %vm267, %v1630, 0.0
        %v1633 = vadd.f32 %v1597, %v1632
        %1634 = vrot.lane.b32.xlu0 %v1460, 126
        %v1635 = vpop.permute.xlu0 %1634
        %1636 = vrot.lane.b32.xlu0 %v1464, 126
        %v1637 = vpop.permute.xlu0 %1636
        %v1638 = vsel %vm501, %v1635, %v1637
        %v1639 = vsel %vm501, %v1637, %v1635
        %1640 = vrot.lane.b32.xlu0 %v1477, 126
        %v1641 = vpop.permute.xlu0 %1640
        %1642 = vrot.lane.b32.xlu0 %v1481, 126
        %v1643 = vpop.permute.xlu0 %1642
        %v1644 = vsel %vm501, %v1641, %v1643
        %v1645 = vsel %vm501, %v1643, %v1641
        %s1646 = sld [smem:[#allocation2 + $0x21]]
        %s1647 = sld [smem:[#allocation2 + $0x52]]
        %v1648 = vstv %s1646
        %v1649 = vmul.f32 %v1648, %v1638
        %v1650 = vmul.f32 %v1648, %v1639
        %v1651 = vstv %s1647
        %v1652 = vmul.f32 %v1651, %v1644
        %v1653 = vmul.f32 %v1651, %v1645
        %v1654 = vadd.f32 %v1649, %v1652
        %v1655 = vadd.f32 %v1650, %v1653
        %v1658 = vcombine.low %v1654, %v1655
        %v1660 = vunpack.c.l.s4 1983009808
        %v1661 = vunpack.c.0.s8 %v1660
        %v1662 = vlaneseq
        %v1663 = vshrl.u32 %v1662, 7
        %v1664 = vsub.s32 %v1661, %v1663
        %v1665 = vrot.slane %v1658, %v1664
        %v1666 = vrot.slane %v1665, 7
        %v1668 = vsel %vm271, %v1666, 0.0
        %v1669 = vadd.f32 %v1633, %v1668
        %1670 = vrot.lane.b32.xlu0 %v1460, 125
        %v1671 = vpop.permute.xlu0 %1670
        %1672 = vrot.lane.b32.xlu0 %v1464, 125
        %v1673 = vpop.permute.xlu0 %1672
        %v1674 = vsel %vm538, %v1671, %v1673
        %v1675 = vsel %vm538, %v1673, %v1671
        %1676 = vrot.lane.b32.xlu0 %v1477, 125
        %v1677 = vpop.permute.xlu0 %1676
        %1678 = vrot.lane.b32.xlu0 %v1481, 125
        %v1679 = vpop.permute.xlu0 %1678
        %v1680 = vsel %vm538, %v1677, %v1679
        %v1681 = vsel %vm538, %v1679, %v1677
        %s1682 = sld [smem:[#allocation2 + $0x22]]
        %s1683 = sld [smem:[#allocation2 + $0x53]]
        %v1684 = vstv %s1682
        %v1685 = vmul.f32 %v1684, %v1674
        %v1686 = vmul.f32 %v1684, %v1675
        %v1687 = vstv %s1683
        %v1688 = vmul.f32 %v1687, %v1680
        %v1689 = vmul.f32 %v1687, %v1681
        %v1690 = vadd.f32 %v1685, %v1688
        %v1691 = vadd.f32 %v1686, %v1689
        %v1694 = vcombine.low %v1690, %v1691
        %v1696 = vunpack.c.l.s4 1983009808
        %v1697 = vunpack.c.0.s8 %v1696
        %v1698 = vlaneseq
        %v1699 = vshrl.u32 %v1698, 7
        %v1700 = vsub.s32 %v1697, %v1699
        %v1701 = vrot.slane %v1694, %v1700
        %v1702 = vrot.slane %v1701, 7
        %v1704 = vsel %vm275, %v1702, 0.0
        %v1705 = vadd.f32 %v1669, %v1704
        %1706 = vrot.lane.b32.xlu0 %v233, 96
        %v1707 = vpop.permute.xlu0 %1706
        %1708 = vrot.lane.b32.xlu0 %v234, 96
        %v1709 = vpop.permute.xlu0 %1708
        %vm1710 = vcmp.lt.s32.totalorder %v281, 96
        %v1711 = vsel %vm1710, %v1707, %v1709
        %v1712 = vsel %vm1710, %v1709, %v1707
        %1713 = vrot.lane.b32.xlu0 %v241, 96
        %v1714 = vpop.permute.xlu0 %1713
        %1715 = vrot.lane.b32.xlu0 %v248, 96
        %v1716 = vpop.permute.xlu0 %1715
        %v1717 = vsel %vm1710, %v1714, %v1716
        %v1718 = vsel %vm1710, %v1716, %v1714
        %v1721 = vcombine.low %v1711, %v1712
        %v1723 = vunpack.c.l.s4 1983009808
        %v1724 = vunpack.c.0.s8 %v1723
        %v1725 = vlaneseq
        %v1726 = vshrl.u32 %v1725, 7
        %v1727 = vsub.s32 %v1724, %v1726
        %v1728 = vrot.slane %v1721, %v1727
        %v1730 = vsel %vm271, %v1728, 0.0
        %v1733 = vcombine.low %v1717, %v1718
        %v1735 = vunpack.c.l.s4 1983009808
        %v1736 = vunpack.c.0.s8 %v1735
        %v1737 = vlaneseq
        %v1738 = vshrl.u32 %v1737, 7
        %v1739 = vsub.s32 %v1736, %v1738
        %v1740 = vrot.slane %v1733, %v1739
        %v1742 = vsel %vm271, %v1740, 0.0
        %v1744 = vlaneseq
        %v1745 = vshrl.u32 %v1744, 7
        %v1746 = vsub.s32 0, %v1745
        %v1747 = vrot.slane %v1730, %v1746
        %v1748 = vlaneseq
        %v1749 = vshrl.u32 %v1748, 7
        %v1750 = vsub.s32 2, %v1749
        %v1751 = vrot.slane %v1730, %v1750
        %1754 = vrot.lane.b32.xlu0 %v1747, 3
        %v1755 = vpop.permute.xlu0 %1754
        %1756 = vrot.lane.b32.xlu0 %v1751, 3
        %v1757 = vpop.permute.xlu0 %1756
        %v1758 = vsel %vm330, %v1755, %v1757
        %v1759 = vsel %vm330, %v1757, %v1755
        %v1761 = vlaneseq
        %v1762 = vshrl.u32 %v1761, 7
        %v1763 = vsub.s32 0, %v1762
        %v1764 = vrot.slane %v1742, %v1763
        %v1765 = vlaneseq
        %v1766 = vshrl.u32 %v1765, 7
        %v1767 = vsub.s32 2, %v1766
        %v1768 = vrot.slane %v1742, %v1767
        %1771 = vrot.lane.b32.xlu0 %v1764, 3
        %v1772 = vpop.permute.xlu0 %1771
        %1773 = vrot.lane.b32.xlu0 %v1768, 3
        %v1774 = vpop.permute.xlu0 %1773
        %v1775 = vsel %vm330, %v1772, %v1774
        %v1776 = vsel %vm330, %v1774, %v1772
        %s1777 = sld [smem:[#allocation2 + $0x23]]
        %s1778 = sld [smem:[#allocation2 + $0x54]]
        %v1779 = vstv %s1777
        %v1780 = vmul.f32 %v1779, %v1759
        %v1781 = vmul.f32 %v1779, %v1758
        %v1782 = vstv %s1778
        %v1783 = vmul.f32 %v1782, %v1776
        %v1784 = vmul.f32 %v1782, %v1775
        %v1785 = vadd.f32 %v1780, %v1783
        %v1786 = vadd.f32 %v1781, %v1784
        %v1789 = vcombine.low %v1785, %v1786
        %v1791 = vunpack.c.l.s4 1983009808
        %v1792 = vunpack.c.0.s8 %v1791
        %v1793 = vlaneseq
        %v1794 = vshrl.u32 %v1793, 7
        %v1795 = vsub.s32 %v1792, %v1794
        %v1796 = vrot.slane %v1789, %v1795
        %v1797 = vrot.slane %v1796, 7
        %v1799 = vsel %vm252, %v1797, 0.0
        %v1800 = vadd.f32 %v1705, %v1799
        %1801 = vrot.lane.b32.xlu0 %v1747, 2
        %v1802 = vpop.permute.xlu0 %1801
        %1803 = vrot.lane.b32.xlu0 %v1751, 2
        %v1804 = vpop.permute.xlu0 %1803
        %v1805 = vsel %vm378, %v1802, %v1804
        %v1806 = vsel %vm378, %v1804, %v1802
        %1807 = vrot.lane.b32.xlu0 %v1764, 2
        %v1808 = vpop.permute.xlu0 %1807
        %1809 = vrot.lane.b32.xlu0 %v1768, 2
        %v1810 = vpop.permute.xlu0 %1809
        %v1811 = vsel %vm378, %v1808, %v1810
        %v1812 = vsel %vm378, %v1810, %v1808
        %s1813 = sld [smem:[#allocation2 + $0x24]]
        %s1814 = sld [smem:[#allocation2 + $0x55]]
        %v1815 = vstv %s1813
        %v1816 = vmul.f32 %v1815, %v1806
        %v1817 = vmul.f32 %v1815, %v1805
        %v1818 = vstv %s1814
        %v1819 = vmul.f32 %v1818, %v1812
        %v1820 = vmul.f32 %v1818, %v1811
        %v1821 = vadd.f32 %v1816, %v1819
        %v1822 = vadd.f32 %v1817, %v1820
        %v1825 = vcombine.low %v1821, %v1822
        %v1827 = vunpack.c.l.s4 1983009808
        %v1828 = vunpack.c.0.s8 %v1827
        %v1829 = vlaneseq
        %v1830 = vshrl.u32 %v1829, 7
        %v1831 = vsub.s32 %v1828, %v1830
        %v1832 = vrot.slane %v1825, %v1831
        %v1833 = vrot.slane %v1832, 7
        %v1835 = vsel %vm256, %v1833, 0.0
        %v1836 = vadd.f32 %v1800, %v1835
        %1837 = vrot.lane.b32.xlu0 %v1747, 1
        %v1838 = vpop.permute.xlu0 %1837
        %1839 = vrot.lane.b32.xlu0 %v1751, 1
        %v1840 = vpop.permute.xlu0 %1839
        %v1841 = vsel %vm415, %v1838, %v1840
        %v1842 = vsel %vm415, %v1840, %v1838
        %1843 = vrot.lane.b32.xlu0 %v1764, 1
        %v1844 = vpop.permute.xlu0 %1843
        %1845 = vrot.lane.b32.xlu0 %v1768, 1
        %v1846 = vpop.permute.xlu0 %1845
        %v1847 = vsel %vm415, %v1844, %v1846
        %v1848 = vsel %vm415, %v1846, %v1844
        %s1849 = sld [smem:[#allocation2 + $0x25]]
        %s1850 = sld [smem:[#allocation2 + $0x56]]
        %v1851 = vstv %s1849
        %v1852 = vmul.f32 %v1851, %v1842
        %v1853 = vmul.f32 %v1851, %v1841
        %v1854 = vstv %s1850
        %v1855 = vmul.f32 %v1854, %v1848
        %v1856 = vmul.f32 %v1854, %v1847
        %v1857 = vadd.f32 %v1852, %v1855
        %v1858 = vadd.f32 %v1853, %v1856
        %v1861 = vcombine.low %v1857, %v1858
        %v1863 = vunpack.c.l.s4 1983009808
        %v1864 = vunpack.c.0.s8 %v1863
        %v1865 = vlaneseq
        %v1866 = vshrl.u32 %v1865, 7
        %v1867 = vsub.s32 %v1864, %v1866
        %v1868 = vrot.slane %v1861, %v1867
        %v1869 = vrot.slane %v1868, 7
        %v1871 = vsel %vm260, %v1869, 0.0
        %v1872 = vadd.f32 %v1836, %v1871
        %s1873 = sld [smem:[#allocation2 + $0x26]]
        %s1874 = sld [smem:[#allocation2 + $0x57]]
        %v1875 = vstv %s1873
        %v1876 = vmul.f32 %v1875, %v1730
        %v1877 = vstv %s1874
        %v1878 = vmul.f32 %v1877, %v1742
        %v1879 = vadd.f32 %v1876, %v1878
        %v1881 = vrot.slane %v1879, 7
        %v1883 = vsel %vm263, %v1881, 0.0
        %v1884 = vadd.f32 %v1872, %v1883
        %1885 = vrot.lane.b32.xlu0 %v1747, 127
        %v1886 = vpop.permute.xlu0 %1885
        %1887 = vrot.lane.b32.xlu0 %v1751, 127
        %v1888 = vpop.permute.xlu0 %1887
        %v1889 = vsel %vm464, %v1886, %v1888
        %v1890 = vsel %vm464, %v1888, %v1886
        %1891 = vrot.lane.b32.xlu0 %v1764, 127
        %v1892 = vpop.permute.xlu0 %1891
        %1893 = vrot.lane.b32.xlu0 %v1768, 127
        %v1894 = vpop.permute.xlu0 %1893
        %v1895 = vsel %vm464, %v1892, %v1894
        %v1896 = vsel %vm464, %v1894, %v1892
        %s1897 = sld [smem:[#allocation2 + $0x27]]
        %s1898 = sld [smem:[#allocation2 + $0x58]]
        %v1899 = vstv %s1897
        %v1900 = vmul.f32 %v1899, %v1889
        %v1901 = vmul.f32 %v1899, %v1890
        %v1902 = vstv %s1898
        %v1903 = vmul.f32 %v1902, %v1895
        %v1904 = vmul.f32 %v1902, %v1896
        %v1905 = vadd.f32 %v1900, %v1903
        %v1906 = vadd.f32 %v1901, %v1904
        %v1909 = vcombine.low %v1905, %v1906
        %v1911 = vunpack.c.l.s4 1983009808
        %v1912 = vunpack.c.0.s8 %v1911
        %v1913 = vlaneseq
        %v1914 = vshrl.u32 %v1913, 7
        %v1915 = vsub.s32 %v1912, %v1914
        %v1916 = vrot.slane %v1909, %v1915
        %v1917 = vrot.slane %v1916, 7
        %v1919 = vsel %vm267, %v1917, 0.0
        %v1920 = vadd.f32 %v1884, %v1919
        %1921 = vrot.lane.b32.xlu0 %v1747, 126
        %v1922 = vpop.permute.xlu0 %1921
        %1923 = vrot.lane.b32.xlu0 %v1751, 126
        %v1924 = vpop.permute.xlu0 %1923
        %v1925 = vsel %vm501, %v1922, %v1924
        %v1926 = vsel %vm501, %v1924, %v1922
        %1927 = vrot.lane.b32.xlu0 %v1764, 126
        %v1928 = vpop.permute.xlu0 %1927
        %1929 = vrot.lane.b32.xlu0 %v1768, 126
        %v1930 = vpop.permute.xlu0 %1929
        %v1931 = vsel %vm501, %v1928, %v1930
        %v1932 = vsel %vm501, %v1930, %v1928
        %s1933 = sld [smem:[#allocation2 + $0x28]]
        %s1934 = sld [smem:[#allocation2 + $0x59]]
        %v1935 = vstv %s1933
        %v1936 = vmul.f32 %v1935, %v1925
        %v1937 = vmul.f32 %v1935, %v1926
        %v1938 = vstv %s1934
        %v1939 = vmul.f32 %v1938, %v1931
        %v1940 = vmul.f32 %v1938, %v1932
        %v1941 = vadd.f32 %v1936, %v1939
        %v1942 = vadd.f32 %v1937, %v1940
        %v1945 = vcombine.low %v1941, %v1942
        %v1947 = vunpack.c.l.s4 1983009808
        %v1948 = vunpack.c.0.s8 %v1947
        %v1949 = vlaneseq
        %v1950 = vshrl.u32 %v1949, 7
        %v1951 = vsub.s32 %v1948, %v1950
        %v1952 = vrot.slane %v1945, %v1951
        %v1953 = vrot.slane %v1952, 7
        %v1955 = vsel %vm271, %v1953, 0.0
        %v1956 = vadd.f32 %v1920, %v1955
        %1957 = vrot.lane.b32.xlu0 %v1747, 125
        %v1958 = vpop.permute.xlu0 %1957
        %1959 = vrot.lane.b32.xlu0 %v1751, 125
        %v1960 = vpop.permute.xlu0 %1959
        %v1961 = vsel %vm538, %v1958, %v1960
        %v1962 = vsel %vm538, %v1960, %v1958
        %1963 = vrot.lane.b32.xlu0 %v1764, 125
        %v1964 = vpop.permute.xlu0 %1963
        %1965 = vrot.lane.b32.xlu0 %v1768, 125
        %v1966 = vpop.permute.xlu0 %1965
        %v1967 = vsel %vm538, %v1964, %v1966
        %v1968 = vsel %vm538, %v1966, %v1964
        %s1969 = sld [smem:[#allocation2 + $0x29]]
        %s1970 = sld [smem:[#allocation2 + $0x5a]]
        %v1971 = vstv %s1969
        %v1972 = vmul.f32 %v1971, %v1961
        %v1973 = vmul.f32 %v1971, %v1962
        %v1974 = vstv %s1970
        %v1975 = vmul.f32 %v1974, %v1967
        %v1976 = vmul.f32 %v1974, %v1968
        %v1977 = vadd.f32 %v1972, %v1975
        %v1978 = vadd.f32 %v1973, %v1976
        %v1981 = vcombine.low %v1977, %v1978
        %v1983 = vunpack.c.l.s4 1983009808
        %v1984 = vunpack.c.0.s8 %v1983
        %v1985 = vlaneseq
        %v1986 = vshrl.u32 %v1985, 7
        %v1987 = vsub.s32 %v1984, %v1986
        %v1988 = vrot.slane %v1981, %v1987
        %v1989 = vrot.slane %v1988, 7
        %v1991 = vsel %vm275, %v1989, 0.0
        %v1992 = vadd.f32 %v1956, %v1991
        %1993 = vrot.lane.b32.xlu0 %v233, 80
        %v1994 = vpop.permute.xlu0 %1993
        %1995 = vrot.lane.b32.xlu0 %v234, 80
        %v1996 = vpop.permute.xlu0 %1995
        %vm1997 = vcmp.lt.s32.totalorder %v281, 80
        %v1998 = vsel %vm1997, %v1994, %v1996
        %v1999 = vsel %vm1997, %v1996, %v1994
        %2000 = vrot.lane.b32.xlu0 %v241, 80
        %v2001 = vpop.permute.xlu0 %2000
        %2002 = vrot.lane.b32.xlu0 %v248, 80
        %v2003 = vpop.permute.xlu0 %2002
        %v2004 = vsel %vm1997, %v2001, %v2003
        %v2005 = vsel %vm1997, %v2003, %v2001
        %v2008 = vcombine.low %v1998, %v1999
        %v2010 = vunpack.c.l.s4 1983009808
        %v2011 = vunpack.c.0.s8 %v2010
        %v2012 = vlaneseq
        %v2013 = vshrl.u32 %v2012, 7
        %v2014 = vsub.s32 %v2011, %v2013
        %v2015 = vrot.slane %v2008, %v2014
        %v2017 = vsel %vm275, %v2015, 0.0
        %v2020 = vcombine.low %v2004, %v2005
        %v2022 = vunpack.c.l.s4 1983009808
        %v2023 = vunpack.c.0.s8 %v2022
        %v2024 = vlaneseq
        %v2025 = vshrl.u32 %v2024, 7
        %v2026 = vsub.s32 %v2023, %v2025
        %v2027 = vrot.slane %v2020, %v2026
        %v2029 = vsel %vm275, %v2027, 0.0
        %v2031 = vlaneseq
        %v2032 = vshrl.u32 %v2031, 7
        %v2033 = vsub.s32 0, %v2032
        %v2034 = vrot.slane %v2017, %v2033
        %v2035 = vlaneseq
        %v2036 = vshrl.u32 %v2035, 7
        %v2037 = vsub.s32 2, %v2036
        %v2038 = vrot.slane %v2017, %v2037
        %2041 = vrot.lane.b32.xlu0 %v2034, 3
        %v2042 = vpop.permute.xlu0 %2041
        %2043 = vrot.lane.b32.xlu0 %v2038, 3
        %v2044 = vpop.permute.xlu0 %2043
        %v2045 = vsel %vm330, %v2042, %v2044
        %v2046 = vsel %vm330, %v2044, %v2042
        %v2048 = vlaneseq
        %v2049 = vshrl.u32 %v2048, 7
        %v2050 = vsub.s32 0, %v2049
        %v2051 = vrot.slane %v2029, %v2050
        %v2052 = vlaneseq
        %v2053 = vshrl.u32 %v2052, 7
        %v2054 = vsub.s32 2, %v2053
        %v2055 = vrot.slane %v2029, %v2054
        %2058 = vrot.lane.b32.xlu0 %v2051, 3
        %v2059 = vpop.permute.xlu0 %2058
        %2060 = vrot.lane.b32.xlu0 %v2055, 3
        %v2061 = vpop.permute.xlu0 %2060
        %v2062 = vsel %vm330, %v2059, %v2061
        %v2063 = vsel %vm330, %v2061, %v2059
        %s2064 = sld [smem:[#allocation2 + $0x2a]]
        %s2065 = sld [smem:[#allocation2 + $0x5b]]
        %v2066 = vstv %s2064
        %v2067 = vmul.f32 %v2066, %v2046
        %v2068 = vmul.f32 %v2066, %v2045
        %v2069 = vstv %s2065
        %v2070 = vmul.f32 %v2069, %v2063
        %v2071 = vmul.f32 %v2069, %v2062
        %v2072 = vadd.f32 %v2067, %v2070
        %v2073 = vadd.f32 %v2068, %v2071
        %v2076 = vcombine.low %v2072, %v2073
        %v2078 = vunpack.c.l.s4 1983009808
        %v2079 = vunpack.c.0.s8 %v2078
        %v2080 = vlaneseq
        %v2081 = vshrl.u32 %v2080, 7
        %v2082 = vsub.s32 %v2079, %v2081
        %v2083 = vrot.slane %v2076, %v2082
        %v2084 = vrot.slane %v2083, 7
        %v2086 = vsel %vm252, %v2084, 0.0
        %v2087 = vadd.f32 %v1992, %v2086
        %2088 = vrot.lane.b32.xlu0 %v2034, 2
        %v2089 = vpop.permute.xlu0 %2088
        %2090 = vrot.lane.b32.xlu0 %v2038, 2
        %v2091 = vpop.permute.xlu0 %2090
        %v2092 = vsel %vm378, %v2089, %v2091
        %v2093 = vsel %vm378, %v2091, %v2089
        %2094 = vrot.lane.b32.xlu0 %v2051, 2
        %v2095 = vpop.permute.xlu0 %2094
        %2096 = vrot.lane.b32.xlu0 %v2055, 2
        %v2097 = vpop.permute.xlu0 %2096
        %v2098 = vsel %vm378, %v2095, %v2097
        %v2099 = vsel %vm378, %v2097, %v2095
        %s2100 = sld [smem:[#allocation2 + $0x2b]]
        %s2101 = sld [smem:[#allocation2 + $0x5c]]
        %v2102 = vstv %s2100
        %v2103 = vmul.f32 %v2102, %v2093
        %v2104 = vmul.f32 %v2102, %v2092
        %v2105 = vstv %s2101
        %v2106 = vmul.f32 %v2105, %v2099
        %v2107 = vmul.f32 %v2105, %v2098
        %v2108 = vadd.f32 %v2103, %v2106
        %v2109 = vadd.f32 %v2104, %v2107
        %v2112 = vcombine.low %v2108, %v2109
        %v2114 = vunpack.c.l.s4 1983009808
        %v2115 = vunpack.c.0.s8 %v2114
        %v2116 = vlaneseq
        %v2117 = vshrl.u32 %v2116, 7
        %v2118 = vsub.s32 %v2115, %v2117
        %v2119 = vrot.slane %v2112, %v2118
        %v2120 = vrot.slane %v2119, 7
        %v2122 = vsel %vm256, %v2120, 0.0
        %v2123 = vadd.f32 %v2087, %v2122
        %2124 = vrot.lane.b32.xlu0 %v2034, 1
        %v2125 = vpop.permute.xlu0 %2124
        %2126 = vrot.lane.b32.xlu0 %v2038, 1
        %v2127 = vpop.permute.xlu0 %2126
        %v2128 = vsel %vm415, %v2125, %v2127
        %v2129 = vsel %vm415, %v2127, %v2125
        %2130 = vrot.lane.b32.xlu0 %v2051, 1
        %v2131 = vpop.permute.xlu0 %2130
        %2132 = vrot.lane.b32.xlu0 %v2055, 1
        %v2133 = vpop.permute.xlu0 %2132
        %v2134 = vsel %vm415, %v2131, %v2133
        %v2135 = vsel %vm415, %v2133, %v2131
        %s2136 = sld [smem:[#allocation2 + $0x2c]]
        %s2137 = sld [smem:[#allocation2 + $0x5d]]
        %v2138 = vstv %s2136
        %v2139 = vmul.f32 %v2138, %v2129
        %v2140 = vmul.f32 %v2138, %v2128
        %v2141 = vstv %s2137
        %v2142 = vmul.f32 %v2141, %v2135
        %v2143 = vmul.f32 %v2141, %v2134
        %v2144 = vadd.f32 %v2139, %v2142
        %v2145 = vadd.f32 %v2140, %v2143
        %v2148 = vcombine.low %v2144, %v2145
        %v2150 = vunpack.c.l.s4 1983009808
        %v2151 = vunpack.c.0.s8 %v2150
        %v2152 = vlaneseq
        %v2153 = vshrl.u32 %v2152, 7
        %v2154 = vsub.s32 %v2151, %v2153
        %v2155 = vrot.slane %v2148, %v2154
        %v2156 = vrot.slane %v2155, 7
        %v2158 = vsel %vm260, %v2156, 0.0
        %v2159 = vadd.f32 %v2123, %v2158
        %s2160 = sld [smem:[#allocation2 + $0x2d]]
        %s2161 = sld [smem:[#allocation2 + $0x5e]]
        %v2162 = vstv %s2160
        %v2163 = vmul.f32 %v2162, %v2017
        %v2164 = vstv %s2161
        %v2165 = vmul.f32 %v2164, %v2029
        %v2166 = vadd.f32 %v2163, %v2165
        %v2168 = vrot.slane %v2166, 7
        %v2170 = vsel %vm263, %v2168, 0.0
        %v2171 = vadd.f32 %v2159, %v2170
        %2172 = vrot.lane.b32.xlu0 %v2034, 127
        %v2173 = vpop.permute.xlu0 %2172
        %2174 = vrot.lane.b32.xlu0 %v2038, 127
        %v2175 = vpop.permute.xlu0 %2174
        %v2176 = vsel %vm464, %v2173, %v2175
        %v2177 = vsel %vm464, %v2175, %v2173
        %2178 = vrot.lane.b32.xlu0 %v2051, 127
        %v2179 = vpop.permute.xlu0 %2178
        %2180 = vrot.lane.b32.xlu0 %v2055, 127
        %v2181 = vpop.permute.xlu0 %2180
        %v2182 = vsel %vm464, %v2179, %v2181
        %v2183 = vsel %vm464, %v2181, %v2179
        %s2184 = sld [smem:[#allocation2 + $0x2e]]
        %s2185 = sld [smem:[#allocation2 + $0x5f]]
        %v2186 = vstv %s2184
        %v2187 = vmul.f32 %v2186, %v2176
        %v2188 = vmul.f32 %v2186, %v2177
        %v2189 = vstv %s2185
        %v2190 = vmul.f32 %v2189, %v2182
        %v2191 = vmul.f32 %v2189, %v2183
        %v2192 = vadd.f32 %v2187, %v2190
        %v2193 = vadd.f32 %v2188, %v2191
        %v2196 = vcombine.low %v2192, %v2193
        %v2198 = vunpack.c.l.s4 1983009808
        %v2199 = vunpack.c.0.s8 %v2198
        %v2200 = vlaneseq
        %v2201 = vshrl.u32 %v2200, 7
        %v2202 = vsub.s32 %v2199, %v2201
        %v2203 = vrot.slane %v2196, %v2202
        %v2204 = vrot.slane %v2203, 7
        %v2206 = vsel %vm267, %v2204, 0.0
        %v2207 = vadd.f32 %v2171, %v2206
        %2208 = vrot.lane.b32.xlu0 %v2034, 126
        %v2209 = vpop.permute.xlu0 %2208
        %2210 = vrot.lane.b32.xlu0 %v2038, 126
        %v2211 = vpop.permute.xlu0 %2210
        %v2212 = vsel %vm501, %v2209, %v2211
        %v2213 = vsel %vm501, %v2211, %v2209
        %2214 = vrot.lane.b32.xlu0 %v2051, 126
        %v2215 = vpop.permute.xlu0 %2214
        %2216 = vrot.lane.b32.xlu0 %v2055, 126
        %v2217 = vpop.permute.xlu0 %2216
        %v2218 = vsel %vm501, %v2215, %v2217
        %v2219 = vsel %vm501, %v2217, %v2215
        %s2220 = sld [smem:[#allocation2 + $0x2f]]
        %s2221 = sld [smem:[#allocation2 + $0x60]]
        %v2222 = vstv %s2220
        %v2223 = vmul.f32 %v2222, %v2212
        %v2224 = vmul.f32 %v2222, %v2213
        %v2225 = vstv %s2221
        %v2226 = vmul.f32 %v2225, %v2218
        %v2227 = vmul.f32 %v2225, %v2219
        %v2228 = vadd.f32 %v2223, %v2226
        %v2229 = vadd.f32 %v2224, %v2227
        %v2232 = vcombine.low %v2228, %v2229
        %v2234 = vunpack.c.l.s4 1983009808
        %v2235 = vunpack.c.0.s8 %v2234
        %v2236 = vlaneseq
        %v2237 = vshrl.u32 %v2236, 7
        %v2238 = vsub.s32 %v2235, %v2237
        %v2239 = vrot.slane %v2232, %v2238
        %v2240 = vrot.slane %v2239, 7
        %v2242 = vsel %vm271, %v2240, 0.0
        %v2243 = vadd.f32 %v2207, %v2242
        %2244 = vrot.lane.b32.xlu0 %v2034, 125
        %v2245 = vpop.permute.xlu0 %2244
        %2246 = vrot.lane.b32.xlu0 %v2038, 125
        %v2247 = vpop.permute.xlu0 %2246
        %v2248 = vsel %vm538, %v2245, %v2247
        %v2249 = vsel %vm538, %v2247, %v2245
        %2250 = vrot.lane.b32.xlu0 %v2051, 125
        %v2251 = vpop.permute.xlu0 %2250
        %2252 = vrot.lane.b32.xlu0 %v2055, 125
        %v2253 = vpop.permute.xlu0 %2252
        %v2254 = vsel %vm538, %v2251, %v2253
        %v2255 = vsel %vm538, %v2253, %v2251
        %s2256 = sld [smem:[#allocation2 + $0x30]]
        %s2257 = sld [smem:[#allocation2 + $0x61]]
        %v2258 = vstv %s2256
        %v2259 = vmul.f32 %v2258, %v2248
        %v2260 = vmul.f32 %v2258, %v2249
        %v2261 = vstv %s2257
        %v2262 = vmul.f32 %v2261, %v2254
        %v2263 = vmul.f32 %v2261, %v2255
        %v2264 = vadd.f32 %v2259, %v2262
        %v2265 = vadd.f32 %v2260, %v2263
        %v2268 = vcombine.low %v2264, %v2265
        %v2270 = vunpack.c.l.s4 1983009808
        %v2271 = vunpack.c.0.s8 %v2270
        %v2272 = vlaneseq
        %v2273 = vshrl.u32 %v2272, 7
        %v2274 = vsub.s32 %v2271, %v2273
        %v2275 = vrot.slane %v2268, %v2274
        %v2276 = vrot.slane %v2275, 7
        %v2278 = vsel %vm275, %v2276, 0.0
        %v2279 = vadd.f32 %v2243, %v2278
        %v2280 = vxor.u32 %v2279, 2147483648
        %v2281 = vmul.f32 %v2280, 1.442695
        %v2282 = vpow.pop %v2281
        %v2283 = vadd.f32 %v2282, 1.0
        %v2284 = vrcp.pop %v2283
        %v2285 = vmul.f32 1.0, %v2284
        %v2287 = vlaneseq
        %v2288 = vshrl.u32 %v2287, 7
        %v2289 = vsub.s32 1, %v2288
        %v2290 = vrot.slane %v2285, %v2289
        %v2291 = vlaneseq
        %v2292 = vshrl.u32 %v2291, 7
        %v2293 = vsub.s32 3, %v2292
        %v2294 = vrot.slane %v2285, %v2293
        %v2297 = vlaneseq
        %v2298 = vshrl.u32 %v2297, 7
        %v2299 = vsub.s32 1, %v2298
        %v2300 = vrot.slane %v2290, %v2299
        %v2301 = vlaneseq
        %v2302 = vshrl.u32 %v2301, 7
        %v2303 = vsub.s32 1, %v2302
        %v2304 = vrot.slane %v2294, %v2303
        %v2307 = vcombine.low %v2300, %v2304
        %v2309 = vmul.f32 %v213, %v2307
        %2310 = vst [vmem:[%s211] sm:$0xff] %v2309
        %s2311 = sand.u32 %s98, 1
        %s2312 = scalar_lea.sflag [#allocation4], %s2311
        %s2313 = sand.u32 %s98, 1
        %s2314 = smul.addr %s2313, 8
        %s2315 = scalar_lea.vmem [#allocation9], %s2314
        // Predicated region
        $region45: #{tpu_custom_call.1} parent=31 // pred_check
          %p2316 = pneg %p108
        $region46: #{tpu_custom_call.1} parent=31 // pred_check_branch
          %2318 = sbr.rel (%p2316) target = $region48
        $region47: #{tpu_custom_call.1} parent=31 // pred_region
          %s2320 = ssub.s32 128, 128
          %2321 = vsyncadd %s2312, %s2320
          %s2322 = smul.addr %s22, 2
          %s2323 = smul.addr %s2322, 64
          %s2324 = scalar_lea.hbm %s3, %s2323
          %s2326 = sshll.u32 %s2315, 4
          %s2327 = int_to_ptr.vmem [resolvable:$true] %s2326
          %2329 = dma.vmem_to_hbm [thread:$0]  %s2327, 128, %s2324, %s2312
        $region48: #{tpu_custom_call.1} parent=31 // pred_fallthru
          _
      $region32: #{tpu_custom_call.1} parent=5 // pred_fallthru
        _
      %p2330 = scmp.le.s32.totalorder 2, %s17
      // Predicated region
      $region49: #{tpu_custom_call.1} parent=5 // pred_check
        %p2331 = pneg %p2330
      $region50: #{tpu_custom_call.1} parent=5 // pred_check_branch
        %2333 = sbr.rel (%p2331) target = $region52
      $region51: #{tpu_custom_call.1} parent=5 // pred_region
        %s2334 = ssub.s32 %s17, 2
        // Predicated region
        $region53: #{tpu_custom_call.1} parent=51 // pred_check
          %p2335 = pneg %p114
        $region54: #{tpu_custom_call.1} parent=51 // pred_check_branch
          %2337 = sbr.rel (%p2335) target = $region56
        $region55: #{tpu_custom_call.1} parent=51 // pred_region
          %s2338 = sand.u32 %s99, 1
          %s2339 = scalar_lea.sflag [#allocation4], %s2338
          %s2340 = sand.u32 %s99, 1
          %s2341 = smul.addr %s2340, 8
          %s2342 = scalar_lea.vmem [#allocation9], %s2341
          %2343 = dma.done %s2339, 128
        $region56: #{tpu_custom_call.1} parent=51 // pred_fallthru
          _
      $region52: #{tpu_custom_call.1} parent=5 // pred_fallthru
        _
    $region6: #{tpu_custom_call.1} parent=1 // loop_footer
      %s21 = sadd.s32 1, %s17
    $region7: #{tpu_custom_call.1} parent=1 // loop_footer_branch
      %16 = sbr.rel target = $region3
    $region8: #{tpu_custom_call.1} parent=1 // loop_exit
      _
    %2344 = vsyncpa [#allocation3], 1
    %s2345 = scalar_lea.sflag [#allocation3], 1
    %2346 = vsyncpa %s2345, 1
    %2347 = vsyncpa [#allocation8], 1
    %s2348 = scalar_lea.sflag [#allocation8], 1
    %2349 = vsyncpa %s2348, 1
    %2350 = vsyncpa [#allocation4], 1
    %s2351 = scalar_lea.sflag [#allocation4], 1
    %2352 = vsyncpa %s2351, 1
    %2353 = vsyncpa [#allocation5], 1
    %s2354 = scalar_lea.sflag [#allocation5], 1
    %2355 = vsyncpa %s2354, 1

</llo_original>
